<compile_context>
chip_gen: v7x
topology: tpu7x:2x2x1
jax: 0.10.0
libtpu: 0.0.40
codegen_flags: <defaults>
</compile_context>

<pallas_src>
import functools
import math

import jax
import jax.numpy as jnp
from jax import lax
from jax.experimental import pallas as pl
from jax.experimental.pallas import tpu as pltpu

# All matmuls run at HIGHEST precision so kernel and reference agree to f32
# accuracy regardless of the backend's default matmul precision.
_MM_PRECISION = jax.lax.Precision.HIGHEST

# v7x has 64 MiB of VMEM per TensorCore; cap the scoped limit well below that
# to leave room for Mosaic-internal scratch.  Harmless on v5e/v6e (128 MiB).
_VMEM_CAP_BYTES = 48 * 1024 * 1024


def _bmm(a, b, contract_a, contract_b):
    """Batched matmul (batch = leading axis) contracting the given axes."""
    return lax.dot_general(
        a, b,
        dimension_numbers=(((contract_a,), (contract_b,)), ((0,), (0,))),
        preferred_element_type=jnp.float32,
        precision=_MM_PRECISION)


def _attention_fold(s, r, w_ref, b_ref, *, channels, group, n_total):
    """Fold the channel attention into an effective per-batch (C, C) linear map.

    Given the Gram matrix s = x @ x^T (G, C, C) and the row sums r = x @ 1
    (G, C, 1) of the flattened input x (C, N):

        q = Wq x + bq,  k = Wk x + bk
        scores = q @ k^T = Wq s Wk^T + (Wq r) bk^T + bq (Wk r + N bk)^T
        attn   = softmax(scores / sqrt(C))            (softmax over last axis)
        out    = attn @ (Wv x + bv) + x = W_eff @ x + b_eff + x
        W_eff  = attn @ Wv,   b_eff = attn @ bv

    Everything here is O(G*C^3), runs once per batch group and stays in f32.
    """
    C, G = channels, group
    f32 = jnp.float32
    wq = jnp.broadcast_to(w_ref[0].astype(f32), (G, C, C))
    wk = jnp.broadcast_to(w_ref[1].astype(f32), (G, C, C))
    wv = jnp.broadcast_to(w_ref[2].astype(f32), (G, C, C))
    bq = jnp.broadcast_to(b_ref[0].astype(f32), (G, C, 1))
    bk = jnp.broadcast_to(b_ref[1].astype(f32), (G, C, 1))
    bv = jnp.broadcast_to(b_ref[2].astype(f32), (G, C, 1))

    term1 = _bmm(_bmm(wq, s, 2, 1), wk, 2, 2)               # Wq s Wk^T
    wq_r = _bmm(wq, r, 2, 1)                                # (G, C, 1)
    wk_r = _bmm(wk, r, 2, 1) + float(n_total) * bk          # Wk r + N bk
    # Rank-1 outer products expressed as dot_generals (no transposes/reshapes).
    scores = term1 + _bmm(wq_r, bk, 2, 2) + _bmm(bq, wk_r, 2, 2)
    scores = scores * (1.0 / math.sqrt(C))

    m = jnp.max(scores, axis=-1, keepdims=True)
    p = jnp.exp(scores - m)
    attn = p / jnp.sum(p, axis=-1, keepdims=True)           # exact reciprocal

    w_eff = _bmm(attn, wv, 2, 1)                            # attn @ Wv
    b_eff = _bmm(attn, bv, 2, 1)                            # attn @ bv
    return w_eff, b_eff


def _single_pass_kernel(x_ref, w_ref, b_ref, o_ref, *, channels, group,
                        n_total, matmul_dtype):
    """One grid step per batch group; x is read from HBM exactly once."""
    C, G = channels, group
    x = x_ref[...].astype(jnp.float32)                      # (G, C, N)
    xm = x.astype(matmul_dtype)
    s = _bmm(xm, xm, 2, 2)                                  # Gram matrix, f32 acc
    r = jnp.sum(x, axis=-1, keepdims=True)                  # (G, C, 1)
    w_eff, b_eff = _attention_fold(s, r, w_ref, b_ref, channels=C, group=G,
                                   n_total=n_total)
    out = _bmm(w_eff.astype(matmul_dtype), xm, 2, 1) + b_eff + x
    o_ref[...] = out.astype(o_ref.dtype)


def _stats_kernel(x_ref, w_ref, b_ref, weff_ref, beff_ref, s_ref, r_ref, *,
                  channels, group, n_total, matmul_dtype):
    """Tiled pass 1: accumulate s = x x^T and r = x 1 over spatial tiles; at the
    last tile fold the attention into (W_eff, b_eff)."""
    n = pl.program_id(1)

    @pl.when(n == 0)
    def _init():
        s_ref[...] = jnp.zeros_like(s_ref)
        r_ref[...] = jnp.zeros_like(r_ref)

    x = x_ref[...].astype(jnp.float32)                      # (G, C, tn)
    xm = x.astype(matmul_dtype)
    s_ref[...] += _bmm(xm, xm, 2, 2)
    r_ref[...] += jnp.sum(x, axis=-1, keepdims=True)

    @pl.when(n == pl.num_programs(1) - 1)
    def _finalize():
        w_eff, b_eff = _attention_fold(s_ref[...], r_ref[...], w_ref, b_ref,
                                       channels=channels, group=group,
                                       n_total=n_total)
        weff_ref[...] = w_eff
        beff_ref[...] = b_eff


def _apply_kernel(x_ref, weff_ref, beff_ref, o_ref, *, matmul_dtype):
    """Tiled pass 2: out = W_eff @ x + b_eff + x for one lane-dense tile."""
    x = x_ref[...].astype(jnp.float32)
    out = _bmm(weff_ref[...].astype(matmul_dtype), x.astype(matmul_dtype), 2, 1)
    o_ref[...] = (out + beff_ref[...] + x).astype(o_ref.dtype)


def _choose_group(batch, per_elem_bytes, budget_bytes):
    """Largest divisor g of `batch` whose x block fits `budget_bytes`, while
    keeping >= 2 groups on the parallel axis when batch >= 2 (so v7x's two
    TensorCores both get work; harmless on single-TC v5e/v6e)."""
    cap = batch if batch < 2 else max(1, batch // 2)
    for g in range(cap, 0, -1):
        if batch % g == 0 and g * per_elem_bytes <= budget_bytes:
            return g
    return 1


def _choose_tile_n(n_pad, group, channels, itemsize,
                   budget_bytes=2 * 1024 * 1024, max_tile=2048):
    """Largest multiple-of-128 tile dividing n_pad (<= max_tile) whose x block
    fits the per-step budget (n_pad is already a multiple of 128)."""
    best = 128
    tn = 128
    while tn <= min(n_pad, max_tile):
        if n_pad % tn == 0 and group * channels * tn * itemsize <= budget_bytes:
            best = tn
        tn += 128
    return best


def self_attention(x, w, b, *, matmul_dtype=jnp.float32, group=None,
                   tile_n=None, force_tiled=False):
    """Pallas TPU forward pass of the PyTorch SelfAttention module.

    x: (B, C, H, W) float32.  w: (3C, C) 1x1-conv weight (Conv2d weight with the
    trailing 1x1 squeezed).  b: (3C,) bias.  Returns (B, C, H, W).

    matmul_dtype=jnp.bfloat16 opts the streaming (O(C^2 N)) matmuls into bf16 for
    the bf16-native MXU on v6e/v7x at large C; the fold epilogue stays f32.
    """
    B, C, H, W = x.shape
    N = H * W
    x_flat = x.reshape(B, C, N)
    w3 = w.reshape(3, C, C)
    b3 = b.reshape(3, C, 1).astype(jnp.float32)
    itemsize = jnp.dtype(x.dtype).itemsize

    # ---------------- single-pass fast path --------------------------------
    slab_bytes = C * N * itemsize            # one batch element, full spatial
    single_pass = (not force_tiled) and tile_n is None and slab_bytes <= (4 << 20)

    if single_pass:
        G = group if group is not None else _choose_group(B, slab_bytes, 4 << 20)
        assert B % G == 0, "group must divide the batch size"
        x_block = G * slab_bytes
        vmem_limit = int(min(_VMEM_CAP_BYTES,
                             max(16 << 20, 10 * x_block + (2 << 20))))
        kernel = functools.partial(_single_pass_kernel, channels=C, group=G,
                                   n_total=N, matmul_dtype=matmul_dtype)
        out_flat = pl.pallas_call(
            kernel,
            out_shape=jax.ShapeDtypeStruct((B, C, N), x.dtype),
            grid_spec=pltpu.PrefetchScalarGridSpec(
                num_scalar_prefetch=0,
                grid=(B // G,),
                in_specs=[
                    pl.BlockSpec((G, C, N), lambda bg: (bg, 0, 0)),   # x
                    pl.BlockSpec((3, C, C), lambda bg: (0, 0, 0)),    # weight
                    pl.BlockSpec((3, C, 1), lambda bg: (0, 0, 0)),    # bias
                ],
                out_specs=pl.BlockSpec((G, C, N), lambda bg: (bg, 0, 0)),
            ),
            compiler_params=pltpu.CompilerParams(
                dimension_semantics=("parallel",),
                vmem_limit_bytes=vmem_limit),
        )(x_flat, w3, b3)
        return out_flat.reshape(B, C, H, W)

    # ---------------- tiled fallback: stats pass, then apply pass ----------
    # Pad N up to a multiple of 128 so every tile and output store is lane-dense.
    # Zero columns contribute nothing to x x^T or the row sums, and the padded
    # output columns are sliced away below.
    n_pad = ((N + 127) // 128) * 128
    if n_pad != N:
        x_flat = jnp.pad(x_flat, ((0, 0), (0, 0), (0, n_pad - N)))

    G = group if group is not None else _choose_group(B, C * 128 * itemsize, 2 << 20)
    assert B % G == 0, "group must divide the batch size"
    tn = tile_n if tile_n is not None else _choose_tile_n(n_pad, G, C, itemsize)
    assert n_pad % tn == 0 and tn % 128 == 0, \
        "tile_n must be a multiple of 128 dividing the padded spatial size"
    num_nt = n_pad // tn

    x_block = G * C * tn * itemsize
    vmem_limit = int(min(_VMEM_CAP_BYTES,
                         max(16 << 20,
                             10 * x_block + 8 * G * C * C * 4 + (2 << 20))))

    stats_kernel = functools.partial(_stats_kernel, channels=C, group=G,
                                     n_total=N, matmul_dtype=matmul_dtype)
    w_eff, b_eff = pl.pallas_call(
        stats_kernel,
        out_shape=(jax.ShapeDtypeStruct((B, C, C), jnp.float32),
                   jax.ShapeDtypeStruct((B, C, 1), jnp.float32)),
        grid_spec=pltpu.PrefetchScalarGridSpec(
            num_scalar_prefetch=0,
            grid=(B // G, num_nt),
            in_specs=[
                pl.BlockSpec((G, C, tn), lambda bg, n: (bg, 0, n)),   # x
                pl.BlockSpec((3, C, C), lambda bg, n: (0, 0, 0)),     # weight
                pl.BlockSpec((3, C, 1), lambda bg, n: (0, 0, 0)),     # bias
            ],
            out_specs=(pl.BlockSpec((G, C, C), lambda bg, n: (bg, 0, 0)),
                       pl.BlockSpec((G, C, 1), lambda bg, n: (bg, 0, 0))),
            scratch_shapes=[pltpu.VMEM((G, C, C), jnp.float32),
                            pltpu.VMEM((G, C, 1), jnp.float32)],
        ),
        compiler_params=pltpu.CompilerParams(
            dimension_semantics=("parallel", "arbitrary"),
            vmem_limit_bytes=vmem_limit),
    )(x_flat, w3, b3)

    apply_kernel = functools.partial(_apply_kernel, matmul_dtype=matmul_dtype)
    out_flat = pl.pallas_call(
        apply_kernel,
        out_shape=jax.ShapeDtypeStruct((B, C, n_pad), x.dtype),
        grid_spec=pltpu.PrefetchScalarGridSpec(
            num_scalar_prefetch=0,
            grid=(B // G, num_nt),
            in_specs=[
                pl.BlockSpec((G, C, tn), lambda bg, n: (bg, 0, n)),   # x
                pl.BlockSpec((G, C, C), lambda bg, n: (bg, 0, 0)),    # W_eff
                pl.BlockSpec((G, C, 1), lambda bg, n: (bg, 0, 0)),    # b_eff
            ],
            out_specs=pl.BlockSpec((G, C, tn), lambda bg, n: (bg, 0, n)),
        ),
        compiler_params=pltpu.CompilerParams(
            dimension_semantics=("parallel", "parallel"),
            vmem_limit_bytes=vmem_limit),
    )(x_flat, w_eff, b_eff)

    if n_pad != N:
        out_flat = out_flat[:, :, :N]
    return out_flat.reshape(B, C, H, W)


def reference(x, w, b):
    """Plain-JAX reference mirroring the PyTorch forward (f32-exact matmuls)."""
    B, C, H, W = x.shape
    N = H * W
    xf = x.reshape(B, C, N)
    qkv = jnp.einsum("oc,bcn->bon", w, xf, precision=_MM_PRECISION) + b[None, :, None]
    qkv = qkv.reshape(B, 3, C, N)
    q, k, v = qkv[:, 0], qkv[:, 1], qkv[:, 2]
    scores = jnp.einsum("bcn,bdn->bcd", q, k, precision=_MM_PRECISION) / math.sqrt(C)
    attn = jax.nn.softmax(scores, axis=-1)
    out = jnp.einsum("bcd,bdn->bcn", attn, v, precision=_MM_PRECISION)
    return out.reshape(B, C, H, W) + x


def _run_case(key, B, C, H, W, **kwargs):
    kx, kw, kb = jax.random.split(key, 3)
    bound = 1.0 / math.sqrt(C)
    x = jax.random.normal(kx, (B, C, H, W), dtype=jnp.float32)
    w = jax.random.uniform(kw, (3 * C, C), jnp.float32, -bound, bound)
    b = jax.random.uniform(kb, (3 * C,), jnp.float32, -bound, bound)

    out = jax.block_until_ready(self_attention(x, w, b, **kwargs))
    ref = jax.block_until_ready(reference(x, w, b))
    assert out.shape == (B, C, H, W)
    err = float(jnp.max(jnp.abs(out - ref)))
    # With HIGHEST-precision matmuls on both sides the mismatch is ~1e-5; the
    # tolerance leaves headroom for backends whose matmuls fall back to the TPU
    # default single-bf16-pass precision despite the precision request.
    assert jnp.allclose(out, ref, atol=2e-2, rtol=2e-2), f"max err {err}"
    return err


if __name__ == "__main__":
    # Shape implied by the module: batch=2, channels=4, 16x16 spatial
    # (single-pass fast path: one grid step per batch element).
    _run_case(jax.random.PRNGKey(0), B=2, C=4, H=16, W=16)
    # Exercise the tiled fallback: batch groups + spatial-tile accumulation.
    _run_case(jax.random.PRNGKey(1), B=4, C=8, H=16, W=16,
              force_tiled=True, group=2, tile_n=128)
    print("KERNEL_OK")
</pallas_src>

<mosaic_0001>
module attributes {stable_mosaic.version = 11 : i64} {
  func.func @_single_pass_kernel(%arg0: i32, %arg1: memref<1x4x256xf32, #tpu.memory_space<vmem>>, %arg2: memref<3x4x4xf32, #tpu.memory_space<vmem>>, %arg3: memref<3x4x1xf32, #tpu.memory_space<vmem>>, %arg4: memref<1x4x256xf32, #tpu.memory_space<vmem>>) attributes {dimension_semantics = [#tpu.dimension_semantics<parallel>], iteration_bounds = array<i64: 2>, scalar_prefetch = 0 : i64, scratch_operands = 0 : i64, tpu.core_type = #tpu.core_type<tc>, window_params = [{transform_indices = @transform_0, window_bounds = array<i64: 1, 4, 256>}, {pipeline_mode = #tpu.pipeline_mode<synchronous>, transform_indices = @transform_1, window_bounds = array<i64: 3, 4, 4>}, {pipeline_mode = #tpu.pipeline_mode<synchronous>, transform_indices = @transform_2, window_bounds = array<i64: 3, 4, 1>}, {transform_indices = @transform_3, window_bounds = array<i64: 1, 4, 256>}]} {
    %c0 = arith.constant 0 : index
    %c0_0 = arith.constant 0 : index
    %c0_1 = arith.constant 0 : index
    %0 = vector.load %arg1[%c0, %c0_0, %c0_1] : memref<1x4x256xf32, #tpu.memory_space<vmem>>, vector<1x4x256xf32>
    %cst = arith.constant dense<0.000000e+00> : vector<1x4x4xf32>
    %1 = tpu.matmul %0, %0, %cst {dimension_numbers = #tpu.dot_dimension_numbers<[2], [2], [1], [1], [0, 0, 0, 1, 1, 1], [0], [0]>, precision = #tpu.contract_precision<fp32>} : vector<1x4x256xf32>, vector<1x4x256xf32>, vector<1x4x4xf32> -> vector<1x4x4xf32>
    %cst_2 = arith.constant dense<0.000000e+00> : vector<1x4xf32>
    %2 = vector.multi_reduction <add>, %0, %cst_2 [2] : vector<1x4x256xf32> to vector<1x4xf32>
    %3 = vector.shape_cast %2 : vector<1x4xf32> to vector<1x4x1xf32>
    %c0_3 = arith.constant 0 : index
    %c0_4 = arith.constant 0 : index
    %c0_5 = arith.constant 0 : index
    %4 = vector.load %arg2[%c0_3, %c0_4, %c0_5] : memref<3x4x4xf32, #tpu.memory_space<vmem>>, vector<1x4x4xf32>
    %5 = vector.shape_cast %4 : vector<1x4x4xf32> to vector<4x4xf32>
    %6 = vector.shape_cast %5 : vector<4x4xf32> to vector<1x4x4xf32>
    %c1 = arith.constant 1 : index
    %c0_6 = arith.constant 0 : index
    %c0_7 = arith.constant 0 : index
    %7 = vector.load %arg2[%c1, %c0_6, %c0_7] : memref<3x4x4xf32, #tpu.memory_space<vmem>>, vector<1x4x4xf32>
    %8 = vector.shape_cast %7 : vector<1x4x4xf32> to vector<4x4xf32>
    %9 = vector.shape_cast %8 : vector<4x4xf32> to vector<1x4x4xf32>
    %c2 = arith.constant 2 : index
    %c0_8 = arith.constant 0 : index
    %c0_9 = arith.constant 0 : index
    %10 = vector.load %arg2[%c2, %c0_8, %c0_9] : memref<3x4x4xf32, #tpu.memory_space<vmem>>, vector<1x4x4xf32>
    %11 = vector.shape_cast %10 : vector<1x4x4xf32> to vector<4x4xf32>
    %12 = vector.shape_cast %11 : vector<4x4xf32> to vector<1x4x4xf32>
    %c0_10 = arith.constant 0 : index
    %c0_11 = arith.constant 0 : index
    %c0_12 = arith.constant 0 : index
    %13 = vector.load %arg3[%c0_10, %c0_11, %c0_12] : memref<3x4x1xf32, #tpu.memory_space<vmem>>, vector<1x4x1xf32>
    %14 = vector.shape_cast %13 : vector<1x4x1xf32> to vector<4x1xf32>
    %15 = vector.shape_cast %14 : vector<4x1xf32> to vector<1x4x1xf32>
    %c1_13 = arith.constant 1 : index
    %c0_14 = arith.constant 0 : index
    %c0_15 = arith.constant 0 : index
    %16 = vector.load %arg3[%c1_13, %c0_14, %c0_15] : memref<3x4x1xf32, #tpu.memory_space<vmem>>, vector<1x4x1xf32>
    %17 = vector.shape_cast %16 : vector<1x4x1xf32> to vector<4x1xf32>
    %18 = vector.shape_cast %17 : vector<4x1xf32> to vector<1x4x1xf32>
    %c2_16 = arith.constant 2 : index
    %c0_17 = arith.constant 0 : index
    %c0_18 = arith.constant 0 : index
    %19 = vector.load %arg3[%c2_16, %c0_17, %c0_18] : memref<3x4x1xf32, #tpu.memory_space<vmem>>, vector<1x4x1xf32>
    %20 = vector.shape_cast %19 : vector<1x4x1xf32> to vector<4x1xf32>
    %21 = vector.shape_cast %20 : vector<4x1xf32> to vector<1x4x1xf32>
    %cst_19 = arith.constant dense<0.000000e+00> : vector<1x4x4xf32>
    %22 = tpu.matmul %6, %1, %cst_19 {dimension_numbers = #tpu.dot_dimension_numbers<[2], [1], [1], [2], [0, 0, 0, 1, 1, 2], [0], [0]>, precision = #tpu.contract_precision<fp32>} : vector<1x4x4xf32>, vector<1x4x4xf32>, vector<1x4x4xf32> -> vector<1x4x4xf32>
    %cst_20 = arith.constant dense<0.000000e+00> : vector<1x4x4xf32>
    %23 = tpu.matmul %22, %9, %cst_20 {dimension_numbers = #tpu.dot_dimension_numbers<[2], [2], [1], [1], [0, 0, 0, 1, 1, 1], [0], [0]>, precision = #tpu.contract_precision<fp32>} : vector<1x4x4xf32>, vector<1x4x4xf32>, vector<1x4x4xf32> -> vector<1x4x4xf32>
    %cst_21 = arith.constant dense<0.000000e+00> : vector<1x4x1xf32>
    %24 = tpu.matmul %6, %3, %cst_21 {dimension_numbers = #tpu.dot_dimension_numbers<[2], [1], [1], [2], [0, 0, 0, 1, 1, 2], [0], [0]>, precision = #tpu.contract_precision<fp32>} : vector<1x4x4xf32>, vector<1x4x1xf32>, vector<1x4x1xf32> -> vector<1x4x1xf32>
    %cst_22 = arith.constant dense<0.000000e+00> : vector<1x4x1xf32>
    %25 = tpu.matmul %9, %3, %cst_22 {dimension_numbers = #tpu.dot_dimension_numbers<[2], [1], [1], [2], [0, 0, 0, 1, 1, 2], [0], [0]>, precision = #tpu.contract_precision<fp32>} : vector<1x4x4xf32>, vector<1x4x1xf32>, vector<1x4x1xf32> -> vector<1x4x1xf32>
    %cst_23 = arith.constant 2.560000e+02 : f32
    %26 = vector.broadcast %cst_23 : f32 to vector<1x4x1xf32>
    %27 = arith.mulf %26, %18 : vector<1x4x1xf32>
    %28 = arith.addf %25, %27 : vector<1x4x1xf32>
    %cst_24 = arith.constant dense<0.000000e+00> : vector<1x4x4xf32>
    %29 = tpu.matmul %24, %18, %cst_24 {dimension_numbers = #tpu.dot_dimension_numbers<[2], [2], [1], [1], [0, 0, 0, 1, 1, 1], [0], [0]>, precision = #tpu.contract_precision<fp32>} : vector<1x4x1xf32>, vector<1x4x1xf32>, vector<1x4x4xf32> -> vector<1x4x4xf32>
    %30 = arith.addf %23, %29 : vector<1x4x4xf32>
    %cst_25 = arith.constant dense<0.000000e+00> : vector<1x4x4xf32>
    %31 = tpu.matmul %15, %28, %cst_25 {dimension_numbers = #tpu.dot_dimension_numbers<[2], [2], [1], [1], [0, 0, 0, 1, 1, 1], [0], [0]>, precision = #tpu.contract_precision<fp32>} : vector<1x4x1xf32>, vector<1x4x1xf32>, vector<1x4x4xf32> -> vector<1x4x4xf32>
    %32 = arith.addf %30, %31 : vector<1x4x4xf32>
    %cst_26 = arith.constant 5.000000e-01 : f32
    %33 = vector.broadcast %cst_26 : f32 to vector<1x4x4xf32>
    %34 = arith.mulf %32, %33 : vector<1x4x4xf32>
    %cst_27 = arith.constant dense<0xFF800000> : vector<1x4xf32>
    %35 = vector.multi_reduction <maximumf>, %34, %cst_27 [2] : vector<1x4x4xf32> to vector<1x4xf32>
    %36 = vector.shape_cast %35 : vector<1x4xf32> to vector<1x4x1xf32>
    %37 = vector.broadcast %36 : vector<1x4x1xf32> to vector<1x4x4xf32>
    %38 = arith.subf %34, %37 : vector<1x4x4xf32>
    %39 = math.exp %38 : vector<1x4x4xf32>
    %cst_28 = arith.constant dense<0.000000e+00> : vector<1x4xf32>
    %40 = vector.multi_reduction <add>, %39, %cst_28 [2] : vector<1x4x4xf32> to vector<1x4xf32>
    %41 = vector.shape_cast %40 : vector<1x4xf32> to vector<1x4x1xf32>
    %42 = vector.broadcast %41 : vector<1x4x1xf32> to vector<1x4x4xf32>
    %43 = arith.divf %39, %42 : vector<1x4x4xf32>
    %cst_29 = arith.constant dense<0.000000e+00> : vector<1x4x4xf32>
    %44 = tpu.matmul %43, %12, %cst_29 {dimension_numbers = #tpu.dot_dimension_numbers<[2], [1], [1], [2], [0, 0, 0, 1, 1, 2], [0], [0]>, precision = #tpu.contract_precision<fp32>} : vector<1x4x4xf32>, vector<1x4x4xf32>, vector<1x4x4xf32> -> vector<1x4x4xf32>
    %cst_30 = arith.constant dense<0.000000e+00> : vector<1x4x1xf32>
    %45 = tpu.matmul %43, %21, %cst_30 {dimension_numbers = #tpu.dot_dimension_numbers<[2], [1], [1], [2], [0, 0, 0, 1, 1, 2], [0], [0]>, precision = #tpu.contract_precision<fp32>} : vector<1x4x4xf32>, vector<1x4x1xf32>, vector<1x4x1xf32> -> vector<1x4x1xf32>
    %cst_31 = arith.constant dense<0.000000e+00> : vector<1x4x256xf32>
    %46 = tpu.matmul %44, %0, %cst_31 {dimension_numbers = #tpu.dot_dimension_numbers<[2], [1], [1], [2], [0, 0, 0, 1, 1, 2], [0], [0]>, precision = #tpu.contract_precision<fp32>} : vector<1x4x4xf32>, vector<1x4x256xf32>, vector<1x4x256xf32> -> vector<1x4x256xf32>
    %47 = vector.broadcast %45 : vector<1x4x1xf32> to vector<1x4x256xf32>
    %48 = arith.addf %46, %47 : vector<1x4x256xf32>
    %49 = arith.addf %48, %0 : vector<1x4x256xf32>
    %c0_32 = arith.constant 0 : index
    %c0_33 = arith.constant 0 : index
    %c0_34 = arith.constant 0 : index
    %50 = vector.load %arg4[%c0_32, %c0_33, %c0_34] : memref<1x4x256xf32, #tpu.memory_space<vmem>>, vector<1x4x256xf32>
    tpu.vector_store %arg4[%c0_32, %c0_33, %c0_34], %49 {strides = array<i32>} : memref<1x4x256xf32, #tpu.memory_space<vmem>>, vector<1x4x256xf32>,
    return
  }
  func.func @transform_0(%arg0: i32) -> (i32, i32, i32) {
    %c0_i32 = arith.constant 0 : i32
    %c0_i32_0 = arith.constant 0 : i32
    %c0_i32_1 = arith.constant 0 : i32
    return %arg0, %c0_i32, %c0_i32_0 : i32, i32, i32
  }
  func.func @transform_1(%arg0: i32) -> (i32, i32, i32) {
    %c0_i32 = arith.constant 0 : i32
    %c0_i32_0 = arith.constant 0 : i32
    %c0_i32_1 = arith.constant 0 : i32
    %c0_i32_2 = arith.constant 0 : i32
    return %c0_i32, %c0_i32_0, %c0_i32_1 : i32, i32, i32
  }
  func.func @transform_2(%arg0: i32) -> (i32, i32, i32) {
    %c0_i32 = arith.constant 0 : i32
    %c0_i32_0 = arith.constant 0 : i32
    %c0_i32_1 = arith.constant 0 : i32
    %c0_i32_2 = arith.constant 0 : i32
    return %c0_i32, %c0_i32_0, %c0_i32_1 : i32, i32, i32
  }
  func.func @transform_3(%arg0: i32) -> (i32, i32, i32) {
    %c0_i32 = arith.constant 0 : i32
    %c0_i32_0 = arith.constant 0 : i32
    %c0_i32_1 = arith.constant 0 : i32
    return %arg0, %c0_i32, %c0_i32_0 : i32, i32, i32
  }
}

</mosaic_0001>

<llo_original>
// kernel: tpu_custom_call.1
$region0: #{tpu_custom_call.1}
  #allocation0 [shape = 'u32[]', space=smem, size = 0x4, offset = 0x4, fixed_abs, tag = 'smem constant byte address 0x4 - core index']
  #allocation1 [shape = 'u32[144,128]{1,0:T(1,128)}', space=vmem, size = 0x12000, scoped, tag = 'internal scratch']
  %s0 = inlined_call_operand.hbm [shape: f32[2,4,256], index: 0, kind: input, shape index: {}]
  %s1 = inlined_call_operand.vmem [shape: f32[3,4,4], index: 1, kind: input, shape index: {}]
  %s2 = inlined_call_operand.vmem [shape: f32[3,4,1], index: 2, kind: input, shape index: {}]
  %s3 = inlined_call_operand.hbm [shape: f32[2,4,256], index: 3, kind: output, shape index: {}]
  %s4 = sld [smem:[#allocation0]]
  $region49: #{tpu_custom_call.1} parent=0
    _
  %s6 = ssub.s32 1, %s4
  %s7 = scalar_select 0, %s6, %s4
  $region1: #{tpu_custom_call.1} parent=0
    #allocation2 [shape = 'u8[8192]{0}', space=vmem, size = 0x2000, scoped, tag = 'input window, operand 0']
    #allocation3 [shape = 's32[2]{0}', space=sflag, size = 0x8, scoped, tag = 'scoped memory for tpu_custom_call.1']
    #allocation4 [shape = 's32[2]{0}', space=sflag, size = 0x8, scoped, tag = 'scoped memory for tpu_custom_call.1']
    #allocation5 [shape = 'u8[8192]{0}', space=vmem, size = 0x2000, scoped, tag = 'output window, operand 0']
    %8 = vsyncpa [#allocation3], 0
    %s9 = scalar_lea.sflag [#allocation3], 1
    %10 = vsyncpa %s9, 0
    %11 = vsyncpa [#allocation4], 0
    %s12 = scalar_lea.sflag [#allocation4], 1
    %13 = vsyncpa %s12, 0
    loop: start=0, step=1, limit=4
    $region2: #{tpu_custom_call.1} parent=1 // loop_pre_header
      _
    $region3: #{tpu_custom_call.1} parent=1 // loop_header
      %s15 = sphi 0, %s19
      %p16 = scmp.ge.s32.totalorder %s15, 4
      %s25 = sphi 0, %s27
      %s28 = sphi 0, %s25
      %s29 = sphi 0, %s28
      %s45 = sphi 0, %s29
      %s49 = sphi 0, %s49
      %s51 = sphi 0, %s49
      %s52 = sphi 0, %s51
      %s66 = sphi 0, %s52
      %s70 = sphi 0, %s70
      %s72 = sphi 0, %s70
      %s73 = sphi 0, %s72
      %s87 = sphi 0, %s73
      %s93 = sphi 0, %s95
      %s96 = sphi 0, %s93
      %s97 = sphi 0, %s96
      %s113 = sphi 0, %s97
    $region4: #{tpu_custom_call.1} parent=1 // loop_header_branch
      %18 = sbr.rel (%p16) target = $region8
    $region5: #{tpu_custom_call.1} parent=1 // loop_body
      %s20 = ssub.s32 %s15, 1
      %s21 = ssub.s32 %s15, 2
      %s22 = sadd.s32 %s15, 1
      %s23 = ssub.s32 %s15, %s22
      %p24 = scmp.eq.s32.totalorder %s23, 0
      %s26 = sadd.s32 %s25, 1
      %s27 = scalar_select %p24, %s25, %s26
      %p30 = pneg %p24
      %p31 = scmp.eq.s32.totalorder %s15, 1
      %p32 = por %p30, %p31
      %p33 = scmp.ne.s32.totalorder %s25, %s28
      %p34 = scmp.eq.s32.totalorder %s15, 0
      %p35 = por %p33, %p34
      %p36 = scmp.ne.s32.totalorder %s25, %s28
      %p37 = scmp.eq.s32.totalorder %s20, 1
      %p38 = por %p36, %p37
      %p39 = scmp.ne.s32.totalorder %s28, %s29
      %p40 = scmp.eq.s32.totalorder %s20, 0
      %p41 = por %p39, %p40
      %p42 = scmp.ne.s32.totalorder %s28, %s29
      %p43 = scmp.eq.s32.totalorder %s21, 1
      %p44 = por %p42, %p43
      %p46 = scmp.ne.s32.totalorder %s29, %s45
      %p47 = scmp.eq.s32.totalorder %s21, 0
      %p48 = por %p46, %p47
      %s50 = sadd.s32 %s49, 1
      %p53 = scmp.eq.s32.totalorder %s15, 1
      %p54 = scmp.ne.s32.totalorder %s49, %s51
      %p55 = scmp.eq.s32.totalorder %s15, 0
      %p56 = por %p54, %p55
      %p57 = scmp.ne.s32.totalorder %s49, %s51
      %p58 = scmp.eq.s32.totalorder %s20, 1
      %p59 = por %p57, %p58
      %p60 = scmp.ne.s32.totalorder %s51, %s52
      %p61 = scmp.eq.s32.totalorder %s20, 0
      %p62 = por %p60, %p61
      %p63 = scmp.ne.s32.totalorder %s51, %s52
      %p64 = scmp.eq.s32.totalorder %s21, 1
      %p65 = por %p63, %p64
      %p67 = scmp.ne.s32.totalorder %s52, %s66
      %p68 = scmp.eq.s32.totalorder %s21, 0
      %p69 = por %p67, %p68
      %s71 = sadd.s32 %s70, 1
      %p74 = scmp.eq.s32.totalorder %s15, 1
      %p75 = scmp.ne.s32.totalorder %s70, %s72
      %p76 = scmp.eq.s32.totalorder %s15, 0
      %p77 = por %p75, %p76
      %p78 = scmp.ne.s32.totalorder %s70, %s72
      %p79 = scmp.eq.s32.totalorder %s20, 1
      %p80 = por %p78, %p79
      %p81 = scmp.ne.s32.totalorder %s72, %s73
      %p82 = scmp.eq.s32.totalorder %s20, 0
      %p83 = por %p81, %p82
      %p84 = scmp.ne.s32.totalorder %s72, %s73
      %p85 = scmp.eq.s32.totalorder %s21, 1
      %p86 = por %p84, %p85
      %p88 = scmp.ne.s32.totalorder %s73, %s87
      %p89 = scmp.eq.s32.totalorder %s21, 0
      %p90 = por %p88, %p89
      %s91 = ssub.s32 %s15, %s22
      %p92 = scmp.eq.s32.totalorder %s91, 0
      %s94 = sadd.s32 %s93, 1
      %s95 = scalar_select %p92, %s93, %s94
      %p98 = pneg %p92
      %p99 = scmp.eq.s32.totalorder %s15, 1
      %p100 = por %p98, %p99
      %p101 = scmp.ne.s32.totalorder %s93, %s96
      %p102 = scmp.eq.s32.totalorder %s15, 0
      %p103 = por %p101, %p102
      %p104 = scmp.ne.s32.totalorder %s93, %s96
      %p105 = scmp.eq.s32.totalorder %s20, 1
      %p106 = por %p104, %p105
      %p107 = scmp.ne.s32.totalorder %s96, %s97
      %p108 = scmp.eq.s32.totalorder %s20, 0
      %p109 = por %p107, %p108
      %p110 = scmp.ne.s32.totalorder %s96, %s97
      %p111 = scmp.eq.s32.totalorder %s21, 1
      %p112 = por %p110, %p111
      %p114 = scmp.ne.s32.totalorder %s97, %s113
      %p115 = scmp.eq.s32.totalorder %s21, 0
      %p116 = por %p114, %p115
      %p117 = scmp.le.s32.totalorder 1, %s15
      %p118 = scmp.lt.s32.totalorder %s15, 3
      %p119 = pnand %p117, %p118
      %p120 = pneg %p119
      // Predicated region
      $region9: #{tpu_custom_call.1} parent=5 // pred_check
        _
      $region10: #{tpu_custom_call.1} parent=5 // pred_check_branch
        %122 = sbr.rel (%p119) target = $region12
      $region11: #{tpu_custom_call.1} parent=5 // pred_region
        %s123 = ssub.s32 %s15, 1
        // Predicated region
        $region13: #{tpu_custom_call.1} parent=11 // pred_check
          %p124 = pneg %p62
        $region14: #{tpu_custom_call.1} parent=11 // pred_check_branch
          %126 = sbr.rel (%p124) target = $region16
        $region15: #{tpu_custom_call.1} parent=11 // pred_region
          _
        $region16: #{tpu_custom_call.1} parent=11 // pred_fallthru
          _
        // Predicated region
        $region17: #{tpu_custom_call.1} parent=11 // pred_check
          %p127 = pneg %p83
        $region18: #{tpu_custom_call.1} parent=11 // pred_check_branch
          %129 = sbr.rel (%p127) target = $region20
        $region19: #{tpu_custom_call.1} parent=11 // pred_region
          _
        $region20: #{tpu_custom_call.1} parent=11 // pred_fallthru
          _
      $region12: #{tpu_custom_call.1} parent=5 // pred_fallthru
        _
      %p130 = scmp.lt.s32.totalorder %s15, 2
      // Predicated region
      $region21: #{tpu_custom_call.1} parent=5 // pred_check
        %p131 = pneg %p130
      $region22: #{tpu_custom_call.1} parent=5 // pred_check_branch
        %133 = sbr.rel (%p131) target = $region24
      $region23: #{tpu_custom_call.1} parent=5 // pred_region
        // Predicated region
        $region25: #{tpu_custom_call.1} parent=23 // pred_check
          %p134 = pneg %p35
        $region26: #{tpu_custom_call.1} parent=23 // pred_check_branch
          %136 = sbr.rel (%p134) target = $region28
        $region27: #{tpu_custom_call.1} parent=23 // pred_region
          %s137 = sand.u32 %s25, 1
          %s138 = scalar_lea.sflag [#allocation3], %s137
          %s139 = sand.u32 %s25, 1
          %s140 = smul.addr %s139, 8
          %s141 = scalar_lea.vmem [#allocation2], %s140
          %s143 = ssub.s32 128, 128
          %144 = vsyncadd %s138, %s143
          %s145 = smul.addr %s15, 2
          %s146 = smul.addr %s145, 64
          %s147 = scalar_lea.hbm %s0, %s146
          %s149 = sshll.u32 %s141, 4
          %s150 = int_to_ptr.vmem [resolvable:$true] %s149
          %152 = dma.hbm_to_vmem [thread:$0]  %s147, 128, %s150, %s138
        $region28: #{tpu_custom_call.1} parent=23 // pred_fallthru
          _
      $region24: #{tpu_custom_call.1} parent=5 // pred_fallthru
        _
      %p153 = scmp.le.s32.totalorder 1, %s15
      %p154 = scmp.lt.s32.totalorder %s15, 3
      %p155 = pnand %p153, %p154
      %p156 = pneg %p155
      // Predicated region
      $region29: #{tpu_custom_call.1} parent=5 // pred_check
        _
      $region30: #{tpu_custom_call.1} parent=5 // pred_check_branch
        %158 = sbr.rel (%p155) target = $region32
      $region31: #{tpu_custom_call.1} parent=5 // pred_region
        %s159 = ssub.s32 %s15, 1
        %s160 = sand.u32 %s28, 1
        %s161 = scalar_lea.sflag [#allocation3], %s160
        %s162 = sand.u32 %s28, 1
        %s163 = smul.addr %s162, 8
        %s164 = scalar_lea.vmem [#allocation2], %s163
        // Predicated region
        $region33: #{tpu_custom_call.1} parent=31 // pred_check
          %p165 = pneg %p41
        $region34: #{tpu_custom_call.1} parent=31 // pred_check_branch
          %167 = sbr.rel (%p165) target = $region36
        $region35: #{tpu_custom_call.1} parent=31 // pred_region
          %168 = dma.done %s161, 128
        $region36: #{tpu_custom_call.1} parent=31 // pred_fallthru
          _
        %s169 = sand.u32 %s28, 1
        %s170 = scalar_lea.sflag [#allocation3], %s169
        %s171 = sand.u32 %s28, 1
        %s172 = smul.addr %s171, 8
        %s173 = scalar_lea.vmem [#allocation2], %s172
        %p174 = pneg %p41
        %p175 = pneg %p38
        %p176 = pneg %p62
        %p177 = pneg %p59
        %p178 = pneg %p83
        %p179 = pneg %p80
        %p180 = pneg %p109
        %p181 = pneg %p106
        %s182 = sand.u32 %s96, 1
        %s183 = scalar_lea.sflag [#allocation4], %s182
        %s184 = sand.u32 %s96, 1
        %s185 = smul.addr %s184, 8
        %s186 = scalar_lea.vmem [#allocation5], %s185
        %v187 = vld [vmem:[%s164] sm:$0xff]
        %v189 = vcombine.high %v187, %v187
        %v191 = vand.u32 %v189, 4294901760
        %192 = vmatprep.subr.mxu0 %v191
        %v193 = vand.u32 %v187, 4294901760
        %194 = vmatpush1.xpose.msra.mxu0 %v193
        %195 = vmatprep.subr.mxu0 0.0
        %196 = vmatpush1.xpose.msra.mxu0 0.0
        %197 = vmatprep.subr.mxu0 0.0
        %198 = vmatpush1.xpose.msra.mxu0 0.0
        %199 = vmatprep.subr.mxu0 0.0
        %200 = vmatpush1.xpose.msra.mxu0 0.0
        %201 = vmatprep.subr.mxu0 0.0
        %202 = vmatpush1.xpose.msra.mxu0 0.0
        %203 = vmatprep.subr.mxu0 0.0
        %204 = vmatpush1.xpose.msra.mxu0 0.0
        %205 = vmatprep.subr.mxu0 0.0
        %206 = vmatpush1.xpose.msra.mxu0 0.0
        %207 = vmatprep.subr.mxu0 0.0
        %208 = vmatpush1.xpose.msra.mxu0 0.0
        %209 = vmatprep.subr.mxu0 0.0
        %210 = vmatpush1.xpose.msra.mxu0 0.0
        %211 = vmatprep.subr.mxu0 0.0
        %212 = vmatpush1.xpose.msra.mxu0 0.0
        %213 = vmatprep.subr.mxu0 0.0
        %214 = vmatpush1.xpose.msra.mxu0 0.0
        %215 = vmatprep.subr.mxu0 0.0
        %216 = vmatpush1.xpose.msra.mxu0 0.0
        %217 = vmatprep.subr.mxu0 0.0
        %218 = vmatpush1.xpose.msra.mxu0 0.0
        %219 = vmatprep.subr.mxu0 0.0
        %220 = vmatpush1.xpose.msra.mxu0 0.0
        %221 = vmatprep.subr.mxu0 0.0
        %222 = vmatpush1.xpose.msra.mxu0 0.0
        %223 = vmatprep.subr.mxu0 0.0
        %224 = vmatpush1.xpose.msra.mxu0 0.0
        %225 = vmatprep.subr.mxu0 0.0
        %226 = vmatpush1.xpose.msra.mxu0 0.0
        %227 = vmatprep.subr.mxu0 0.0
        %228 = vmatpush1.xpose.msra.mxu0 0.0
        %229 = vmatprep.subr.mxu0 0.0
        %230 = vmatpush1.xpose.msra.mxu0 0.0
        %231 = vmatprep.subr.mxu0 0.0
        %232 = vmatpush1.xpose.msra.mxu0 0.0
        %233 = vmatprep.subr.mxu0 0.0
        %234 = vmatpush1.xpose.msra.mxu0 0.0
        %235 = vmatprep.subr.mxu0 0.0
        %236 = vmatpush1.xpose.msra.mxu0 0.0
        %237 = vmatprep.subr.mxu0 0.0
        %238 = vmatpush1.xpose.msra.mxu0 0.0
        %239 = vmatprep.subr.mxu0 0.0
        %240 = vmatpush1.xpose.msra.mxu0 0.0
        %241 = vmatprep.subr.mxu0 0.0
        %242 = vmatpush1.xpose.msra.mxu0 0.0
        %243 = vmatprep.subr.mxu0 0.0
        %244 = vmatpush1.xpose.msra.mxu0 0.0
        %245 = vmatprep.subr.mxu0 0.0
        %246 = vmatpush1.xpose.msra.mxu0 0.0
        %247 = vmatprep.subr.mxu0 0.0
        %248 = vmatpush1.xpose.msra.mxu0 0.0
        %249 = vmatprep.subr.mxu0 0.0
        %250 = vmatpush1.xpose.msra.mxu0 0.0
        %251 = vmatprep.subr.mxu0 0.0
        %252 = vmatpush1.xpose.msra.mxu0 0.0
        %253 = vmatprep.subr.mxu0 0.0
        %254 = vmatpush1.xpose.msra.mxu0 0.0
        %255 = vmatprep.subr.mxu0 0.0
        %256 = vmatpush1.xpose.msra.mxu0 0.0
        %v257 = vand.u32 %v189, 4294901760
        %v258 = vsub.f32 %v189, %v257
        %v259 = vand.u32 %v258, 4294901760
        %v260 = vsub.f32 %v258, %v259
        %v261 = vand.u32 %v260, 4294901760
        %262 = vmatprep.mubr.f32.mxu0 %v261
        %v263 = vand.u32 %v187, 4294901760
        %v264 = vsub.f32 %v187, %v263
        %v265 = vand.u32 %v264, 4294901760
        %v266 = vsub.f32 %v264, %v265
        %v267 = vand.u32 %v266, 4294901760
        %268 = vmatmul.mubr.f32.gmra.mrb[0].mxu0 %v267
        %v269 = vpop.f32.mrb[0].mxu0
        %v270 = vadd.f32 0.0, %v269
        %v271 = vpop.f32.mrb[0].mxu0
        %272 = vdwg.mxu0
        %v273 = vand.u32 %v189, 4294901760
        %v274 = vsub.f32 %v189, %v273
        %v275 = vand.u32 %v274, 4294901760
        %v276 = vsub.f32 %v274, %v275
        %v277 = vand.u32 %v276, 4294901760
        %278 = vmatprep.subr.mxu0 %v277
        %v279 = vand.u32 %v187, 4294901760
        %v280 = vsub.f32 %v187, %v279
        %v281 = vand.u32 %v280, 4294901760
        %v282 = vsub.f32 %v280, %v281
        %v283 = vand.u32 %v282, 4294901760
        %284 = vmatpush1.xpose.msra.mxu0 %v283
        %285 = vmatprep.subr.mxu0 0.0
        %286 = vmatpush1.xpose.msra.mxu0 0.0
        %287 = vmatprep.subr.mxu0 0.0
        %288 = vmatpush1.xpose.msra.mxu0 0.0
        %289 = vmatprep.subr.mxu0 0.0
        %290 = vmatpush1.xpose.msra.mxu0 0.0
        %291 = vmatprep.subr.mxu0 0.0
        %292 = vmatpush1.xpose.msra.mxu0 0.0
        %293 = vmatprep.subr.mxu0 0.0
        %294 = vmatpush1.xpose.msra.mxu0 0.0
        %295 = vmatprep.subr.mxu0 0.0
        %296 = vmatpush1.xpose.msra.mxu0 0.0
        %297 = vmatprep.subr.mxu0 0.0
        %298 = vmatpush1.xpose.msra.mxu0 0.0
        %299 = vmatprep.subr.mxu0 0.0
        %300 = vmatpush1.xpose.msra.mxu0 0.0
        %301 = vmatprep.subr.mxu0 0.0
        %302 = vmatpush1.xpose.msra.mxu0 0.0
        %303 = vmatprep.subr.mxu0 0.0
        %304 = vmatpush1.xpose.msra.mxu0 0.0
        %305 = vmatprep.subr.mxu0 0.0
        %306 = vmatpush1.xpose.msra.mxu0 0.0
        %307 = vmatprep.subr.mxu0 0.0
        %308 = vmatpush1.xpose.msra.mxu0 0.0
        %309 = vmatprep.subr.mxu0 0.0
        %310 = vmatpush1.xpose.msra.mxu0 0.0
        %311 = vmatprep.subr.mxu0 0.0
        %312 = vmatpush1.xpose.msra.mxu0 0.0
        %313 = vmatprep.subr.mxu0 0.0
        %314 = vmatpush1.xpose.msra.mxu0 0.0
        %315 = vmatprep.subr.mxu0 0.0
        %316 = vmatpush1.xpose.msra.mxu0 0.0
        %317 = vmatprep.subr.mxu0 0.0
        %318 = vmatpush1.xpose.msra.mxu0 0.0
        %319 = vmatprep.subr.mxu0 0.0
        %320 = vmatpush1.xpose.msra.mxu0 0.0
        %321 = vmatprep.subr.mxu0 0.0
        %322 = vmatpush1.xpose.msra.mxu0 0.0
        %323 = vmatprep.subr.mxu0 0.0
        %324 = vmatpush1.xpose.msra.mxu0 0.0
        %325 = vmatprep.subr.mxu0 0.0
        %326 = vmatpush1.xpose.msra.mxu0 0.0
        %327 = vmatprep.subr.mxu0 0.0
        %328 = vmatpush1.xpose.msra.mxu0 0.0
        %329 = vmatprep.subr.mxu0 0.0
        %330 = vmatpush1.xpose.msra.mxu0 0.0
        %331 = vmatprep.subr.mxu0 0.0
        %332 = vmatpush1.xpose.msra.mxu0 0.0
        %333 = vmatprep.subr.mxu0 0.0
        %334 = vmatpush1.xpose.msra.mxu0 0.0
        %335 = vmatprep.subr.mxu0 0.0
        %336 = vmatpush1.xpose.msra.mxu0 0.0
        %337 = vmatprep.subr.mxu0 0.0
        %338 = vmatpush1.xpose.msra.mxu0 0.0
        %339 = vmatprep.subr.mxu0 0.0
        %340 = vmatpush1.xpose.msra.mxu0 0.0
        %341 = vmatprep.subr.mxu0 0.0
        %342 = vmatpush1.xpose.msra.mxu0 0.0
        %343 = vmatprep.subr.mxu0 0.0
        %344 = vmatpush1.xpose.msra.mxu0 0.0
        %345 = vmatprep.subr.mxu0 0.0
        %346 = vmatpush1.xpose.msra.mxu0 0.0
        %v347 = vand.u32 %v189, 4294901760
        %348 = vmatprep.mubr.f32.mxu0 %v347
        %v349 = vand.u32 %v187, 4294901760
        %350 = vmatmul.mubr.f32.gmra.mrb[0].mxu0 %v349
        %v351 = vpop.f32.mrb[0].mxu0
        %v352 = vadd.f32 %v270, %v351
        %v353 = vpop.f32.mrb[0].mxu0
        %354 = vdwg.mxu0
        %v355 = vand.u32 %v189, 4294901760
        %v356 = vsub.f32 %v189, %v355
        %357 = vmatprep.subr.mxu0 %v356
        %v358 = vand.u32 %v187, 4294901760
        %v359 = vsub.f32 %v187, %v358
        %360 = vmatpush1.xpose.msra.mxu0 %v359
        %361 = vmatprep.subr.mxu0 0.0
        %362 = vmatpush1.xpose.msra.mxu0 0.0
        %363 = vmatprep.subr.mxu0 0.0
        %364 = vmatpush1.xpose.msra.mxu0 0.0
        %365 = vmatprep.subr.mxu0 0.0
        %366 = vmatpush1.xpose.msra.mxu0 0.0
        %367 = vmatprep.subr.mxu0 0.0
        %368 = vmatpush1.xpose.msra.mxu0 0.0
        %369 = vmatprep.subr.mxu0 0.0
        %370 = vmatpush1.xpose.msra.mxu0 0.0
        %371 = vmatprep.subr.mxu0 0.0
        %372 = vmatpush1.xpose.msra.mxu0 0.0
        %373 = vmatprep.subr.mxu0 0.0
        %374 = vmatpush1.xpose.msra.mxu0 0.0
        %375 = vmatprep.subr.mxu0 0.0
        %376 = vmatpush1.xpose.msra.mxu0 0.0
        %377 = vmatprep.subr.mxu0 0.0
        %378 = vmatpush1.xpose.msra.mxu0 0.0
        %379 = vmatprep.subr.mxu0 0.0
        %380 = vmatpush1.xpose.msra.mxu0 0.0
        %381 = vmatprep.subr.mxu0 0.0
        %382 = vmatpush1.xpose.msra.mxu0 0.0
        %383 = vmatprep.subr.mxu0 0.0
        %384 = vmatpush1.xpose.msra.mxu0 0.0
        %385 = vmatprep.subr.mxu0 0.0
        %386 = vmatpush1.xpose.msra.mxu0 0.0
        %387 = vmatprep.subr.mxu0 0.0
        %388 = vmatpush1.xpose.msra.mxu0 0.0
        %389 = vmatprep.subr.mxu0 0.0
        %390 = vmatpush1.xpose.msra.mxu0 0.0
        %391 = vmatprep.subr.mxu0 0.0
        %392 = vmatpush1.xpose.msra.mxu0 0.0
        %393 = vmatprep.subr.mxu0 0.0
        %394 = vmatpush1.xpose.msra.mxu0 0.0
        %395 = vmatprep.subr.mxu0 0.0
        %396 = vmatpush1.xpose.msra.mxu0 0.0
        %397 = vmatprep.subr.mxu0 0.0
        %398 = vmatpush1.xpose.msra.mxu0 0.0
        %399 = vmatprep.subr.mxu0 0.0
        %400 = vmatpush1.xpose.msra.mxu0 0.0
        %401 = vmatprep.subr.mxu0 0.0
        %402 = vmatpush1.xpose.msra.mxu0 0.0
        %403 = vmatprep.subr.mxu0 0.0
        %404 = vmatpush1.xpose.msra.mxu0 0.0
        %405 = vmatprep.subr.mxu0 0.0
        %406 = vmatpush1.xpose.msra.mxu0 0.0
        %407 = vmatprep.subr.mxu0 0.0
        %408 = vmatpush1.xpose.msra.mxu0 0.0
        %409 = vmatprep.subr.mxu0 0.0
        %410 = vmatpush1.xpose.msra.mxu0 0.0
        %411 = vmatprep.subr.mxu0 0.0
        %412 = vmatpush1.xpose.msra.mxu0 0.0
        %413 = vmatprep.subr.mxu0 0.0
        %414 = vmatpush1.xpose.msra.mxu0 0.0
        %415 = vmatprep.subr.mxu0 0.0
        %416 = vmatpush1.xpose.msra.mxu0 0.0
        %417 = vmatprep.subr.mxu0 0.0
        %418 = vmatpush1.xpose.msra.mxu0 0.0
        %419 = vmatprep.subr.mxu0 0.0
        %420 = vmatpush1.xpose.msra.mxu0 0.0
        %421 = vmatprep.subr.mxu0 0.0
        %422 = vmatpush1.xpose.msra.mxu0 0.0
        %v423 = vand.u32 %v189, 4294901760
        %v424 = vsub.f32 %v189, %v423
        %425 = vmatprep.mubr.f32.mxu0 %v424
        %v426 = vand.u32 %v187, 4294901760
        %v427 = vsub.f32 %v187, %v426
        %428 = vmatmul.mubr.f32.gmra.mrb[0].mxu0 %v427
        %v429 = vpop.f32.mrb[0].mxu0
        %v430 = vadd.f32 %v352, %v429
        %v431 = vpop.f32.mrb[0].mxu0
        %432 = vdwg.mxu0
        %v433 = vand.u32 %v189, 4294901760
        %434 = vmatprep.subr.mxu0 %v433
        %v435 = vand.u32 %v187, 4294901760
        %436 = vmatpush1.xpose.msra.mxu0 %v435
        %437 = vmatprep.subr.mxu0 0.0
        %438 = vmatpush1.xpose.msra.mxu0 0.0
        %439 = vmatprep.subr.mxu0 0.0
        %440 = vmatpush1.xpose.msra.mxu0 0.0
        %441 = vmatprep.subr.mxu0 0.0
        %442 = vmatpush1.xpose.msra.mxu0 0.0
        %443 = vmatprep.subr.mxu0 0.0
        %444 = vmatpush1.xpose.msra.mxu0 0.0
        %445 = vmatprep.subr.mxu0 0.0
        %446 = vmatpush1.xpose.msra.mxu0 0.0
        %447 = vmatprep.subr.mxu0 0.0
        %448 = vmatpush1.xpose.msra.mxu0 0.0
        %449 = vmatprep.subr.mxu0 0.0
        %450 = vmatpush1.xpose.msra.mxu0 0.0
        %451 = vmatprep.subr.mxu0 0.0
        %452 = vmatpush1.xpose.msra.mxu0 0.0
        %453 = vmatprep.subr.mxu0 0.0
        %454 = vmatpush1.xpose.msra.mxu0 0.0
        %455 = vmatprep.subr.mxu0 0.0
        %456 = vmatpush1.xpose.msra.mxu0 0.0
        %457 = vmatprep.subr.mxu0 0.0
        %458 = vmatpush1.xpose.msra.mxu0 0.0
        %459 = vmatprep.subr.mxu0 0.0
        %460 = vmatpush1.xpose.msra.mxu0 0.0
        %461 = vmatprep.subr.mxu0 0.0
        %462 = vmatpush1.xpose.msra.mxu0 0.0
        %463 = vmatprep.subr.mxu0 0.0
        %464 = vmatpush1.xpose.msra.mxu0 0.0
        %465 = vmatprep.subr.mxu0 0.0
        %466 = vmatpush1.xpose.msra.mxu0 0.0
        %467 = vmatprep.subr.mxu0 0.0
        %468 = vmatpush1.xpose.msra.mxu0 0.0
        %469 = vmatprep.subr.mxu0 0.0
        %470 = vmatpush1.xpose.msra.mxu0 0.0
        %471 = vmatprep.subr.mxu0 0.0
        %472 = vmatpush1.xpose.msra.mxu0 0.0
        %473 = vmatprep.subr.mxu0 0.0
        %474 = vmatpush1.xpose.msra.mxu0 0.0
        %475 = vmatprep.subr.mxu0 0.0
        %476 = vmatpush1.xpose.msra.mxu0 0.0
        %477 = vmatprep.subr.mxu0 0.0
        %478 = vmatpush1.xpose.msra.mxu0 0.0
        %479 = vmatprep.subr.mxu0 0.0
        %480 = vmatpush1.xpose.msra.mxu0 0.0
        %481 = vmatprep.subr.mxu0 0.0
        %482 = vmatpush1.xpose.msra.mxu0 0.0
        %483 = vmatprep.subr.mxu0 0.0
        %484 = vmatpush1.xpose.msra.mxu0 0.0
        %485 = vmatprep.subr.mxu0 0.0
        %486 = vmatpush1.xpose.msra.mxu0 0.0
        %487 = vmatprep.subr.mxu0 0.0
        %488 = vmatpush1.xpose.msra.mxu0 0.0
        %489 = vmatprep.subr.mxu0 0.0
        %490 = vmatpush1.xpose.msra.mxu0 0.0
        %491 = vmatprep.subr.mxu0 0.0
        %492 = vmatpush1.xpose.msra.mxu0 0.0
        %493 = vmatprep.subr.mxu0 0.0
        %494 = vmatpush1.xpose.msra.mxu0 0.0
        %495 = vmatprep.subr.mxu0 0.0
        %496 = vmatpush1.xpose.msra.mxu0 0.0
        %497 = vmatprep.subr.mxu0 0.0
        %498 = vmatpush1.xpose.msra.mxu0 0.0
        %v499 = vand.u32 %v189, 4294901760
        %v500 = vsub.f32 %v189, %v499
        %v501 = vand.u32 %v500, 4294901760
        %502 = vmatprep.mubr.f32.mxu0 %v501
        %v503 = vand.u32 %v187, 4294901760
        %v504 = vsub.f32 %v187, %v503
        %v505 = vand.u32 %v504, 4294901760
        %506 = vmatmul.mubr.f32.gmra.mrb[0].mxu0 %v505
        %v507 = vpop.f32.mrb[0].mxu0
        %v508 = vadd.f32 %v430, %v507
        %v509 = vpop.f32.mrb[0].mxu0
        %510 = vdwg.mxu0
        %v511 = vand.u32 %v189, 4294901760
        %v512 = vsub.f32 %v189, %v511
        %v513 = vand.u32 %v512, 4294901760
        %514 = vmatprep.subr.mxu0 %v513
        %v515 = vand.u32 %v187, 4294901760
        %v516 = vsub.f32 %v187, %v515
        %v517 = vand.u32 %v516, 4294901760
        %518 = vmatpush1.xpose.msra.mxu0 %v517
        %519 = vmatprep.subr.mxu0 0.0
        %520 = vmatpush1.xpose.msra.mxu0 0.0
        %521 = vmatprep.subr.mxu0 0.0
        %522 = vmatpush1.xpose.msra.mxu0 0.0
        %523 = vmatprep.subr.mxu0 0.0
        %524 = vmatpush1.xpose.msra.mxu0 0.0
        %525 = vmatprep.subr.mxu0 0.0
        %526 = vmatpush1.xpose.msra.mxu0 0.0
        %527 = vmatprep.subr.mxu0 0.0
        %528 = vmatpush1.xpose.msra.mxu0 0.0
        %529 = vmatprep.subr.mxu0 0.0
        %530 = vmatpush1.xpose.msra.mxu0 0.0
        %531 = vmatprep.subr.mxu0 0.0
        %532 = vmatpush1.xpose.msra.mxu0 0.0
        %533 = vmatprep.subr.mxu0 0.0
        %534 = vmatpush1.xpose.msra.mxu0 0.0
        %535 = vmatprep.subr.mxu0 0.0
        %536 = vmatpush1.xpose.msra.mxu0 0.0
        %537 = vmatprep.subr.mxu0 0.0
        %538 = vmatpush1.xpose.msra.mxu0 0.0
        %539 = vmatprep.subr.mxu0 0.0
        %540 = vmatpush1.xpose.msra.mxu0 0.0
        %541 = vmatprep.subr.mxu0 0.0
        %542 = vmatpush1.xpose.msra.mxu0 0.0
        %543 = vmatprep.subr.mxu0 0.0
        %544 = vmatpush1.xpose.msra.mxu0 0.0
        %545 = vmatprep.subr.mxu0 0.0
        %546 = vmatpush1.xpose.msra.mxu0 0.0
        %547 = vmatprep.subr.mxu0 0.0
        %548 = vmatpush1.xpose.msra.mxu0 0.0
        %549 = vmatprep.subr.mxu0 0.0
        %550 = vmatpush1.xpose.msra.mxu0 0.0
        %551 = vmatprep.subr.mxu0 0.0
        %552 = vmatpush1.xpose.msra.mxu0 0.0
        %553 = vmatprep.subr.mxu0 0.0
        %554 = vmatpush1.xpose.msra.mxu0 0.0
        %555 = vmatprep.subr.mxu0 0.0
        %556 = vmatpush1.xpose.msra.mxu0 0.0
        %557 = vmatprep.subr.mxu0 0.0
        %558 = vmatpush1.xpose.msra.mxu0 0.0
        %559 = vmatprep.subr.mxu0 0.0
        %560 = vmatpush1.xpose.msra.mxu0 0.0
        %561 = vmatprep.subr.mxu0 0.0
        %562 = vmatpush1.xpose.msra.mxu0 0.0
        %563 = vmatprep.subr.mxu0 0.0
        %564 = vmatpush1.xpose.msra.mxu0 0.0
        %565 = vmatprep.subr.mxu0 0.0
        %566 = vmatpush1.xpose.msra.mxu0 0.0
        %567 = vmatprep.subr.mxu0 0.0
        %568 = vmatpush1.xpose.msra.mxu0 0.0
        %569 = vmatprep.subr.mxu0 0.0
        %570 = vmatpush1.xpose.msra.mxu0 0.0
        %571 = vmatprep.subr.mxu0 0.0
        %572 = vmatpush1.xpose.msra.mxu0 0.0
        %573 = vmatprep.subr.mxu0 0.0
        %574 = vmatpush1.xpose.msra.mxu0 0.0
        %575 = vmatprep.subr.mxu0 0.0
        %576 = vmatpush1.xpose.msra.mxu0 0.0
        %577 = vmatprep.subr.mxu0 0.0
        %578 = vmatpush1.xpose.msra.mxu0 0.0
        %579 = vmatprep.subr.mxu0 0.0
        %580 = vmatpush1.xpose.msra.mxu0 0.0
        %v581 = vand.u32 %v189, 4294901760
        %582 = vmatprep.mubr.f32.mxu0 %v581
        %v583 = vand.u32 %v187, 4294901760
        %584 = vmatmul.mubr.f32.gmra.mrb[0].mxu0 %v583
        %v585 = vpop.f32.mrb[0].mxu0
        %v586 = vadd.f32 %v508, %v585
        %v587 = vpop.f32.mrb[0].mxu0
        %588 = vdwg.mxu0
        %v589 = vand.u32 %v189, 4294901760
        %590 = vmatprep.subr.mxu0 %v589
        %v591 = vand.u32 %v187, 4294901760
        %592 = vmatpush1.xpose.msra.mxu0 %v591
        %593 = vmatprep.subr.mxu0 0.0
        %594 = vmatpush1.xpose.msra.mxu0 0.0
        %595 = vmatprep.subr.mxu0 0.0
        %596 = vmatpush1.xpose.msra.mxu0 0.0
        %597 = vmatprep.subr.mxu0 0.0
        %598 = vmatpush1.xpose.msra.mxu0 0.0
        %599 = vmatprep.subr.mxu0 0.0
        %600 = vmatpush1.xpose.msra.mxu0 0.0
        %601 = vmatprep.subr.mxu0 0.0
        %602 = vmatpush1.xpose.msra.mxu0 0.0
        %603 = vmatprep.subr.mxu0 0.0
        %604 = vmatpush1.xpose.msra.mxu0 0.0
        %605 = vmatprep.subr.mxu0 0.0
        %606 = vmatpush1.xpose.msra.mxu0 0.0
        %607 = vmatprep.subr.mxu0 0.0
        %608 = vmatpush1.xpose.msra.mxu0 0.0
        %609 = vmatprep.subr.mxu0 0.0
        %610 = vmatpush1.xpose.msra.mxu0 0.0
        %611 = vmatprep.subr.mxu0 0.0
        %612 = vmatpush1.xpose.msra.mxu0 0.0
        %613 = vmatprep.subr.mxu0 0.0
        %614 = vmatpush1.xpose.msra.mxu0 0.0
        %615 = vmatprep.subr.mxu0 0.0
        %616 = vmatpush1.xpose.msra.mxu0 0.0
        %617 = vmatprep.subr.mxu0 0.0
        %618 = vmatpush1.xpose.msra.mxu0 0.0
        %619 = vmatprep.subr.mxu0 0.0
        %620 = vmatpush1.xpose.msra.mxu0 0.0
        %621 = vmatprep.subr.mxu0 0.0
        %622 = vmatpush1.xpose.msra.mxu0 0.0
        %623 = vmatprep.subr.mxu0 0.0
        %624 = vmatpush1.xpose.msra.mxu0 0.0
        %625 = vmatprep.subr.mxu0 0.0
        %626 = vmatpush1.xpose.msra.mxu0 0.0
        %627 = vmatprep.subr.mxu0 0.0
        %628 = vmatpush1.xpose.msra.mxu0 0.0
        %629 = vmatprep.subr.mxu0 0.0
        %630 = vmatpush1.xpose.msra.mxu0 0.0
        %631 = vmatprep.subr.mxu0 0.0
        %632 = vmatpush1.xpose.msra.mxu0 0.0
        %633 = vmatprep.subr.mxu0 0.0
        %634 = vmatpush1.xpose.msra.mxu0 0.0
        %635 = vmatprep.subr.mxu0 0.0
        %636 = vmatpush1.xpose.msra.mxu0 0.0
        %637 = vmatprep.subr.mxu0 0.0
        %638 = vmatpush1.xpose.msra.mxu0 0.0
        %639 = vmatprep.subr.mxu0 0.0
        %640 = vmatpush1.xpose.msra.mxu0 0.0
        %641 = vmatprep.subr.mxu0 0.0
        %642 = vmatpush1.xpose.msra.mxu0 0.0
        %643 = vmatprep.subr.mxu0 0.0
        %644 = vmatpush1.xpose.msra.mxu0 0.0
        %645 = vmatprep.subr.mxu0 0.0
        %646 = vmatpush1.xpose.msra.mxu0 0.0
        %647 = vmatprep.subr.mxu0 0.0
        %648 = vmatpush1.xpose.msra.mxu0 0.0
        %649 = vmatprep.subr.mxu0 0.0
        %650 = vmatpush1.xpose.msra.mxu0 0.0
        %651 = vmatprep.subr.mxu0 0.0
        %652 = vmatpush1.xpose.msra.mxu0 0.0
        %653 = vmatprep.subr.mxu0 0.0
        %654 = vmatpush1.xpose.msra.mxu0 0.0
        %v655 = vand.u32 %v189, 4294901760
        %656 = vmatprep.mubr.f32.mxu0 %v655
        %v657 = vand.u32 %v187, 4294901760
        %658 = vmatmul.mubr.f32.gmra.mrb[0].mxu0 %v657
        %v659 = vpop.f32.mrb[0].mxu0
        %v660 = vadd.f32 %v586, %v659
        %v661 = vpop.f32.mrb[0].mxu0
        %662 = vdwg.mxu0
        %vm663 = vcmask 1043456
        %v664 = vsel %vm663, %v187, 0.0
        %v665 = vsel %vm663, %v189, 0.0
        %v666 = vadd.f32 %v664, %v665
        %667 = vadd.xlane.f32.xlu0 %v666
        %v668 = vpop.xlane.xlu0 %667
        %v669 = vld [vmem:[%s1] sm:$0xf]
        %s670 = scalar_lea.vmem %s1, 4
        %v671 = vld [vmem:[%s670] sm:$0xf]
        %s672 = scalar_lea.vmem %s1, 8
        %v673 = vld [vmem:[%s672] sm:$0xf]
        %v674 = vld [vmem:[%s2] sm:$0xf]
        %s675 = scalar_lea.vmem %s2, 4
        %v676 = vld [vmem:[%s675] sm:$0xf]
        %s677 = scalar_lea.vmem %s2, 8
        %v678 = vld [vmem:[%s677] sm:$0xf]
        %vm679 = vcmask 31744
        %v681 = vsel %vm679, %v669, 0
        %v684 = vsel %vm663, %v660, 0
        %686 = vmatprep.subr.mxu0 0.0
        %v687 = vand.u32 %v684, 4294901760
        %688 = vmatpush1.msra.mxu0 %v687
        %689 = vmatprep.subr.mxu0 0.0
        %690 = vmatpush1.msra.mxu0 0.0
        %691 = vmatprep.subr.mxu0 0.0
        %692 = vmatpush1.msra.mxu0 0.0
        %693 = vmatprep.subr.mxu0 0.0
        %694 = vmatpush1.msra.mxu0 0.0
        %695 = vmatprep.subr.mxu0 0.0
        %696 = vmatpush1.msra.mxu0 0.0
        %697 = vmatprep.subr.mxu0 0.0
        %698 = vmatpush1.msra.mxu0 0.0
        %699 = vmatprep.subr.mxu0 0.0
        %700 = vmatpush1.msra.mxu0 0.0
        %701 = vmatprep.subr.mxu0 0.0
        %702 = vmatpush1.msra.mxu0 0.0
        %703 = vmatprep.subr.mxu0 0.0
        %704 = vmatpush1.msra.mxu0 0.0
        %705 = vmatprep.subr.mxu0 0.0
        %706 = vmatpush1.msra.mxu0 0.0
        %707 = vmatprep.subr.mxu0 0.0
        %708 = vmatpush1.msra.mxu0 0.0
        %709 = vmatprep.subr.mxu0 0.0
        %710 = vmatpush1.msra.mxu0 0.0
        %711 = vmatprep.subr.mxu0 0.0
        %712 = vmatpush1.msra.mxu0 0.0
        %713 = vmatprep.subr.mxu0 0.0
        %714 = vmatpush1.msra.mxu0 0.0
        %715 = vmatprep.subr.mxu0 0.0
        %716 = vmatpush1.msra.mxu0 0.0
        %717 = vmatprep.subr.mxu0 0.0
        %718 = vmatpush1.msra.mxu0 0.0
        %719 = vmatprep.subr.mxu0 0.0
        %720 = vmatpush1.msra.mxu0 0.0
        %721 = vmatprep.subr.mxu0 0.0
        %722 = vmatpush1.msra.mxu0 0.0
        %723 = vmatprep.subr.mxu0 0.0
        %724 = vmatpush1.msra.mxu0 0.0
        %725 = vmatprep.subr.mxu0 0.0
        %726 = vmatpush1.msra.mxu0 0.0
        %727 = vmatprep.subr.mxu0 0.0
        %728 = vmatpush1.msra.mxu0 0.0
        %729 = vmatprep.subr.mxu0 0.0
        %730 = vmatpush1.msra.mxu0 0.0
        %731 = vmatprep.subr.mxu0 0.0
        %732 = vmatpush1.msra.mxu0 0.0
        %733 = vmatprep.subr.mxu0 0.0
        %734 = vmatpush1.msra.mxu0 0.0
        %735 = vmatprep.subr.mxu0 0.0
        %736 = vmatpush1.msra.mxu0 0.0
        %737 = vmatprep.subr.mxu0 0.0
        %738 = vmatpush1.msra.mxu0 0.0
        %739 = vmatprep.subr.mxu0 0.0
        %740 = vmatpush1.msra.mxu0 0.0
        %741 = vmatprep.subr.mxu0 0.0
        %742 = vmatpush1.msra.mxu0 0.0
        %743 = vmatprep.subr.mxu0 0.0
        %744 = vmatpush1.msra.mxu0 0.0
        %745 = vmatprep.subr.mxu0 0.0
        %746 = vmatpush1.msra.mxu0 0.0
        %747 = vmatprep.subr.mxu0 0.0
        %748 = vmatpush1.msra.mxu0 0.0
        %749 = vmatprep.subr.mxu0 0.0
        %750 = vmatpush1.msra.mxu0 0.0
        %751 = vmatprep.mubr.f32.mxu0 0.0
        %v752 = vand.u32 %v681, 4294901760
        %v753 = vsub.f32 %v681, %v752
        %v754 = vand.u32 %v753, 4294901760
        %v755 = vsub.f32 %v753, %v754
        %v756 = vand.u32 %v755, 4294901760
        %757 = vmatmul.mubr.f32.gmra.mrb[0].mxu0 %v756
        %v758 = vpop.f32.mrb[0].mxu0
        %v759 = vadd.f32 0.0, %v758
        %v760 = vpop.f32.mrb[0].mxu0
        %761 = vdwg.mxu0
        %762 = vmatprep.subr.mxu0 0.0
        %v763 = vand.u32 %v684, 4294901760
        %v764 = vsub.f32 %v684, %v763
        %v765 = vand.u32 %v764, 4294901760
        %v766 = vsub.f32 %v764, %v765
        %v767 = vand.u32 %v766, 4294901760
        %768 = vmatpush1.msra.mxu0 %v767
        %769 = vmatprep.subr.mxu0 0.0
        %770 = vmatpush1.msra.mxu0 0.0
        %771 = vmatprep.subr.mxu0 0.0
        %772 = vmatpush1.msra.mxu0 0.0
        %773 = vmatprep.subr.mxu0 0.0
        %774 = vmatpush1.msra.mxu0 0.0
        %775 = vmatprep.subr.mxu0 0.0
        %776 = vmatpush1.msra.mxu0 0.0
        %777 = vmatprep.subr.mxu0 0.0
        %778 = vmatpush1.msra.mxu0 0.0
        %779 = vmatprep.subr.mxu0 0.0
        %780 = vmatpush1.msra.mxu0 0.0
        %781 = vmatprep.subr.mxu0 0.0
        %782 = vmatpush1.msra.mxu0 0.0
        %783 = vmatprep.subr.mxu0 0.0
        %784 = vmatpush1.msra.mxu0 0.0
        %785 = vmatprep.subr.mxu0 0.0
        %786 = vmatpush1.msra.mxu0 0.0
        %787 = vmatprep.subr.mxu0 0.0
        %788 = vmatpush1.msra.mxu0 0.0
        %789 = vmatprep.subr.mxu0 0.0
        %790 = vmatpush1.msra.mxu0 0.0
        %791 = vmatprep.subr.mxu0 0.0
        %792 = vmatpush1.msra.mxu0 0.0
        %793 = vmatprep.subr.mxu0 0.0
        %794 = vmatpush1.msra.mxu0 0.0
        %795 = vmatprep.subr.mxu0 0.0
        %796 = vmatpush1.msra.mxu0 0.0
        %797 = vmatprep.subr.mxu0 0.0
        %798 = vmatpush1.msra.mxu0 0.0
        %799 = vmatprep.subr.mxu0 0.0
        %800 = vmatpush1.msra.mxu0 0.0
        %801 = vmatprep.subr.mxu0 0.0
        %802 = vmatpush1.msra.mxu0 0.0
        %803 = vmatprep.subr.mxu0 0.0
        %804 = vmatpush1.msra.mxu0 0.0
        %805 = vmatprep.subr.mxu0 0.0
        %806 = vmatpush1.msra.mxu0 0.0
        %807 = vmatprep.subr.mxu0 0.0
        %808 = vmatpush1.msra.mxu0 0.0
        %809 = vmatprep.subr.mxu0 0.0
        %810 = vmatpush1.msra.mxu0 0.0
        %811 = vmatprep.subr.mxu0 0.0
        %812 = vmatpush1.msra.mxu0 0.0
        %813 = vmatprep.subr.mxu0 0.0
        %814 = vmatpush1.msra.mxu0 0.0
        %815 = vmatprep.subr.mxu0 0.0
        %816 = vmatpush1.msra.mxu0 0.0
        %817 = vmatprep.subr.mxu0 0.0
        %818 = vmatpush1.msra.mxu0 0.0
        %819 = vmatprep.subr.mxu0 0.0
        %820 = vmatpush1.msra.mxu0 0.0
        %821 = vmatprep.subr.mxu0 0.0
        %822 = vmatpush1.msra.mxu0 0.0
        %823 = vmatprep.subr.mxu0 0.0
        %824 = vmatpush1.msra.mxu0 0.0
        %825 = vmatprep.subr.mxu0 0.0
        %826 = vmatpush1.msra.mxu0 0.0
        %827 = vmatprep.subr.mxu0 0.0
        %828 = vmatpush1.msra.mxu0 0.0
        %829 = vmatprep.subr.mxu0 0.0
        %830 = vmatpush1.msra.mxu0 0.0
        %831 = vmatprep.mubr.f32.mxu0 0.0
        %v832 = vand.u32 %v681, 4294901760
        %833 = vmatmul.mubr.f32.gmra.mrb[0].mxu0 %v832
        %v834 = vpop.f32.mrb[0].mxu0
        %v835 = vadd.f32 %v759, %v834
        %v836 = vpop.f32.mrb[0].mxu0
        %837 = vdwg.mxu0
        %838 = vmatprep.subr.mxu0 0.0
        %v839 = vand.u32 %v684, 4294901760
        %v840 = vsub.f32 %v684, %v839
        %841 = vmatpush1.msra.mxu0 %v840
        %842 = vmatprep.subr.mxu0 0.0
        %843 = vmatpush1.msra.mxu0 0.0
        %844 = vmatprep.subr.mxu0 0.0
        %845 = vmatpush1.msra.mxu0 0.0
        %846 = vmatprep.subr.mxu0 0.0
        %847 = vmatpush1.msra.mxu0 0.0
        %848 = vmatprep.subr.mxu0 0.0
        %849 = vmatpush1.msra.mxu0 0.0
        %850 = vmatprep.subr.mxu0 0.0
        %851 = vmatpush1.msra.mxu0 0.0
        %852 = vmatprep.subr.mxu0 0.0
        %853 = vmatpush1.msra.mxu0 0.0
        %854 = vmatprep.subr.mxu0 0.0
        %855 = vmatpush1.msra.mxu0 0.0
        %856 = vmatprep.subr.mxu0 0.0
        %857 = vmatpush1.msra.mxu0 0.0
        %858 = vmatprep.subr.mxu0 0.0
        %859 = vmatpush1.msra.mxu0 0.0
        %860 = vmatprep.subr.mxu0 0.0
        %861 = vmatpush1.msra.mxu0 0.0
        %862 = vmatprep.subr.mxu0 0.0
        %863 = vmatpush1.msra.mxu0 0.0
        %864 = vmatprep.subr.mxu0 0.0
        %865 = vmatpush1.msra.mxu0 0.0
        %866 = vmatprep.subr.mxu0 0.0
        %867 = vmatpush1.msra.mxu0 0.0
        %868 = vmatprep.subr.mxu0 0.0
        %869 = vmatpush1.msra.mxu0 0.0
        %870 = vmatprep.subr.mxu0 0.0
        %871 = vmatpush1.msra.mxu0 0.0
        %872 = vmatprep.subr.mxu0 0.0
        %873 = vmatpush1.msra.mxu0 0.0
        %874 = vmatprep.subr.mxu0 0.0
        %875 = vmatpush1.msra.mxu0 0.0
        %876 = vmatprep.subr.mxu0 0.0
        %877 = vmatpush1.msra.mxu0 0.0
        %878 = vmatprep.subr.mxu0 0.0
        %879 = vmatpush1.msra.mxu0 0.0
        %880 = vmatprep.subr.mxu0 0.0
        %881 = vmatpush1.msra.mxu0 0.0
        %882 = vmatprep.subr.mxu0 0.0
        %883 = vmatpush1.msra.mxu0 0.0
        %884 = vmatprep.subr.mxu0 0.0
        %885 = vmatpush1.msra.mxu0 0.0
        %886 = vmatprep.subr.mxu0 0.0
        %887 = vmatpush1.msra.mxu0 0.0
        %888 = vmatprep.subr.mxu0 0.0
        %889 = vmatpush1.msra.mxu0 0.0
        %890 = vmatprep.subr.mxu0 0.0
        %891 = vmatpush1.msra.mxu0 0.0
        %892 = vmatprep.subr.mxu0 0.0
        %893 = vmatpush1.msra.mxu0 0.0
        %894 = vmatprep.subr.mxu0 0.0
        %895 = vmatpush1.msra.mxu0 0.0
        %896 = vmatprep.subr.mxu0 0.0
        %897 = vmatpush1.msra.mxu0 0.0
        %898 = vmatprep.subr.mxu0 0.0
        %899 = vmatpush1.msra.mxu0 0.0
        %900 = vmatprep.subr.mxu0 0.0
        %901 = vmatpush1.msra.mxu0 0.0
        %902 = vmatprep.subr.mxu0 0.0
        %903 = vmatpush1.msra.mxu0 0.0
        %904 = vmatprep.mubr.f32.mxu0 0.0
        %v905 = vand.u32 %v681, 4294901760
        %v906 = vsub.f32 %v681, %v905
        %907 = vmatmul.mubr.f32.gmra.mrb[0].mxu0 %v906
        %v908 = vpop.f32.mrb[0].mxu0
        %v909 = vadd.f32 %v835, %v908
        %v910 = vpop.f32.mrb[0].mxu0
        %911 = vdwg.mxu0
        %912 = vmatprep.subr.mxu0 0.0
        %v913 = vand.u32 %v684, 4294901760
        %914 = vmatpush1.msra.mxu0 %v913
        %915 = vmatprep.subr.mxu0 0.0
        %916 = vmatpush1.msra.mxu0 0.0
        %917 = vmatprep.subr.mxu0 0.0
        %918 = vmatpush1.msra.mxu0 0.0
        %919 = vmatprep.subr.mxu0 0.0
        %920 = vmatpush1.msra.mxu0 0.0
        %921 = vmatprep.subr.mxu0 0.0
        %922 = vmatpush1.msra.mxu0 0.0
        %923 = vmatprep.subr.mxu0 0.0
        %924 = vmatpush1.msra.mxu0 0.0
        %925 = vmatprep.subr.mxu0 0.0
        %926 = vmatpush1.msra.mxu0 0.0
        %927 = vmatprep.subr.mxu0 0.0
        %928 = vmatpush1.msra.mxu0 0.0
        %929 = vmatprep.subr.mxu0 0.0
        %930 = vmatpush1.msra.mxu0 0.0
        %931 = vmatprep.subr.mxu0 0.0
        %932 = vmatpush1.msra.mxu0 0.0
        %933 = vmatprep.subr.mxu0 0.0
        %934 = vmatpush1.msra.mxu0 0.0
        %935 = vmatprep.subr.mxu0 0.0
        %936 = vmatpush1.msra.mxu0 0.0
        %937 = vmatprep.subr.mxu0 0.0
        %938 = vmatpush1.msra.mxu0 0.0
        %939 = vmatprep.subr.mxu0 0.0
        %940 = vmatpush1.msra.mxu0 0.0
        %941 = vmatprep.subr.mxu0 0.0
        %942 = vmatpush1.msra.mxu0 0.0
        %943 = vmatprep.subr.mxu0 0.0
        %944 = vmatpush1.msra.mxu0 0.0
        %945 = vmatprep.subr.mxu0 0.0
        %946 = vmatpush1.msra.mxu0 0.0
        %947 = vmatprep.subr.mxu0 0.0
        %948 = vmatpush1.msra.mxu0 0.0
        %949 = vmatprep.subr.mxu0 0.0
        %950 = vmatpush1.msra.mxu0 0.0
        %951 = vmatprep.subr.mxu0 0.0
        %952 = vmatpush1.msra.mxu0 0.0
        %953 = vmatprep.subr.mxu0 0.0
        %954 = vmatpush1.msra.mxu0 0.0
        %955 = vmatprep.subr.mxu0 0.0
        %956 = vmatpush1.msra.mxu0 0.0
        %957 = vmatprep.subr.mxu0 0.0
        %958 = vmatpush1.msra.mxu0 0.0
        %959 = vmatprep.subr.mxu0 0.0
        %960 = vmatpush1.msra.mxu0 0.0
        %961 = vmatprep.subr.mxu0 0.0
        %962 = vmatpush1.msra.mxu0 0.0
        %963 = vmatprep.subr.mxu0 0.0
        %964 = vmatpush1.msra.mxu0 0.0
        %965 = vmatprep.subr.mxu0 0.0
        %966 = vmatpush1.msra.mxu0 0.0
        %967 = vmatprep.subr.mxu0 0.0
        %968 = vmatpush1.msra.mxu0 0.0
        %969 = vmatprep.subr.mxu0 0.0
        %970 = vmatpush1.msra.mxu0 0.0
        %971 = vmatprep.subr.mxu0 0.0
        %972 = vmatpush1.msra.mxu0 0.0
        %973 = vmatprep.subr.mxu0 0.0
        %974 = vmatpush1.msra.mxu0 0.0
        %975 = vmatprep.subr.mxu0 0.0
        %976 = vmatpush1.msra.mxu0 0.0
        %977 = vmatprep.mubr.f32.mxu0 0.0
        %v978 = vand.u32 %v681, 4294901760
        %v979 = vsub.f32 %v681, %v978
        %v980 = vand.u32 %v979, 4294901760
        %981 = vmatmul.mubr.f32.gmra.mrb[0].mxu0 %v980
        %v982 = vpop.f32.mrb[0].mxu0
        %v983 = vadd.f32 %v909, %v982
        %v984 = vpop.f32.mrb[0].mxu0
        %985 = vdwg.mxu0
        %986 = vmatprep.subr.mxu0 0.0
        %v987 = vand.u32 %v684, 4294901760
        %v988 = vsub.f32 %v684, %v987
        %v989 = vand.u32 %v988, 4294901760
        %990 = vmatpush1.msra.mxu0 %v989
        %991 = vmatprep.subr.mxu0 0.0
        %992 = vmatpush1.msra.mxu0 0.0
        %993 = vmatprep.subr.mxu0 0.0
        %994 = vmatpush1.msra.mxu0 0.0
        %995 = vmatprep.subr.mxu0 0.0
        %996 = vmatpush1.msra.mxu0 0.0
        %997 = vmatprep.subr.mxu0 0.0
        %998 = vmatpush1.msra.mxu0 0.0
        %999 = vmatprep.subr.mxu0 0.0
        %1000 = vmatpush1.msra.mxu0 0.0
        %1001 = vmatprep.subr.mxu0 0.0
        %1002 = vmatpush1.msra.mxu0 0.0
        %1003 = vmatprep.subr.mxu0 0.0
        %1004 = vmatpush1.msra.mxu0 0.0
        %1005 = vmatprep.subr.mxu0 0.0
        %1006 = vmatpush1.msra.mxu0 0.0
        %1007 = vmatprep.subr.mxu0 0.0
        %1008 = vmatpush1.msra.mxu0 0.0
        %1009 = vmatprep.subr.mxu0 0.0
        %1010 = vmatpush1.msra.mxu0 0.0
        %1011 = vmatprep.subr.mxu0 0.0
        %1012 = vmatpush1.msra.mxu0 0.0
        %1013 = vmatprep.subr.mxu0 0.0
        %1014 = vmatpush1.msra.mxu0 0.0
        %1015 = vmatprep.subr.mxu0 0.0
        %1016 = vmatpush1.msra.mxu0 0.0
        %1017 = vmatprep.subr.mxu0 0.0
        %1018 = vmatpush1.msra.mxu0 0.0
        %1019 = vmatprep.subr.mxu0 0.0
        %1020 = vmatpush1.msra.mxu0 0.0
        %1021 = vmatprep.subr.mxu0 0.0
        %1022 = vmatpush1.msra.mxu0 0.0
        %1023 = vmatprep.subr.mxu0 0.0
        %1024 = vmatpush1.msra.mxu0 0.0
        %1025 = vmatprep.subr.mxu0 0.0
        %1026 = vmatpush1.msra.mxu0 0.0
        %1027 = vmatprep.subr.mxu0 0.0
        %1028 = vmatpush1.msra.mxu0 0.0
        %1029 = vmatprep.subr.mxu0 0.0
        %1030 = vmatpush1.msra.mxu0 0.0
        %1031 = vmatprep.subr.mxu0 0.0
        %1032 = vmatpush1.msra.mxu0 0.0
        %1033 = vmatprep.subr.mxu0 0.0
        %1034 = vmatpush1.msra.mxu0 0.0
        %1035 = vmatprep.subr.mxu0 0.0
        %1036 = vmatpush1.msra.mxu0 0.0
        %1037 = vmatprep.subr.mxu0 0.0
        %1038 = vmatpush1.msra.mxu0 0.0
        %1039 = vmatprep.subr.mxu0 0.0
        %1040 = vmatpush1.msra.mxu0 0.0
        %1041 = vmatprep.subr.mxu0 0.0
        %1042 = vmatpush1.msra.mxu0 0.0
        %1043 = vmatprep.subr.mxu0 0.0
        %1044 = vmatpush1.msra.mxu0 0.0
        %1045 = vmatprep.subr.mxu0 0.0
        %1046 = vmatpush1.msra.mxu0 0.0
        %1047 = vmatprep.subr.mxu0 0.0
        %1048 = vmatpush1.msra.mxu0 0.0
        %1049 = vmatprep.subr.mxu0 0.0
        %1050 = vmatpush1.msra.mxu0 0.0
        %1051 = vmatprep.subr.mxu0 0.0
        %1052 = vmatpush1.msra.mxu0 0.0
        %1053 = vmatprep.mubr.f32.mxu0 0.0
        %v1054 = vand.u32 %v681, 4294901760
        %1055 = vmatmul.mubr.f32.gmra.mrb[0].mxu0 %v1054
        %v1056 = vpop.f32.mrb[0].mxu0
        %v1057 = vadd.f32 %v983, %v1056
        %v1058 = vpop.f32.mrb[0].mxu0
        %1059 = vdwg.mxu0
        %1060 = vmatprep.subr.mxu0 0.0
        %v1061 = vand.u32 %v684, 4294901760
        %1062 = vmatpush1.msra.mxu0 %v1061
        %1063 = vmatprep.subr.mxu0 0.0
        %1064 = vmatpush1.msra.mxu0 0.0
        %1065 = vmatprep.subr.mxu0 0.0
        %1066 = vmatpush1.msra.mxu0 0.0
        %1067 = vmatprep.subr.mxu0 0.0
        %1068 = vmatpush1.msra.mxu0 0.0
        %1069 = vmatprep.subr.mxu0 0.0
        %1070 = vmatpush1.msra.mxu0 0.0
        %1071 = vmatprep.subr.mxu0 0.0
        %1072 = vmatpush1.msra.mxu0 0.0
        %1073 = vmatprep.subr.mxu0 0.0
        %1074 = vmatpush1.msra.mxu0 0.0
        %1075 = vmatprep.subr.mxu0 0.0
        %1076 = vmatpush1.msra.mxu0 0.0
        %1077 = vmatprep.subr.mxu0 0.0
        %1078 = vmatpush1.msra.mxu0 0.0
        %1079 = vmatprep.subr.mxu0 0.0
        %1080 = vmatpush1.msra.mxu0 0.0
        %1081 = vmatprep.subr.mxu0 0.0
        %1082 = vmatpush1.msra.mxu0 0.0
        %1083 = vmatprep.subr.mxu0 0.0
        %1084 = vmatpush1.msra.mxu0 0.0
        %1085 = vmatprep.subr.mxu0 0.0
        %1086 = vmatpush1.msra.mxu0 0.0
        %1087 = vmatprep.subr.mxu0 0.0
        %1088 = vmatpush1.msra.mxu0 0.0
        %1089 = vmatprep.subr.mxu0 0.0
        %1090 = vmatpush1.msra.mxu0 0.0
        %1091 = vmatprep.subr.mxu0 0.0
        %1092 = vmatpush1.msra.mxu0 0.0
        %1093 = vmatprep.subr.mxu0 0.0
        %1094 = vmatpush1.msra.mxu0 0.0
        %1095 = vmatprep.subr.mxu0 0.0
        %1096 = vmatpush1.msra.mxu0 0.0
        %1097 = vmatprep.subr.mxu0 0.0
        %1098 = vmatpush1.msra.mxu0 0.0
        %1099 = vmatprep.subr.mxu0 0.0
        %1100 = vmatpush1.msra.mxu0 0.0
        %1101 = vmatprep.subr.mxu0 0.0
        %1102 = vmatpush1.msra.mxu0 0.0
        %1103 = vmatprep.subr.mxu0 0.0
        %1104 = vmatpush1.msra.mxu0 0.0
        %1105 = vmatprep.subr.mxu0 0.0
        %1106 = vmatpush1.msra.mxu0 0.0
        %1107 = vmatprep.subr.mxu0 0.0
        %1108 = vmatpush1.msra.mxu0 0.0
        %1109 = vmatprep.subr.mxu0 0.0
        %1110 = vmatpush1.msra.mxu0 0.0
        %1111 = vmatprep.subr.mxu0 0.0
        %1112 = vmatpush1.msra.mxu0 0.0
        %1113 = vmatprep.subr.mxu0 0.0
        %1114 = vmatpush1.msra.mxu0 0.0
        %1115 = vmatprep.subr.mxu0 0.0
        %1116 = vmatpush1.msra.mxu0 0.0
        %1117 = vmatprep.subr.mxu0 0.0
        %1118 = vmatpush1.msra.mxu0 0.0
        %1119 = vmatprep.subr.mxu0 0.0
        %1120 = vmatpush1.msra.mxu0 0.0
        %1121 = vmatprep.subr.mxu0 0.0
        %1122 = vmatpush1.msra.mxu0 0.0
        %1123 = vmatprep.subr.mxu0 0.0
        %1124 = vmatpush1.msra.mxu0 0.0
        %1125 = vmatprep.mubr.f32.mxu0 0.0
        %v1126 = vand.u32 %v681, 4294901760
        %1127 = vmatmul.mubr.f32.gmra.mrb[0].mxu0 %v1126
        %v1128 = vpop.f32.mrb[0].mxu0
        %v1129 = vadd.f32 %v1057, %v1128
        %v1130 = vpop.f32.mrb[0].mxu0
        %1131 = vdwg.mxu0
        %v1133 = vsel %vm663, %v668, 0
        %1135 = vmatprep.subr.mxu0 0.0
        %v1136 = vand.u32 %v1133, 4294901760
        %1137 = vmatpush1.msra.mxu0 %v1136
        %1138 = vmatprep.subr.mxu0 0.0
        %1139 = vmatpush1.msra.mxu0 0.0
        %1140 = vmatprep.subr.mxu0 0.0
        %1141 = vmatpush1.msra.mxu0 0.0
        %1142 = vmatprep.subr.mxu0 0.0
        %1143 = vmatpush1.msra.mxu0 0.0
        %1144 = vmatprep.subr.mxu0 0.0
        %1145 = vmatpush1.msra.mxu0 0.0
        %1146 = vmatprep.subr.mxu0 0.0
        %1147 = vmatpush1.msra.mxu0 0.0
        %1148 = vmatprep.subr.mxu0 0.0
        %1149 = vmatpush1.msra.mxu0 0.0
        %1150 = vmatprep.subr.mxu0 0.0
        %1151 = vmatpush1.msra.mxu0 0.0
        %1152 = vmatprep.subr.mxu0 0.0
        %1153 = vmatpush1.msra.mxu0 0.0
        %1154 = vmatprep.subr.mxu0 0.0
        %1155 = vmatpush1.msra.mxu0 0.0
        %1156 = vmatprep.subr.mxu0 0.0
        %1157 = vmatpush1.msra.mxu0 0.0
        %1158 = vmatprep.subr.mxu0 0.0
        %1159 = vmatpush1.msra.mxu0 0.0
        %1160 = vmatprep.subr.mxu0 0.0
        %1161 = vmatpush1.msra.mxu0 0.0
        %1162 = vmatprep.subr.mxu0 0.0
        %1163 = vmatpush1.msra.mxu0 0.0
        %1164 = vmatprep.subr.mxu0 0.0
        %1165 = vmatpush1.msra.mxu0 0.0
        %1166 = vmatprep.subr.mxu0 0.0
        %1167 = vmatpush1.msra.mxu0 0.0
        %1168 = vmatprep.subr.mxu0 0.0
        %1169 = vmatpush1.msra.mxu0 0.0
        %1170 = vmatprep.subr.mxu0 0.0
        %1171 = vmatpush1.msra.mxu0 0.0
        %1172 = vmatprep.subr.mxu0 0.0
        %1173 = vmatpush1.msra.mxu0 0.0
        %1174 = vmatprep.subr.mxu0 0.0
        %1175 = vmatpush1.msra.mxu0 0.0
        %1176 = vmatprep.subr.mxu0 0.0
        %1177 = vmatpush1.msra.mxu0 0.0
        %1178 = vmatprep.subr.mxu0 0.0
        %1179 = vmatpush1.msra.mxu0 0.0
        %1180 = vmatprep.subr.mxu0 0.0
        %1181 = vmatpush1.msra.mxu0 0.0
        %1182 = vmatprep.subr.mxu0 0.0
        %1183 = vmatpush1.msra.mxu0 0.0
        %1184 = vmatprep.subr.mxu0 0.0
        %1185 = vmatpush1.msra.mxu0 0.0
        %1186 = vmatprep.subr.mxu0 0.0
        %1187 = vmatpush1.msra.mxu0 0.0
        %1188 = vmatprep.subr.mxu0 0.0
        %1189 = vmatpush1.msra.mxu0 0.0
        %1190 = vmatprep.subr.mxu0 0.0
        %1191 = vmatpush1.msra.mxu0 0.0
        %1192 = vmatprep.subr.mxu0 0.0
        %1193 = vmatpush1.msra.mxu0 0.0
        %1194 = vmatprep.subr.mxu0 0.0
        %1195 = vmatpush1.msra.mxu0 0.0
        %1196 = vmatprep.subr.mxu0 0.0
        %1197 = vmatpush1.msra.mxu0 0.0
        %1198 = vmatprep.subr.mxu0 0.0
        %1199 = vmatpush1.msra.mxu0 0.0
        %1200 = vmatprep.mubr.f32.mxu0 0.0
        %v1201 = vand.u32 %v681, 4294901760
        %v1202 = vsub.f32 %v681, %v1201
        %v1203 = vand.u32 %v1202, 4294901760
        %v1204 = vsub.f32 %v1202, %v1203
        %v1205 = vand.u32 %v1204, 4294901760
        %1206 = vmatmul.mubr.f32.gmra.mrb[0].mxu0 %v1205
        %v1207 = vpop.f32.mrb[0].mxu0
        %v1208 = vadd.f32 0.0, %v1207
        %v1209 = vpop.f32.mrb[0].mxu0
        %1210 = vdwg.mxu0
        %1211 = vmatprep.subr.mxu0 0.0
        %v1212 = vand.u32 %v1133, 4294901760
        %v1213 = vsub.f32 %v1133, %v1212
        %v1214 = vand.u32 %v1213, 4294901760
        %v1215 = vsub.f32 %v1213, %v1214
        %v1216 = vand.u32 %v1215, 4294901760
        %1217 = vmatpush1.msra.mxu0 %v1216
        %1218 = vmatprep.subr.mxu0 0.0
        %1219 = vmatpush1.msra.mxu0 0.0
        %1220 = vmatprep.subr.mxu0 0.0
        %1221 = vmatpush1.msra.mxu0 0.0
        %1222 = vmatprep.subr.mxu0 0.0
        %1223 = vmatpush1.msra.mxu0 0.0
        %1224 = vmatprep.subr.mxu0 0.0
        %1225 = vmatpush1.msra.mxu0 0.0
        %1226 = vmatprep.subr.mxu0 0.0
        %1227 = vmatpush1.msra.mxu0 0.0
        %1228 = vmatprep.subr.mxu0 0.0
        %1229 = vmatpush1.msra.mxu0 0.0
        %1230 = vmatprep.subr.mxu0 0.0
        %1231 = vmatpush1.msra.mxu0 0.0
        %1232 = vmatprep.subr.mxu0 0.0
        %1233 = vmatpush1.msra.mxu0 0.0
        %1234 = vmatprep.subr.mxu0 0.0
        %1235 = vmatpush1.msra.mxu0 0.0
        %1236 = vmatprep.subr.mxu0 0.0
        %1237 = vmatpush1.msra.mxu0 0.0
        %1238 = vmatprep.subr.mxu0 0.0
        %1239 = vmatpush1.msra.mxu0 0.0
        %1240 = vmatprep.subr.mxu0 0.0
        %1241 = vmatpush1.msra.mxu0 0.0
        %1242 = vmatprep.subr.mxu0 0.0
        %1243 = vmatpush1.msra.mxu0 0.0
        %1244 = vmatprep.subr.mxu0 0.0
        %1245 = vmatpush1.msra.mxu0 0.0
        %1246 = vmatprep.subr.mxu0 0.0
        %1247 = vmatpush1.msra.mxu0 0.0
        %1248 = vmatprep.subr.mxu0 0.0
        %1249 = vmatpush1.msra.mxu0 0.0
        %1250 = vmatprep.subr.mxu0 0.0
        %1251 = vmatpush1.msra.mxu0 0.0
        %1252 = vmatprep.subr.mxu0 0.0
        %1253 = vmatpush1.msra.mxu0 0.0
        %1254 = vmatprep.subr.mxu0 0.0
        %1255 = vmatpush1.msra.mxu0 0.0
        %1256 = vmatprep.subr.mxu0 0.0
        %1257 = vmatpush1.msra.mxu0 0.0
        %1258 = vmatprep.subr.mxu0 0.0
        %1259 = vmatpush1.msra.mxu0 0.0
        %1260 = vmatprep.subr.mxu0 0.0
        %1261 = vmatpush1.msra.mxu0 0.0
        %1262 = vmatprep.subr.mxu0 0.0
        %1263 = vmatpush1.msra.mxu0 0.0
        %1264 = vmatprep.subr.mxu0 0.0
        %1265 = vmatpush1.msra.mxu0 0.0
        %1266 = vmatprep.subr.mxu0 0.0
        %1267 = vmatpush1.msra.mxu0 0.0
        %1268 = vmatprep.subr.mxu0 0.0
        %1269 = vmatpush1.msra.mxu0 0.0
        %1270 = vmatprep.subr.mxu0 0.0
        %1271 = vmatpush1.msra.mxu0 0.0
        %1272 = vmatprep.subr.mxu0 0.0
        %1273 = vmatpush1.msra.mxu0 0.0
        %1274 = vmatprep.subr.mxu0 0.0
        %1275 = vmatpush1.msra.mxu0 0.0
        %1276 = vmatprep.subr.mxu0 0.0
        %1277 = vmatpush1.msra.mxu0 0.0
        %1278 = vmatprep.subr.mxu0 0.0
        %1279 = vmatpush1.msra.mxu0 0.0
        %1280 = vmatprep.mubr.f32.mxu0 0.0
        %v1281 = vand.u32 %v681, 4294901760
        %1282 = vmatmul.mubr.f32.gmra.mrb[0].mxu0 %v1281
        %v1283 = vpop.f32.mrb[0].mxu0
        %v1284 = vadd.f32 %v1208, %v1283
        %v1285 = vpop.f32.mrb[0].mxu0
        %1286 = vdwg.mxu0
        %1287 = vmatprep.subr.mxu0 0.0
        %v1288 = vand.u32 %v1133, 4294901760
        %v1289 = vsub.f32 %v1133, %v1288
        %1290 = vmatpush1.msra.mxu0 %v1289
        %1291 = vmatprep.subr.mxu0 0.0
        %1292 = vmatpush1.msra.mxu0 0.0
        %1293 = vmatprep.subr.mxu0 0.0
        %1294 = vmatpush1.msra.mxu0 0.0
        %1295 = vmatprep.subr.mxu0 0.0
        %1296 = vmatpush1.msra.mxu0 0.0
        %1297 = vmatprep.subr.mxu0 0.0
        %1298 = vmatpush1.msra.mxu0 0.0
        %1299 = vmatprep.subr.mxu0 0.0
        %1300 = vmatpush1.msra.mxu0 0.0
        %1301 = vmatprep.subr.mxu0 0.0
        %1302 = vmatpush1.msra.mxu0 0.0
        %1303 = vmatprep.subr.mxu0 0.0
        %1304 = vmatpush1.msra.mxu0 0.0
        %1305 = vmatprep.subr.mxu0 0.0
        %1306 = vmatpush1.msra.mxu0 0.0
        %1307 = vmatprep.subr.mxu0 0.0
        %1308 = vmatpush1.msra.mxu0 0.0
        %1309 = vmatprep.subr.mxu0 0.0
        %1310 = vmatpush1.msra.mxu0 0.0
        %1311 = vmatprep.subr.mxu0 0.0
        %1312 = vmatpush1.msra.mxu0 0.0
        %1313 = vmatprep.subr.mxu0 0.0
        %1314 = vmatpush1.msra.mxu0 0.0
        %1315 = vmatprep.subr.mxu0 0.0
        %1316 = vmatpush1.msra.mxu0 0.0
        %1317 = vmatprep.subr.mxu0 0.0
        %1318 = vmatpush1.msra.mxu0 0.0
        %1319 = vmatprep.subr.mxu0 0.0
        %1320 = vmatpush1.msra.mxu0 0.0
        %1321 = vmatprep.subr.mxu0 0.0
        %1322 = vmatpush1.msra.mxu0 0.0
        %1323 = vmatprep.subr.mxu0 0.0
        %1324 = vmatpush1.msra.mxu0 0.0
        %1325 = vmatprep.subr.mxu0 0.0
        %1326 = vmatpush1.msra.mxu0 0.0
        %1327 = vmatprep.subr.mxu0 0.0
        %1328 = vmatpush1.msra.mxu0 0.0
        %1329 = vmatprep.subr.mxu0 0.0
        %1330 = vmatpush1.msra.mxu0 0.0
        %1331 = vmatprep.subr.mxu0 0.0
        %1332 = vmatpush1.msra.mxu0 0.0
        %1333 = vmatprep.subr.mxu0 0.0
        %1334 = vmatpush1.msra.mxu0 0.0
        %1335 = vmatprep.subr.mxu0 0.0
        %1336 = vmatpush1.msra.mxu0 0.0
        %1337 = vmatprep.subr.mxu0 0.0
        %1338 = vmatpush1.msra.mxu0 0.0
        %1339 = vmatprep.subr.mxu0 0.0
        %1340 = vmatpush1.msra.mxu0 0.0
        %1341 = vmatprep.subr.mxu0 0.0
        %1342 = vmatpush1.msra.mxu0 0.0
        %1343 = vmatprep.subr.mxu0 0.0
        %1344 = vmatpush1.msra.mxu0 0.0
        %1345 = vmatprep.subr.mxu0 0.0
        %1346 = vmatpush1.msra.mxu0 0.0
        %1347 = vmatprep.subr.mxu0 0.0
        %1348 = vmatpush1.msra.mxu0 0.0
        %1349 = vmatprep.subr.mxu0 0.0
        %1350 = vmatpush1.msra.mxu0 0.0
        %1351 = vmatprep.subr.mxu0 0.0
        %1352 = vmatpush1.msra.mxu0 0.0
        %1353 = vmatprep.mubr.f32.mxu0 0.0
        %v1354 = vand.u32 %v681, 4294901760
        %v1355 = vsub.f32 %v681, %v1354
        %1356 = vmatmul.mubr.f32.gmra.mrb[0].mxu0 %v1355
        %v1357 = vpop.f32.mrb[0].mxu0
        %v1358 = vadd.f32 %v1284, %v1357
        %v1359 = vpop.f32.mrb[0].mxu0
        %1360 = vdwg.mxu0
        %1361 = vmatprep.subr.mxu0 0.0
        %v1362 = vand.u32 %v1133, 4294901760
        %1363 = vmatpush1.msra.mxu0 %v1362
        %1364 = vmatprep.subr.mxu0 0.0
        %1365 = vmatpush1.msra.mxu0 0.0
        %1366 = vmatprep.subr.mxu0 0.0
        %1367 = vmatpush1.msra.mxu0 0.0
        %1368 = vmatprep.subr.mxu0 0.0
        %1369 = vmatpush1.msra.mxu0 0.0
        %1370 = vmatprep.subr.mxu0 0.0
        %1371 = vmatpush1.msra.mxu0 0.0
        %1372 = vmatprep.subr.mxu0 0.0
        %1373 = vmatpush1.msra.mxu0 0.0
        %1374 = vmatprep.subr.mxu0 0.0
        %1375 = vmatpush1.msra.mxu0 0.0
        %1376 = vmatprep.subr.mxu0 0.0
        %1377 = vmatpush1.msra.mxu0 0.0
        %1378 = vmatprep.subr.mxu0 0.0
        %1379 = vmatpush1.msra.mxu0 0.0
        %1380 = vmatprep.subr.mxu0 0.0
        %1381 = vmatpush1.msra.mxu0 0.0
        %1382 = vmatprep.subr.mxu0 0.0
        %1383 = vmatpush1.msra.mxu0 0.0
        %1384 = vmatprep.subr.mxu0 0.0
        %1385 = vmatpush1.msra.mxu0 0.0
        %1386 = vmatprep.subr.mxu0 0.0
        %1387 = vmatpush1.msra.mxu0 0.0
        %1388 = vmatprep.subr.mxu0 0.0
        %1389 = vmatpush1.msra.mxu0 0.0
        %1390 = vmatprep.subr.mxu0 0.0
        %1391 = vmatpush1.msra.mxu0 0.0
        %1392 = vmatprep.subr.mxu0 0.0
        %1393 = vmatpush1.msra.mxu0 0.0
        %1394 = vmatprep.subr.mxu0 0.0
        %1395 = vmatpush1.msra.mxu0 0.0
        %1396 = vmatprep.subr.mxu0 0.0
        %1397 = vmatpush1.msra.mxu0 0.0
        %1398 = vmatprep.subr.mxu0 0.0
        %1399 = vmatpush1.msra.mxu0 0.0
        %1400 = vmatprep.subr.mxu0 0.0
        %1401 = vmatpush1.msra.mxu0 0.0
        %1402 = vmatprep.subr.mxu0 0.0
        %1403 = vmatpush1.msra.mxu0 0.0
        %1404 = vmatprep.subr.mxu0 0.0
        %1405 = vmatpush1.msra.mxu0 0.0
        %1406 = vmatprep.subr.mxu0 0.0
        %1407 = vmatpush1.msra.mxu0 0.0
        %1408 = vmatprep.subr.mxu0 0.0
        %1409 = vmatpush1.msra.mxu0 0.0
        %1410 = vmatprep.subr.mxu0 0.0
        %1411 = vmatpush1.msra.mxu0 0.0
        %1412 = vmatprep.subr.mxu0 0.0
        %1413 = vmatpush1.msra.mxu0 0.0
        %1414 = vmatprep.subr.mxu0 0.0
        %1415 = vmatpush1.msra.mxu0 0.0
        %1416 = vmatprep.subr.mxu0 0.0
        %1417 = vmatpush1.msra.mxu0 0.0
        %1418 = vmatprep.subr.mxu0 0.0
        %1419 = vmatpush1.msra.mxu0 0.0
        %1420 = vmatprep.subr.mxu0 0.0
        %1421 = vmatpush1.msra.mxu0 0.0
        %1422 = vmatprep.subr.mxu0 0.0
        %1423 = vmatpush1.msra.mxu0 0.0
        %1424 = vmatprep.subr.mxu0 0.0
        %1425 = vmatpush1.msra.mxu0 0.0
        %1426 = vmatprep.mubr.f32.mxu0 0.0
        %v1427 = vand.u32 %v681, 4294901760
        %v1428 = vsub.f32 %v681, %v1427
        %v1429 = vand.u32 %v1428, 4294901760
        %1430 = vmatmul.mubr.f32.gmra.mrb[0].mxu0 %v1429
        %v1431 = vpop.f32.mrb[0].mxu0
        %v1432 = vadd.f32 %v1358, %v1431
        %v1433 = vpop.f32.mrb[0].mxu0
        %1434 = vdwg.mxu0
        %1435 = vmatprep.subr.mxu0 0.0
        %v1436 = vand.u32 %v1133, 4294901760
        %v1437 = vsub.f32 %v1133, %v1436
        %v1438 = vand.u32 %v1437, 4294901760
        %1439 = vmatpush1.msra.mxu0 %v1438
        %1440 = vmatprep.subr.mxu0 0.0
        %1441 = vmatpush1.msra.mxu0 0.0
        %1442 = vmatprep.subr.mxu0 0.0
        %1443 = vmatpush1.msra.mxu0 0.0
        %1444 = vmatprep.subr.mxu0 0.0
        %1445 = vmatpush1.msra.mxu0 0.0
        %1446 = vmatprep.subr.mxu0 0.0
        %1447 = vmatpush1.msra.mxu0 0.0
        %1448 = vmatprep.subr.mxu0 0.0
        %1449 = vmatpush1.msra.mxu0 0.0
        %1450 = vmatprep.subr.mxu0 0.0
        %1451 = vmatpush1.msra.mxu0 0.0
        %1452 = vmatprep.subr.mxu0 0.0
        %1453 = vmatpush1.msra.mxu0 0.0
        %1454 = vmatprep.subr.mxu0 0.0
        %1455 = vmatpush1.msra.mxu0 0.0
        %1456 = vmatprep.subr.mxu0 0.0
        %1457 = vmatpush1.msra.mxu0 0.0
        %1458 = vmatprep.subr.mxu0 0.0
        %1459 = vmatpush1.msra.mxu0 0.0
        %1460 = vmatprep.subr.mxu0 0.0
        %1461 = vmatpush1.msra.mxu0 0.0
        %1462 = vmatprep.subr.mxu0 0.0
        %1463 = vmatpush1.msra.mxu0 0.0
        %1464 = vmatprep.subr.mxu0 0.0
        %1465 = vmatpush1.msra.mxu0 0.0
        %1466 = vmatprep.subr.mxu0 0.0
        %1467 = vmatpush1.msra.mxu0 0.0
        %1468 = vmatprep.subr.mxu0 0.0
        %1469 = vmatpush1.msra.mxu0 0.0
        %1470 = vmatprep.subr.mxu0 0.0
        %1471 = vmatpush1.msra.mxu0 0.0
        %1472 = vmatprep.subr.mxu0 0.0
        %1473 = vmatpush1.msra.mxu0 0.0
        %1474 = vmatprep.subr.mxu0 0.0
        %1475 = vmatpush1.msra.mxu0 0.0
        %1476 = vmatprep.subr.mxu0 0.0
        %1477 = vmatpush1.msra.mxu0 0.0
        %1478 = vmatprep.subr.mxu0 0.0
        %1479 = vmatpush1.msra.mxu0 0.0
        %1480 = vmatprep.subr.mxu0 0.0
        %1481 = vmatpush1.msra.mxu0 0.0
        %1482 = vmatprep.subr.mxu0 0.0
        %1483 = vmatpush1.msra.mxu0 0.0
        %1484 = vmatprep.subr.mxu0 0.0
        %1485 = vmatpush1.msra.mxu0 0.0
        %1486 = vmatprep.subr.mxu0 0.0
        %1487 = vmatpush1.msra.mxu0 0.0
        %1488 = vmatprep.subr.mxu0 0.0
        %1489 = vmatpush1.msra.mxu0 0.0
        %1490 = vmatprep.subr.mxu0 0.0
        %1491 = vmatpush1.msra.mxu0 0.0
        %1492 = vmatprep.subr.mxu0 0.0
        %1493 = vmatpush1.msra.mxu0 0.0
        %1494 = vmatprep.subr.mxu0 0.0
        %1495 = vmatpush1.msra.mxu0 0.0
        %1496 = vmatprep.subr.mxu0 0.0
        %1497 = vmatpush1.msra.mxu0 0.0
        %1498 = vmatprep.subr.mxu0 0.0
        %1499 = vmatpush1.msra.mxu0 0.0
        %1500 = vmatprep.subr.mxu0 0.0
        %1501 = vmatpush1.msra.mxu0 0.0
        %1502 = vmatprep.mubr.f32.mxu0 0.0
        %v1503 = vand.u32 %v681, 4294901760
        %1504 = vmatmul.mubr.f32.gmra.mrb[0].mxu0 %v1503
        %v1505 = vpop.f32.mrb[0].mxu0
        %v1506 = vadd.f32 %v1432, %v1505
        %v1507 = vpop.f32.mrb[0].mxu0
        %1508 = vdwg.mxu0
        %1509 = vmatprep.subr.mxu0 0.0
        %v1510 = vand.u32 %v1133, 4294901760
        %1511 = vmatpush1.msra.mxu0 %v1510
        %1512 = vmatprep.subr.mxu0 0.0
        %1513 = vmatpush1.msra.mxu0 0.0
        %1514 = vmatprep.subr.mxu0 0.0
        %1515 = vmatpush1.msra.mxu0 0.0
        %1516 = vmatprep.subr.mxu0 0.0
        %1517 = vmatpush1.msra.mxu0 0.0
        %1518 = vmatprep.subr.mxu0 0.0
        %1519 = vmatpush1.msra.mxu0 0.0
        %1520 = vmatprep.subr.mxu0 0.0
        %1521 = vmatpush1.msra.mxu0 0.0
        %1522 = vmatprep.subr.mxu0 0.0
        %1523 = vmatpush1.msra.mxu0 0.0
        %1524 = vmatprep.subr.mxu0 0.0
        %1525 = vmatpush1.msra.mxu0 0.0
        %1526 = vmatprep.subr.mxu0 0.0
        %1527 = vmatpush1.msra.mxu0 0.0
        %1528 = vmatprep.subr.mxu0 0.0
        %1529 = vmatpush1.msra.mxu0 0.0
        %1530 = vmatprep.subr.mxu0 0.0
        %1531 = vmatpush1.msra.mxu0 0.0
        %1532 = vmatprep.subr.mxu0 0.0
        %1533 = vmatpush1.msra.mxu0 0.0
        %1534 = vmatprep.subr.mxu0 0.0
        %1535 = vmatpush1.msra.mxu0 0.0
        %1536 = vmatprep.subr.mxu0 0.0
        %1537 = vmatpush1.msra.mxu0 0.0
        %1538 = vmatprep.subr.mxu0 0.0
        %1539 = vmatpush1.msra.mxu0 0.0
        %1540 = vmatprep.subr.mxu0 0.0
        %1541 = vmatpush1.msra.mxu0 0.0
        %1542 = vmatprep.subr.mxu0 0.0
        %1543 = vmatpush1.msra.mxu0 0.0
        %1544 = vmatprep.subr.mxu0 0.0
        %1545 = vmatpush1.msra.mxu0 0.0
        %1546 = vmatprep.subr.mxu0 0.0
        %1547 = vmatpush1.msra.mxu0 0.0
        %1548 = vmatprep.subr.mxu0 0.0
        %1549 = vmatpush1.msra.mxu0 0.0
        %1550 = vmatprep.subr.mxu0 0.0
        %1551 = vmatpush1.msra.mxu0 0.0
        %1552 = vmatprep.subr.mxu0 0.0
        %1553 = vmatpush1.msra.mxu0 0.0
        %1554 = vmatprep.subr.mxu0 0.0
        %1555 = vmatpush1.msra.mxu0 0.0
        %1556 = vmatprep.subr.mxu0 0.0
        %1557 = vmatpush1.msra.mxu0 0.0
        %1558 = vmatprep.subr.mxu0 0.0
        %1559 = vmatpush1.msra.mxu0 0.0
        %1560 = vmatprep.subr.mxu0 0.0
        %1561 = vmatpush1.msra.mxu0 0.0
        %1562 = vmatprep.subr.mxu0 0.0
        %1563 = vmatpush1.msra.mxu0 0.0
        %1564 = vmatprep.subr.mxu0 0.0
        %1565 = vmatpush1.msra.mxu0 0.0
        %1566 = vmatprep.subr.mxu0 0.0
        %1567 = vmatpush1.msra.mxu0 0.0
        %1568 = vmatprep.subr.mxu0 0.0
        %1569 = vmatpush1.msra.mxu0 0.0
        %1570 = vmatprep.subr.mxu0 0.0
        %1571 = vmatpush1.msra.mxu0 0.0
        %1572 = vmatprep.subr.mxu0 0.0
        %1573 = vmatpush1.msra.mxu0 0.0
        %1574 = vmatprep.mubr.f32.mxu0 0.0
        %v1575 = vand.u32 %v681, 4294901760
        %1576 = vmatmul.mubr.f32.gmra.mrb[0].mxu0 %v1575
        %v1577 = vpop.f32.mrb[0].mxu0
        %v1578 = vadd.f32 %v1506, %v1577
        %v1579 = vpop.f32.mrb[0].mxu0
        %1580 = vdwg.mxu0
        %v1581 = vmul.f32 %v676, 256.0
        %v1583 = vsel %vm679, %v671, 0
        %1585 = vmatprep.subr.mxu0 0.0
        %v1586 = vand.u32 %v1133, 4294901760
        %1587 = vmatpush1.msra.mxu0 %v1586
        %1588 = vmatprep.subr.mxu0 0.0
        %1589 = vmatpush1.msra.mxu0 0.0
        %1590 = vmatprep.subr.mxu0 0.0
        %1591 = vmatpush1.msra.mxu0 0.0
        %1592 = vmatprep.subr.mxu0 0.0
        %1593 = vmatpush1.msra.mxu0 0.0
        %1594 = vmatprep.subr.mxu0 0.0
        %1595 = vmatpush1.msra.mxu0 0.0
        %1596 = vmatprep.subr.mxu0 0.0
        %1597 = vmatpush1.msra.mxu0 0.0
        %1598 = vmatprep.subr.mxu0 0.0
        %1599 = vmatpush1.msra.mxu0 0.0
        %1600 = vmatprep.subr.mxu0 0.0
        %1601 = vmatpush1.msra.mxu0 0.0
        %1602 = vmatprep.subr.mxu0 0.0
        %1603 = vmatpush1.msra.mxu0 0.0
        %1604 = vmatprep.subr.mxu0 0.0
        %1605 = vmatpush1.msra.mxu0 0.0
        %1606 = vmatprep.subr.mxu0 0.0
        %1607 = vmatpush1.msra.mxu0 0.0
        %1608 = vmatprep.subr.mxu0 0.0
        %1609 = vmatpush1.msra.mxu0 0.0
        %1610 = vmatprep.subr.mxu0 0.0
        %1611 = vmatpush1.msra.mxu0 0.0
        %1612 = vmatprep.subr.mxu0 0.0
        %1613 = vmatpush1.msra.mxu0 0.0
        %1614 = vmatprep.subr.mxu0 0.0
        %1615 = vmatpush1.msra.mxu0 0.0
        %1616 = vmatprep.subr.mxu0 0.0
        %1617 = vmatpush1.msra.mxu0 0.0
        %1618 = vmatprep.subr.mxu0 0.0
        %1619 = vmatpush1.msra.mxu0 0.0
        %1620 = vmatprep.subr.mxu0 0.0
        %1621 = vmatpush1.msra.mxu0 0.0
        %1622 = vmatprep.subr.mxu0 0.0
        %1623 = vmatpush1.msra.mxu0 0.0
        %1624 = vmatprep.subr.mxu0 0.0
        %1625 = vmatpush1.msra.mxu0 0.0
        %1626 = vmatprep.subr.mxu0 0.0
        %1627 = vmatpush1.msra.mxu0 0.0
        %1628 = vmatprep.subr.mxu0 0.0
        %1629 = vmatpush1.msra.mxu0 0.0
        %1630 = vmatprep.subr.mxu0 0.0
        %1631 = vmatpush1.msra.mxu0 0.0
        %1632 = vmatprep.subr.mxu0 0.0
        %1633 = vmatpush1.msra.mxu0 0.0
        %1634 = vmatprep.subr.mxu0 0.0
        %1635 = vmatpush1.msra.mxu0 0.0
        %1636 = vmatprep.subr.mxu0 0.0
        %1637 = vmatpush1.msra.mxu0 0.0
        %1638 = vmatprep.subr.mxu0 0.0
        %1639 = vmatpush1.msra.mxu0 0.0
        %1640 = vmatprep.subr.mxu0 0.0
        %1641 = vmatpush1.msra.mxu0 0.0
        %1642 = vmatprep.subr.mxu0 0.0
        %1643 = vmatpush1.msra.mxu0 0.0
        %1644 = vmatprep.subr.mxu0 0.0
        %1645 = vmatpush1.msra.mxu0 0.0
        %1646 = vmatprep.subr.mxu0 0.0
        %1647 = vmatpush1.msra.mxu0 0.0
        %1648 = vmatprep.subr.mxu0 0.0
        %1649 = vmatpush1.msra.mxu0 0.0
        %1650 = vmatprep.mubr.f32.mxu0 0.0
        %v1651 = vand.u32 %v1583, 4294901760
        %v1652 = vsub.f32 %v1583, %v1651
        %v1653 = vand.u32 %v1652, 4294901760
        %v1654 = vsub.f32 %v1652, %v1653
        %v1655 = vand.u32 %v1654, 4294901760
        %1656 = vmatmul.mubr.f32.gmra.mrb[0].mxu0 %v1655
        %v1657 = vpop.f32.mrb[0].mxu0
        %v1658 = vadd.f32 %v1581, %v1657
        %v1659 = vpop.f32.mrb[0].mxu0
        %1660 = vdwg.mxu0
        %1661 = vmatprep.subr.mxu0 0.0
        %v1662 = vand.u32 %v1133, 4294901760
        %v1663 = vsub.f32 %v1133, %v1662
        %v1664 = vand.u32 %v1663, 4294901760
        %v1665 = vsub.f32 %v1663, %v1664
        %v1666 = vand.u32 %v1665, 4294901760
        %1667 = vmatpush1.msra.mxu0 %v1666
        %1668 = vmatprep.subr.mxu0 0.0
        %1669 = vmatpush1.msra.mxu0 0.0
        %1670 = vmatprep.subr.mxu0 0.0
        %1671 = vmatpush1.msra.mxu0 0.0
        %1672 = vmatprep.subr.mxu0 0.0
        %1673 = vmatpush1.msra.mxu0 0.0
        %1674 = vmatprep.subr.mxu0 0.0
        %1675 = vmatpush1.msra.mxu0 0.0
        %1676 = vmatprep.subr.mxu0 0.0
        %1677 = vmatpush1.msra.mxu0 0.0
        %1678 = vmatprep.subr.mxu0 0.0
        %1679 = vmatpush1.msra.mxu0 0.0
        %1680 = vmatprep.subr.mxu0 0.0
        %1681 = vmatpush1.msra.mxu0 0.0
        %1682 = vmatprep.subr.mxu0 0.0
        %1683 = vmatpush1.msra.mxu0 0.0
        %1684 = vmatprep.subr.mxu0 0.0
        %1685 = vmatpush1.msra.mxu0 0.0
        %1686 = vmatprep.subr.mxu0 0.0
        %1687 = vmatpush1.msra.mxu0 0.0
        %1688 = vmatprep.subr.mxu0 0.0
        %1689 = vmatpush1.msra.mxu0 0.0
        %1690 = vmatprep.subr.mxu0 0.0
        %1691 = vmatpush1.msra.mxu0 0.0
        %1692 = vmatprep.subr.mxu0 0.0
        %1693 = vmatpush1.msra.mxu0 0.0
        %1694 = vmatprep.subr.mxu0 0.0
        %1695 = vmatpush1.msra.mxu0 0.0
        %1696 = vmatprep.subr.mxu0 0.0
        %1697 = vmatpush1.msra.mxu0 0.0
        %1698 = vmatprep.subr.mxu0 0.0
        %1699 = vmatpush1.msra.mxu0 0.0
        %1700 = vmatprep.subr.mxu0 0.0
        %1701 = vmatpush1.msra.mxu0 0.0
        %1702 = vmatprep.subr.mxu0 0.0
        %1703 = vmatpush1.msra.mxu0 0.0
        %1704 = vmatprep.subr.mxu0 0.0
        %1705 = vmatpush1.msra.mxu0 0.0
        %1706 = vmatprep.subr.mxu0 0.0
        %1707 = vmatpush1.msra.mxu0 0.0
        %1708 = vmatprep.subr.mxu0 0.0
        %1709 = vmatpush1.msra.mxu0 0.0
        %1710 = vmatprep.subr.mxu0 0.0
        %1711 = vmatpush1.msra.mxu0 0.0
        %1712 = vmatprep.subr.mxu0 0.0
        %1713 = vmatpush1.msra.mxu0 0.0
        %1714 = vmatprep.subr.mxu0 0.0
        %1715 = vmatpush1.msra.mxu0 0.0
        %1716 = vmatprep.subr.mxu0 0.0
        %1717 = vmatpush1.msra.mxu0 0.0
        %1718 = vmatprep.subr.mxu0 0.0
        %1719 = vmatpush1.msra.mxu0 0.0
        %1720 = vmatprep.subr.mxu0 0.0
        %1721 = vmatpush1.msra.mxu0 0.0
        %1722 = vmatprep.subr.mxu0 0.0
        %1723 = vmatpush1.msra.mxu0 0.0
        %1724 = vmatprep.subr.mxu0 0.0
        %1725 = vmatpush1.msra.mxu0 0.0
        %1726 = vmatprep.subr.mxu0 0.0
        %1727 = vmatpush1.msra.mxu0 0.0
        %1728 = vmatprep.subr.mxu0 0.0
        %1729 = vmatpush1.msra.mxu0 0.0
        %1730 = vmatprep.mubr.f32.mxu0 0.0
        %v1731 = vand.u32 %v1583, 4294901760
        %1732 = vmatmul.mubr.f32.gmra.mrb[0].mxu0 %v1731
        %v1733 = vpop.f32.mrb[0].mxu0
        %v1734 = vadd.f32 %v1658, %v1733
        %v1735 = vpop.f32.mrb[0].mxu0
        %1736 = vdwg.mxu0
        %1737 = vmatprep.subr.mxu0 0.0
        %v1738 = vand.u32 %v1133, 4294901760
        %v1739 = vsub.f32 %v1133, %v1738
        %1740 = vmatpush1.msra.mxu0 %v1739
        %1741 = vmatprep.subr.mxu0 0.0
        %1742 = vmatpush1.msra.mxu0 0.0
        %1743 = vmatprep.subr.mxu0 0.0
        %1744 = vmatpush1.msra.mxu0 0.0
        %1745 = vmatprep.subr.mxu0 0.0
        %1746 = vmatpush1.msra.mxu0 0.0
        %1747 = vmatprep.subr.mxu0 0.0
        %1748 = vmatpush1.msra.mxu0 0.0
        %1749 = vmatprep.subr.mxu0 0.0
        %1750 = vmatpush1.msra.mxu0 0.0
        %1751 = vmatprep.subr.mxu0 0.0
        %1752 = vmatpush1.msra.mxu0 0.0
        %1753 = vmatprep.subr.mxu0 0.0
        %1754 = vmatpush1.msra.mxu0 0.0
        %1755 = vmatprep.subr.mxu0 0.0
        %1756 = vmatpush1.msra.mxu0 0.0
        %1757 = vmatprep.subr.mxu0 0.0
        %1758 = vmatpush1.msra.mxu0 0.0
        %1759 = vmatprep.subr.mxu0 0.0
        %1760 = vmatpush1.msra.mxu0 0.0
        %1761 = vmatprep.subr.mxu0 0.0
        %1762 = vmatpush1.msra.mxu0 0.0
        %1763 = vmatprep.subr.mxu0 0.0
        %1764 = vmatpush1.msra.mxu0 0.0
        %1765 = vmatprep.subr.mxu0 0.0
        %1766 = vmatpush1.msra.mxu0 0.0
        %1767 = vmatprep.subr.mxu0 0.0
        %1768 = vmatpush1.msra.mxu0 0.0
        %1769 = vmatprep.subr.mxu0 0.0
        %1770 = vmatpush1.msra.mxu0 0.0
        %1771 = vmatprep.subr.mxu0 0.0
        %1772 = vmatpush1.msra.mxu0 0.0
        %1773 = vmatprep.subr.mxu0 0.0
        %1774 = vmatpush1.msra.mxu0 0.0
        %1775 = vmatprep.subr.mxu0 0.0
        %1776 = vmatpush1.msra.mxu0 0.0
        %1777 = vmatprep.subr.mxu0 0.0
        %1778 = vmatpush1.msra.mxu0 0.0
        %1779 = vmatprep.subr.mxu0 0.0
        %1780 = vmatpush1.msra.mxu0 0.0
        %1781 = vmatprep.subr.mxu0 0.0
        %1782 = vmatpush1.msra.mxu0 0.0
        %1783 = vmatprep.subr.mxu0 0.0
        %1784 = vmatpush1.msra.mxu0 0.0
        %1785 = vmatprep.subr.mxu0 0.0
        %1786 = vmatpush1.msra.mxu0 0.0
        %1787 = vmatprep.subr.mxu0 0.0
        %1788 = vmatpush1.msra.mxu0 0.0
        %1789 = vmatprep.subr.mxu0 0.0
        %1790 = vmatpush1.msra.mxu0 0.0
        %1791 = vmatprep.subr.mxu0 0.0
        %1792 = vmatpush1.msra.mxu0 0.0
        %1793 = vmatprep.subr.mxu0 0.0
        %1794 = vmatpush1.msra.mxu0 0.0
        %1795 = vmatprep.subr.mxu0 0.0
        %1796 = vmatpush1.msra.mxu0 0.0
        %1797 = vmatprep.subr.mxu0 0.0
        %1798 = vmatpush1.msra.mxu0 0.0
        %1799 = vmatprep.subr.mxu0 0.0
        %1800 = vmatpush1.msra.mxu0 0.0
        %1801 = vmatprep.subr.mxu0 0.0
        %1802 = vmatpush1.msra.mxu0 0.0
        %1803 = vmatprep.mubr.f32.mxu0 0.0
        %v1804 = vand.u32 %v1583, 4294901760
        %v1805 = vsub.f32 %v1583, %v1804
        %1806 = vmatmul.mubr.f32.gmra.mrb[0].mxu0 %v1805
        %v1807 = vpop.f32.mrb[0].mxu0
        %v1808 = vadd.f32 %v1734, %v1807
        %v1809 = vpop.f32.mrb[0].mxu0
        %1810 = vdwg.mxu0
        %1811 = vmatprep.subr.mxu0 0.0
        %v1812 = vand.u32 %v1133, 4294901760
        %1813 = vmatpush1.msra.mxu0 %v1812
        %1814 = vmatprep.subr.mxu0 0.0
        %1815 = vmatpush1.msra.mxu0 0.0
        %1816 = vmatprep.subr.mxu0 0.0
        %1817 = vmatpush1.msra.mxu0 0.0
        %1818 = vmatprep.subr.mxu0 0.0
        %1819 = vmatpush1.msra.mxu0 0.0
        %1820 = vmatprep.subr.mxu0 0.0
        %1821 = vmatpush1.msra.mxu0 0.0
        %1822 = vmatprep.subr.mxu0 0.0
        %1823 = vmatpush1.msra.mxu0 0.0
        %1824 = vmatprep.subr.mxu0 0.0
        %1825 = vmatpush1.msra.mxu0 0.0
        %1826 = vmatprep.subr.mxu0 0.0
        %1827 = vmatpush1.msra.mxu0 0.0
        %1828 = vmatprep.subr.mxu0 0.0
        %1829 = vmatpush1.msra.mxu0 0.0
        %1830 = vmatprep.subr.mxu0 0.0
        %1831 = vmatpush1.msra.mxu0 0.0
        %1832 = vmatprep.subr.mxu0 0.0
        %1833 = vmatpush1.msra.mxu0 0.0
        %1834 = vmatprep.subr.mxu0 0.0
        %1835 = vmatpush1.msra.mxu0 0.0
        %1836 = vmatprep.subr.mxu0 0.0
        %1837 = vmatpush1.msra.mxu0 0.0
        %1838 = vmatprep.subr.mxu0 0.0
        %1839 = vmatpush1.msra.mxu0 0.0
        %1840 = vmatprep.subr.mxu0 0.0
        %1841 = vmatpush1.msra.mxu0 0.0
        %1842 = vmatprep.subr.mxu0 0.0
        %1843 = vmatpush1.msra.mxu0 0.0
        %1844 = vmatprep.subr.mxu0 0.0
        %1845 = vmatpush1.msra.mxu0 0.0
        %1846 = vmatprep.subr.mxu0 0.0
        %1847 = vmatpush1.msra.mxu0 0.0
        %1848 = vmatprep.subr.mxu0 0.0
        %1849 = vmatpush1.msra.mxu0 0.0
        %1850 = vmatprep.subr.mxu0 0.0
        %1851 = vmatpush1.msra.mxu0 0.0
        %1852 = vmatprep.subr.mxu0 0.0
        %1853 = vmatpush1.msra.mxu0 0.0
        %1854 = vmatprep.subr.mxu0 0.0
        %1855 = vmatpush1.msra.mxu0 0.0
        %1856 = vmatprep.subr.mxu0 0.0
        %1857 = vmatpush1.msra.mxu0 0.0
        %1858 = vmatprep.subr.mxu0 0.0
        %1859 = vmatpush1.msra.mxu0 0.0
        %1860 = vmatprep.subr.mxu0 0.0
        %1861 = vmatpush1.msra.mxu0 0.0
        %1862 = vmatprep.subr.mxu0 0.0
        %1863 = vmatpush1.msra.mxu0 0.0
        %1864 = vmatprep.subr.mxu0 0.0
        %1865 = vmatpush1.msra.mxu0 0.0
        %1866 = vmatprep.subr.mxu0 0.0
        %1867 = vmatpush1.msra.mxu0 0.0
        %1868 = vmatprep.subr.mxu0 0.0
        %1869 = vmatpush1.msra.mxu0 0.0
        %1870 = vmatprep.subr.mxu0 0.0
        %1871 = vmatpush1.msra.mxu0 0.0
        %1872 = vmatprep.subr.mxu0 0.0
        %1873 = vmatpush1.msra.mxu0 0.0
        %1874 = vmatprep.subr.mxu0 0.0
        %1875 = vmatpush1.msra.mxu0 0.0
        %1876 = vmatprep.mubr.f32.mxu0 0.0
        %v1877 = vand.u32 %v1583, 4294901760
        %v1878 = vsub.f32 %v1583, %v1877
        %v1879 = vand.u32 %v1878, 4294901760
        %1880 = vmatmul.mubr.f32.gmra.mrb[0].mxu0 %v1879
        %v1881 = vpop.f32.mrb[0].mxu0
        %v1882 = vadd.f32 %v1808, %v1881
        %v1883 = vpop.f32.mrb[0].mxu0
        %1884 = vdwg.mxu0
        %1885 = vmatprep.subr.mxu0 0.0
        %v1886 = vand.u32 %v1133, 4294901760
        %v1887 = vsub.f32 %v1133, %v1886
        %v1888 = vand.u32 %v1887, 4294901760
        %1889 = vmatpush1.msra.mxu0 %v1888
        %1890 = vmatprep.subr.mxu0 0.0
        %1891 = vmatpush1.msra.mxu0 0.0
        %1892 = vmatprep.subr.mxu0 0.0
        %1893 = vmatpush1.msra.mxu0 0.0
        %1894 = vmatprep.subr.mxu0 0.0
        %1895 = vmatpush1.msra.mxu0 0.0
        %1896 = vmatprep.subr.mxu0 0.0
        %1897 = vmatpush1.msra.mxu0 0.0
        %1898 = vmatprep.subr.mxu0 0.0
        %1899 = vmatpush1.msra.mxu0 0.0
        %1900 = vmatprep.subr.mxu0 0.0
        %1901 = vmatpush1.msra.mxu0 0.0
        %1902 = vmatprep.subr.mxu0 0.0
        %1903 = vmatpush1.msra.mxu0 0.0
        %1904 = vmatprep.subr.mxu0 0.0
        %1905 = vmatpush1.msra.mxu0 0.0
        %1906 = vmatprep.subr.mxu0 0.0
        %1907 = vmatpush1.msra.mxu0 0.0
        %1908 = vmatprep.subr.mxu0 0.0
        %1909 = vmatpush1.msra.mxu0 0.0
        %1910 = vmatprep.subr.mxu0 0.0
        %1911 = vmatpush1.msra.mxu0 0.0
        %1912 = vmatprep.subr.mxu0 0.0
        %1913 = vmatpush1.msra.mxu0 0.0
        %1914 = vmatprep.subr.mxu0 0.0
        %1915 = vmatpush1.msra.mxu0 0.0
        %1916 = vmatprep.subr.mxu0 0.0
        %1917 = vmatpush1.msra.mxu0 0.0
        %1918 = vmatprep.subr.mxu0 0.0
        %1919 = vmatpush1.msra.mxu0 0.0
        %1920 = vmatprep.subr.mxu0 0.0
        %1921 = vmatpush1.msra.mxu0 0.0
        %1922 = vmatprep.subr.mxu0 0.0
        %1923 = vmatpush1.msra.mxu0 0.0
        %1924 = vmatprep.subr.mxu0 0.0
        %1925 = vmatpush1.msra.mxu0 0.0
        %1926 = vmatprep.subr.mxu0 0.0
        %1927 = vmatpush1.msra.mxu0 0.0
        %1928 = vmatprep.subr.mxu0 0.0
        %1929 = vmatpush1.msra.mxu0 0.0
        %1930 = vmatprep.subr.mxu0 0.0
        %1931 = vmatpush1.msra.mxu0 0.0
        %1932 = vmatprep.subr.mxu0 0.0
        %1933 = vmatpush1.msra.mxu0 0.0
        %1934 = vmatprep.subr.mxu0 0.0
        %1935 = vmatpush1.msra.mxu0 0.0
        %1936 = vmatprep.subr.mxu0 0.0
        %1937 = vmatpush1.msra.mxu0 0.0
        %1938 = vmatprep.subr.mxu0 0.0
        %1939 = vmatpush1.msra.mxu0 0.0
        %1940 = vmatprep.subr.mxu0 0.0
        %1941 = vmatpush1.msra.mxu0 0.0
        %1942 = vmatprep.subr.mxu0 0.0
        %1943 = vmatpush1.msra.mxu0 0.0
        %1944 = vmatprep.subr.mxu0 0.0
        %1945 = vmatpush1.msra.mxu0 0.0
        %1946 = vmatprep.subr.mxu0 0.0
        %1947 = vmatpush1.msra.mxu0 0.0
        %1948 = vmatprep.subr.mxu0 0.0
        %1949 = vmatpush1.msra.mxu0 0.0
        %1950 = vmatprep.subr.mxu0 0.0
        %1951 = vmatpush1.msra.mxu0 0.0
        %1952 = vmatprep.mubr.f32.mxu0 0.0
        %v1953 = vand.u32 %v1583, 4294901760
        %1954 = vmatmul.mubr.f32.gmra.mrb[0].mxu0 %v1953
        %v1955 = vpop.f32.mrb[0].mxu0
        %v1956 = vadd.f32 %v1882, %v1955
        %v1957 = vpop.f32.mrb[0].mxu0
        %1958 = vdwg.mxu0
        %1959 = vmatprep.subr.mxu0 0.0
        %v1960 = vand.u32 %v1133, 4294901760
        %1961 = vmatpush1.msra.mxu0 %v1960
        %1962 = vmatprep.subr.mxu0 0.0
        %1963 = vmatpush1.msra.mxu0 0.0
        %1964 = vmatprep.subr.mxu0 0.0
        %1965 = vmatpush1.msra.mxu0 0.0
        %1966 = vmatprep.subr.mxu0 0.0
        %1967 = vmatpush1.msra.mxu0 0.0
        %1968 = vmatprep.subr.mxu0 0.0
        %1969 = vmatpush1.msra.mxu0 0.0
        %1970 = vmatprep.subr.mxu0 0.0
        %1971 = vmatpush1.msra.mxu0 0.0
        %1972 = vmatprep.subr.mxu0 0.0
        %1973 = vmatpush1.msra.mxu0 0.0
        %1974 = vmatprep.subr.mxu0 0.0
        %1975 = vmatpush1.msra.mxu0 0.0
        %1976 = vmatprep.subr.mxu0 0.0
        %1977 = vmatpush1.msra.mxu0 0.0
        %1978 = vmatprep.subr.mxu0 0.0
        %1979 = vmatpush1.msra.mxu0 0.0
        %1980 = vmatprep.subr.mxu0 0.0
        %1981 = vmatpush1.msra.mxu0 0.0
        %1982 = vmatprep.subr.mxu0 0.0
        %1983 = vmatpush1.msra.mxu0 0.0
        %1984 = vmatprep.subr.mxu0 0.0
        %1985 = vmatpush1.msra.mxu0 0.0
        %1986 = vmatprep.subr.mxu0 0.0
        %1987 = vmatpush1.msra.mxu0 0.0
        %1988 = vmatprep.subr.mxu0 0.0
        %1989 = vmatpush1.msra.mxu0 0.0
        %1990 = vmatprep.subr.mxu0 0.0
        %1991 = vmatpush1.msra.mxu0 0.0
        %1992 = vmatprep.subr.mxu0 0.0
        %1993 = vmatpush1.msra.mxu0 0.0
        %1994 = vmatprep.subr.mxu0 0.0
        %1995 = vmatpush1.msra.mxu0 0.0
        %1996 = vmatprep.subr.mxu0 0.0
        %1997 = vmatpush1.msra.mxu0 0.0
        %1998 = vmatprep.subr.mxu0 0.0
        %1999 = vmatpush1.msra.mxu0 0.0
        %2000 = vmatprep.subr.mxu0 0.0
        %2001 = vmatpush1.msra.mxu0 0.0
        %2002 = vmatprep.subr.mxu0 0.0
        %2003 = vmatpush1.msra.mxu0 0.0
        %2004 = vmatprep.subr.mxu0 0.0
        %2005 = vmatpush1.msra.mxu0 0.0
        %2006 = vmatprep.subr.mxu0 0.0
        %2007 = vmatpush1.msra.mxu0 0.0
        %2008 = vmatprep.subr.mxu0 0.0
        %2009 = vmatpush1.msra.mxu0 0.0
        %2010 = vmatprep.subr.mxu0 0.0
        %2011 = vmatpush1.msra.mxu0 0.0
        %2012 = vmatprep.subr.mxu0 0.0
        %2013 = vmatpush1.msra.mxu0 0.0
        %2014 = vmatprep.subr.mxu0 0.0
        %2015 = vmatpush1.msra.mxu0 0.0
        %2016 = vmatprep.subr.mxu0 0.0
        %2017 = vmatpush1.msra.mxu0 0.0
        %2018 = vmatprep.subr.mxu0 0.0
        %2019 = vmatpush1.msra.mxu0 0.0
        %2020 = vmatprep.subr.mxu0 0.0
        %2021 = vmatpush1.msra.mxu0 0.0
        %2022 = vmatprep.subr.mxu0 0.0
        %2023 = vmatpush1.msra.mxu0 0.0
        %2024 = vmatprep.mubr.f32.mxu0 0.0
        %v2025 = vand.u32 %v1583, 4294901760
        %2026 = vmatmul.mubr.f32.gmra.mrb[0].mxu0 %v2025
        %v2027 = vpop.f32.mrb[0].mxu0
        %v2028 = vadd.f32 %v1956, %v2027
        %v2029 = vpop.f32.mrb[0].mxu0
        %2030 = vdwg.mxu0
        %vm2031 = vcmask 7168
        %v2033 = vsel %vm2031, %v1578, 0
        %v2036 = vsel %vm2031, %v676, 0
        %2038 = vmatprep.subr.mxu0 0.0
        %v2039 = vand.u32 %v2036, 4294901760
        %2040 = vmatpush1.xpose.msra.mxu0 %v2039
        %2041 = vmatprep.subr.mxu0 0.0
        %2042 = vmatpush1.xpose.msra.mxu0 0.0
        %2043 = vmatprep.subr.mxu0 0.0
        %2044 = vmatpush1.xpose.msra.mxu0 0.0
        %2045 = vmatprep.subr.mxu0 0.0
        %2046 = vmatpush1.xpose.msra.mxu0 0.0
        %2047 = vmatprep.subr.mxu0 0.0
        %2048 = vmatpush1.xpose.msra.mxu0 0.0
        %2049 = vmatprep.subr.mxu0 0.0
        %2050 = vmatpush1.xpose.msra.mxu0 0.0
        %2051 = vmatprep.subr.mxu0 0.0
        %2052 = vmatpush1.xpose.msra.mxu0 0.0
        %2053 = vmatprep.subr.mxu0 0.0
        %2054 = vmatpush1.xpose.msra.mxu0 0.0
        %2055 = vmatprep.subr.mxu0 0.0
        %2056 = vmatpush1.xpose.msra.mxu0 0.0
        %2057 = vmatprep.subr.mxu0 0.0
        %2058 = vmatpush1.xpose.msra.mxu0 0.0
        %2059 = vmatprep.subr.mxu0 0.0
        %2060 = vmatpush1.xpose.msra.mxu0 0.0
        %2061 = vmatprep.subr.mxu0 0.0
        %2062 = vmatpush1.xpose.msra.mxu0 0.0
        %2063 = vmatprep.subr.mxu0 0.0
        %2064 = vmatpush1.xpose.msra.mxu0 0.0
        %2065 = vmatprep.subr.mxu0 0.0
        %2066 = vmatpush1.xpose.msra.mxu0 0.0
        %2067 = vmatprep.subr.mxu0 0.0
        %2068 = vmatpush1.xpose.msra.mxu0 0.0
        %2069 = vmatprep.subr.mxu0 0.0
        %2070 = vmatpush1.xpose.msra.mxu0 0.0
        %2071 = vmatprep.subr.mxu0 0.0
        %2072 = vmatpush1.xpose.msra.mxu0 0.0
        %2073 = vmatprep.subr.mxu0 0.0
        %2074 = vmatpush1.xpose.msra.mxu0 0.0
        %2075 = vmatprep.subr.mxu0 0.0
        %2076 = vmatpush1.xpose.msra.mxu0 0.0
        %2077 = vmatprep.subr.mxu0 0.0
        %2078 = vmatpush1.xpose.msra.mxu0 0.0
        %2079 = vmatprep.subr.mxu0 0.0
        %2080 = vmatpush1.xpose.msra.mxu0 0.0
        %2081 = vmatprep.subr.mxu0 0.0
        %2082 = vmatpush1.xpose.msra.mxu0 0.0
        %2083 = vmatprep.subr.mxu0 0.0
        %2084 = vmatpush1.xpose.msra.mxu0 0.0
        %2085 = vmatprep.subr.mxu0 0.0
        %2086 = vmatpush1.xpose.msra.mxu0 0.0
        %2087 = vmatprep.subr.mxu0 0.0
        %2088 = vmatpush1.xpose.msra.mxu0 0.0
        %2089 = vmatprep.subr.mxu0 0.0
        %2090 = vmatpush1.xpose.msra.mxu0 0.0
        %2091 = vmatprep.subr.mxu0 0.0
        %2092 = vmatpush1.xpose.msra.mxu0 0.0
        %2093 = vmatprep.subr.mxu0 0.0
        %2094 = vmatpush1.xpose.msra.mxu0 0.0
        %2095 = vmatprep.subr.mxu0 0.0
        %2096 = vmatpush1.xpose.msra.mxu0 0.0
        %2097 = vmatprep.subr.mxu0 0.0
        %2098 = vmatpush1.xpose.msra.mxu0 0.0
        %2099 = vmatprep.subr.mxu0 0.0
        %2100 = vmatpush1.xpose.msra.mxu0 0.0
        %2101 = vmatprep.subr.mxu0 0.0
        %2102 = vmatpush1.xpose.msra.mxu0 0.0
        %2103 = vmatprep.mubr.f32.mxu0 0.0
        %v2104 = vand.u32 %v2033, 4294901760
        %v2105 = vsub.f32 %v2033, %v2104
        %v2106 = vand.u32 %v2105, 4294901760
        %v2107 = vsub.f32 %v2105, %v2106
        %v2108 = vand.u32 %v2107, 4294901760
        %2109 = vmatmul.mubr.f32.gmra.mrb[0].mxu0 %v2108
        %v2110 = vpop.f32.mrb[0].mxu0
        %v2111 = vadd.f32 0.0, %v2110
        %v2112 = vpop.f32.mrb[0].mxu0
        %2113 = vdwg.mxu0
        %2114 = vmatprep.subr.mxu0 0.0
        %v2115 = vand.u32 %v2036, 4294901760
        %v2116 = vsub.f32 %v2036, %v2115
        %v2117 = vand.u32 %v2116, 4294901760
        %v2118 = vsub.f32 %v2116, %v2117
        %v2119 = vand.u32 %v2118, 4294901760
        %2120 = vmatpush1.xpose.msra.mxu0 %v2119
        %2121 = vmatprep.subr.mxu0 0.0
        %2122 = vmatpush1.xpose.msra.mxu0 0.0
        %2123 = vmatprep.subr.mxu0 0.0
        %2124 = vmatpush1.xpose.msra.mxu0 0.0
        %2125 = vmatprep.subr.mxu0 0.0
        %2126 = vmatpush1.xpose.msra.mxu0 0.0
        %2127 = vmatprep.subr.mxu0 0.0
        %2128 = vmatpush1.xpose.msra.mxu0 0.0
        %2129 = vmatprep.subr.mxu0 0.0
        %2130 = vmatpush1.xpose.msra.mxu0 0.0
        %2131 = vmatprep.subr.mxu0 0.0
        %2132 = vmatpush1.xpose.msra.mxu0 0.0
        %2133 = vmatprep.subr.mxu0 0.0
        %2134 = vmatpush1.xpose.msra.mxu0 0.0
        %2135 = vmatprep.subr.mxu0 0.0
        %2136 = vmatpush1.xpose.msra.mxu0 0.0
        %2137 = vmatprep.subr.mxu0 0.0
        %2138 = vmatpush1.xpose.msra.mxu0 0.0
        %2139 = vmatprep.subr.mxu0 0.0
        %2140 = vmatpush1.xpose.msra.mxu0 0.0
        %2141 = vmatprep.subr.mxu0 0.0
        %2142 = vmatpush1.xpose.msra.mxu0 0.0
        %2143 = vmatprep.subr.mxu0 0.0
        %2144 = vmatpush1.xpose.msra.mxu0 0.0
        %2145 = vmatprep.subr.mxu0 0.0
        %2146 = vmatpush1.xpose.msra.mxu0 0.0
        %2147 = vmatprep.subr.mxu0 0.0
        %2148 = vmatpush1.xpose.msra.mxu0 0.0
        %2149 = vmatprep.subr.mxu0 0.0
        %2150 = vmatpush1.xpose.msra.mxu0 0.0
        %2151 = vmatprep.subr.mxu0 0.0
        %2152 = vmatpush1.xpose.msra.mxu0 0.0
        %2153 = vmatprep.subr.mxu0 0.0
        %2154 = vmatpush1.xpose.msra.mxu0 0.0
        %2155 = vmatprep.subr.mxu0 0.0
        %2156 = vmatpush1.xpose.msra.mxu0 0.0
        %2157 = vmatprep.subr.mxu0 0.0
        %2158 = vmatpush1.xpose.msra.mxu0 0.0
        %2159 = vmatprep.subr.mxu0 0.0
        %2160 = vmatpush1.xpose.msra.mxu0 0.0
        %2161 = vmatprep.subr.mxu0 0.0
        %2162 = vmatpush1.xpose.msra.mxu0 0.0
        %2163 = vmatprep.subr.mxu0 0.0
        %2164 = vmatpush1.xpose.msra.mxu0 0.0
        %2165 = vmatprep.subr.mxu0 0.0
        %2166 = vmatpush1.xpose.msra.mxu0 0.0
        %2167 = vmatprep.subr.mxu0 0.0
        %2168 = vmatpush1.xpose.msra.mxu0 0.0
        %2169 = vmatprep.subr.mxu0 0.0
        %2170 = vmatpush1.xpose.msra.mxu0 0.0
        %2171 = vmatprep.subr.mxu0 0.0
        %2172 = vmatpush1.xpose.msra.mxu0 0.0
        %2173 = vmatprep.subr.mxu0 0.0
        %2174 = vmatpush1.xpose.msra.mxu0 0.0
        %2175 = vmatprep.subr.mxu0 0.0
        %2176 = vmatpush1.xpose.msra.mxu0 0.0
        %2177 = vmatprep.subr.mxu0 0.0
        %2178 = vmatpush1.xpose.msra.mxu0 0.0
        %2179 = vmatprep.subr.mxu0 0.0
        %2180 = vmatpush1.xpose.msra.mxu0 0.0
        %2181 = vmatprep.subr.mxu0 0.0
        %2182 = vmatpush1.xpose.msra.mxu0 0.0
        %2183 = vmatprep.mubr.f32.mxu0 0.0
        %v2184 = vand.u32 %v2033, 4294901760
        %2185 = vmatmul.mubr.f32.gmra.mrb[0].mxu0 %v2184
        %v2186 = vpop.f32.mrb[0].mxu0
        %v2187 = vadd.f32 %v2111, %v2186
        %v2188 = vpop.f32.mrb[0].mxu0
        %2189 = vdwg.mxu0
        %2190 = vmatprep.subr.mxu0 0.0
        %v2191 = vand.u32 %v2036, 4294901760
        %v2192 = vsub.f32 %v2036, %v2191
        %2193 = vmatpush1.xpose.msra.mxu0 %v2192
        %2194 = vmatprep.subr.mxu0 0.0
        %2195 = vmatpush1.xpose.msra.mxu0 0.0
        %2196 = vmatprep.subr.mxu0 0.0
        %2197 = vmatpush1.xpose.msra.mxu0 0.0
        %2198 = vmatprep.subr.mxu0 0.0
        %2199 = vmatpush1.xpose.msra.mxu0 0.0
        %2200 = vmatprep.subr.mxu0 0.0
        %2201 = vmatpush1.xpose.msra.mxu0 0.0
        %2202 = vmatprep.subr.mxu0 0.0
        %2203 = vmatpush1.xpose.msra.mxu0 0.0
        %2204 = vmatprep.subr.mxu0 0.0
        %2205 = vmatpush1.xpose.msra.mxu0 0.0
        %2206 = vmatprep.subr.mxu0 0.0
        %2207 = vmatpush1.xpose.msra.mxu0 0.0
        %2208 = vmatprep.subr.mxu0 0.0
        %2209 = vmatpush1.xpose.msra.mxu0 0.0
        %2210 = vmatprep.subr.mxu0 0.0
        %2211 = vmatpush1.xpose.msra.mxu0 0.0
        %2212 = vmatprep.subr.mxu0 0.0
        %2213 = vmatpush1.xpose.msra.mxu0 0.0
        %2214 = vmatprep.subr.mxu0 0.0
        %2215 = vmatpush1.xpose.msra.mxu0 0.0
        %2216 = vmatprep.subr.mxu0 0.0
        %2217 = vmatpush1.xpose.msra.mxu0 0.0
        %2218 = vmatprep.subr.mxu0 0.0
        %2219 = vmatpush1.xpose.msra.mxu0 0.0
        %2220 = vmatprep.subr.mxu0 0.0
        %2221 = vmatpush1.xpose.msra.mxu0 0.0
        %2222 = vmatprep.subr.mxu0 0.0
        %2223 = vmatpush1.xpose.msra.mxu0 0.0
        %2224 = vmatprep.subr.mxu0 0.0
        %2225 = vmatpush1.xpose.msra.mxu0 0.0
        %2226 = vmatprep.subr.mxu0 0.0
        %2227 = vmatpush1.xpose.msra.mxu0 0.0
        %2228 = vmatprep.subr.mxu0 0.0
        %2229 = vmatpush1.xpose.msra.mxu0 0.0
        %2230 = vmatprep.subr.mxu0 0.0
        %2231 = vmatpush1.xpose.msra.mxu0 0.0
        %2232 = vmatprep.subr.mxu0 0.0
        %2233 = vmatpush1.xpose.msra.mxu0 0.0
        %2234 = vmatprep.subr.mxu0 0.0
        %2235 = vmatpush1.xpose.msra.mxu0 0.0
        %2236 = vmatprep.subr.mxu0 0.0
        %2237 = vmatpush1.xpose.msra.mxu0 0.0
        %2238 = vmatprep.subr.mxu0 0.0
        %2239 = vmatpush1.xpose.msra.mxu0 0.0
        %2240 = vmatprep.subr.mxu0 0.0
        %2241 = vmatpush1.xpose.msra.mxu0 0.0
        %2242 = vmatprep.subr.mxu0 0.0
        %2243 = vmatpush1.xpose.msra.mxu0 0.0
        %2244 = vmatprep.subr.mxu0 0.0
        %2245 = vmatpush1.xpose.msra.mxu0 0.0
        %2246 = vmatprep.subr.mxu0 0.0
        %2247 = vmatpush1.xpose.msra.mxu0 0.0
        %2248 = vmatprep.subr.mxu0 0.0
        %2249 = vmatpush1.xpose.msra.mxu0 0.0
        %2250 = vmatprep.subr.mxu0 0.0
        %2251 = vmatpush1.xpose.msra.mxu0 0.0
        %2252 = vmatprep.subr.mxu0 0.0
        %2253 = vmatpush1.xpose.msra.mxu0 0.0
        %2254 = vmatprep.subr.mxu0 0.0
        %2255 = vmatpush1.xpose.msra.mxu0 0.0
        %2256 = vmatprep.mubr.f32.mxu0 0.0
        %v2257 = vand.u32 %v2033, 4294901760
        %v2258 = vsub.f32 %v2033, %v2257
        %2259 = vmatmul.mubr.f32.gmra.mrb[0].mxu0 %v2258
        %v2260 = vpop.f32.mrb[0].mxu0
        %v2261 = vadd.f32 %v2187, %v2260
        %v2262 = vpop.f32.mrb[0].mxu0
        %2263 = vdwg.mxu0
        %2264 = vmatprep.subr.mxu0 0.0
        %v2265 = vand.u32 %v2036, 4294901760
        %2266 = vmatpush1.xpose.msra.mxu0 %v2265
        %2267 = vmatprep.subr.mxu0 0.0
        %2268 = vmatpush1.xpose.msra.mxu0 0.0
        %2269 = vmatprep.subr.mxu0 0.0
        %2270 = vmatpush1.xpose.msra.mxu0 0.0
        %2271 = vmatprep.subr.mxu0 0.0
        %2272 = vmatpush1.xpose.msra.mxu0 0.0
        %2273 = vmatprep.subr.mxu0 0.0
        %2274 = vmatpush1.xpose.msra.mxu0 0.0
        %2275 = vmatprep.subr.mxu0 0.0
        %2276 = vmatpush1.xpose.msra.mxu0 0.0
        %2277 = vmatprep.subr.mxu0 0.0
        %2278 = vmatpush1.xpose.msra.mxu0 0.0
        %2279 = vmatprep.subr.mxu0 0.0
        %2280 = vmatpush1.xpose.msra.mxu0 0.0
        %2281 = vmatprep.subr.mxu0 0.0
        %2282 = vmatpush1.xpose.msra.mxu0 0.0
        %2283 = vmatprep.subr.mxu0 0.0
        %2284 = vmatpush1.xpose.msra.mxu0 0.0
        %2285 = vmatprep.subr.mxu0 0.0
        %2286 = vmatpush1.xpose.msra.mxu0 0.0
        %2287 = vmatprep.subr.mxu0 0.0
        %2288 = vmatpush1.xpose.msra.mxu0 0.0
        %2289 = vmatprep.subr.mxu0 0.0
        %2290 = vmatpush1.xpose.msra.mxu0 0.0
        %2291 = vmatprep.subr.mxu0 0.0
        %2292 = vmatpush1.xpose.msra.mxu0 0.0
        %2293 = vmatprep.subr.mxu0 0.0
        %2294 = vmatpush1.xpose.msra.mxu0 0.0
        %2295 = vmatprep.subr.mxu0 0.0
        %2296 = vmatpush1.xpose.msra.mxu0 0.0
        %2297 = vmatprep.subr.mxu0 0.0
        %2298 = vmatpush1.xpose.msra.mxu0 0.0
        %2299 = vmatprep.subr.mxu0 0.0
        %2300 = vmatpush1.xpose.msra.mxu0 0.0
        %2301 = vmatprep.subr.mxu0 0.0
        %2302 = vmatpush1.xpose.msra.mxu0 0.0
        %2303 = vmatprep.subr.mxu0 0.0
        %2304 = vmatpush1.xpose.msra.mxu0 0.0
        %2305 = vmatprep.subr.mxu0 0.0
        %2306 = vmatpush1.xpose.msra.mxu0 0.0
        %2307 = vmatprep.subr.mxu0 0.0
        %2308 = vmatpush1.xpose.msra.mxu0 0.0
        %2309 = vmatprep.subr.mxu0 0.0
        %2310 = vmatpush1.xpose.msra.mxu0 0.0
        %2311 = vmatprep.subr.mxu0 0.0
        %2312 = vmatpush1.xpose.msra.mxu0 0.0
        %2313 = vmatprep.subr.mxu0 0.0
        %2314 = vmatpush1.xpose.msra.mxu0 0.0
        %2315 = vmatprep.subr.mxu0 0.0
        %2316 = vmatpush1.xpose.msra.mxu0 0.0
        %2317 = vmatprep.subr.mxu0 0.0
        %2318 = vmatpush1.xpose.msra.mxu0 0.0
        %2319 = vmatprep.subr.mxu0 0.0
        %2320 = vmatpush1.xpose.msra.mxu0 0.0
        %2321 = vmatprep.subr.mxu0 0.0
        %2322 = vmatpush1.xpose.msra.mxu0 0.0
        %2323 = vmatprep.subr.mxu0 0.0
        %2324 = vmatpush1.xpose.msra.mxu0 0.0
        %2325 = vmatprep.subr.mxu0 0.0
        %2326 = vmatpush1.xpose.msra.mxu0 0.0
        %2327 = vmatprep.subr.mxu0 0.0
        %2328 = vmatpush1.xpose.msra.mxu0 0.0
        %2329 = vmatprep.mubr.f32.mxu0 0.0
        %v2330 = vand.u32 %v2033, 4294901760
        %v2331 = vsub.f32 %v2033, %v2330
        %v2332 = vand.u32 %v2331, 4294901760
        %2333 = vmatmul.mubr.f32.gmra.mrb[0].mxu0 %v2332
        %v2334 = vpop.f32.mrb[0].mxu0
        %v2335 = vadd.f32 %v2261, %v2334
        %v2336 = vpop.f32.mrb[0].mxu0
        %2337 = vdwg.mxu0
        %2338 = vmatprep.subr.mxu0 0.0
        %v2339 = vand.u32 %v2036, 4294901760
        %v2340 = vsub.f32 %v2036, %v2339
        %v2341 = vand.u32 %v2340, 4294901760
        %2342 = vmatpush1.xpose.msra.mxu0 %v2341
        %2343 = vmatprep.subr.mxu0 0.0
        %2344 = vmatpush1.xpose.msra.mxu0 0.0
        %2345 = vmatprep.subr.mxu0 0.0
        %2346 = vmatpush1.xpose.msra.mxu0 0.0
        %2347 = vmatprep.subr.mxu0 0.0
        %2348 = vmatpush1.xpose.msra.mxu0 0.0
        %2349 = vmatprep.subr.mxu0 0.0
        %2350 = vmatpush1.xpose.msra.mxu0 0.0
        %2351 = vmatprep.subr.mxu0 0.0
        %2352 = vmatpush1.xpose.msra.mxu0 0.0
        %2353 = vmatprep.subr.mxu0 0.0
        %2354 = vmatpush1.xpose.msra.mxu0 0.0
        %2355 = vmatprep.subr.mxu0 0.0
        %2356 = vmatpush1.xpose.msra.mxu0 0.0
        %2357 = vmatprep.subr.mxu0 0.0
        %2358 = vmatpush1.xpose.msra.mxu0 0.0
        %2359 = vmatprep.subr.mxu0 0.0
        %2360 = vmatpush1.xpose.msra.mxu0 0.0
        %2361 = vmatprep.subr.mxu0 0.0
        %2362 = vmatpush1.xpose.msra.mxu0 0.0
        %2363 = vmatprep.subr.mxu0 0.0
        %2364 = vmatpush1.xpose.msra.mxu0 0.0
        %2365 = vmatprep.subr.mxu0 0.0
        %2366 = vmatpush1.xpose.msra.mxu0 0.0
        %2367 = vmatprep.subr.mxu0 0.0
        %2368 = vmatpush1.xpose.msra.mxu0 0.0
        %2369 = vmatprep.subr.mxu0 0.0
        %2370 = vmatpush1.xpose.msra.mxu0 0.0
        %2371 = vmatprep.subr.mxu0 0.0
        %2372 = vmatpush1.xpose.msra.mxu0 0.0
        %2373 = vmatprep.subr.mxu0 0.0
        %2374 = vmatpush1.xpose.msra.mxu0 0.0
        %2375 = vmatprep.subr.mxu0 0.0
        %2376 = vmatpush1.xpose.msra.mxu0 0.0
        %2377 = vmatprep.subr.mxu0 0.0
        %2378 = vmatpush1.xpose.msra.mxu0 0.0
        %2379 = vmatprep.subr.mxu0 0.0
        %2380 = vmatpush1.xpose.msra.mxu0 0.0
        %2381 = vmatprep.subr.mxu0 0.0
        %2382 = vmatpush1.xpose.msra.mxu0 0.0
        %2383 = vmatprep.subr.mxu0 0.0
        %2384 = vmatpush1.xpose.msra.mxu0 0.0
        %2385 = vmatprep.subr.mxu0 0.0
        %2386 = vmatpush1.xpose.msra.mxu0 0.0
        %2387 = vmatprep.subr.mxu0 0.0
        %2388 = vmatpush1.xpose.msra.mxu0 0.0
        %2389 = vmatprep.subr.mxu0 0.0
        %2390 = vmatpush1.xpose.msra.mxu0 0.0
        %2391 = vmatprep.subr.mxu0 0.0
        %2392 = vmatpush1.xpose.msra.mxu0 0.0
        %2393 = vmatprep.subr.mxu0 0.0
        %2394 = vmatpush1.xpose.msra.mxu0 0.0
        %2395 = vmatprep.subr.mxu0 0.0
        %2396 = vmatpush1.xpose.msra.mxu0 0.0
        %2397 = vmatprep.subr.mxu0 0.0
        %2398 = vmatpush1.xpose.msra.mxu0 0.0
        %2399 = vmatprep.subr.mxu0 0.0
        %2400 = vmatpush1.xpose.msra.mxu0 0.0
        %2401 = vmatprep.subr.mxu0 0.0
        %2402 = vmatpush1.xpose.msra.mxu0 0.0
        %2403 = vmatprep.subr.mxu0 0.0
        %2404 = vmatpush1.xpose.msra.mxu0 0.0
        %2405 = vmatprep.mubr.f32.mxu0 0.0
        %v2406 = vand.u32 %v2033, 4294901760
        %2407 = vmatmul.mubr.f32.gmra.mrb[0].mxu0 %v2406
        %v2408 = vpop.f32.mrb[0].mxu0
        %v2409 = vadd.f32 %v2335, %v2408
        %v2410 = vpop.f32.mrb[0].mxu0
        %2411 = vdwg.mxu0
        %2412 = vmatprep.subr.mxu0 0.0
        %v2413 = vand.u32 %v2036, 4294901760
        %2414 = vmatpush1.xpose.msra.mxu0 %v2413
        %2415 = vmatprep.subr.mxu0 0.0
        %2416 = vmatpush1.xpose.msra.mxu0 0.0
        %2417 = vmatprep.subr.mxu0 0.0
        %2418 = vmatpush1.xpose.msra.mxu0 0.0
        %2419 = vmatprep.subr.mxu0 0.0
        %2420 = vmatpush1.xpose.msra.mxu0 0.0
        %2421 = vmatprep.subr.mxu0 0.0
        %2422 = vmatpush1.xpose.msra.mxu0 0.0
        %2423 = vmatprep.subr.mxu0 0.0
        %2424 = vmatpush1.xpose.msra.mxu0 0.0
        %2425 = vmatprep.subr.mxu0 0.0
        %2426 = vmatpush1.xpose.msra.mxu0 0.0
        %2427 = vmatprep.subr.mxu0 0.0
        %2428 = vmatpush1.xpose.msra.mxu0 0.0
        %2429 = vmatprep.subr.mxu0 0.0
        %2430 = vmatpush1.xpose.msra.mxu0 0.0
        %2431 = vmatprep.subr.mxu0 0.0
        %2432 = vmatpush1.xpose.msra.mxu0 0.0
        %2433 = vmatprep.subr.mxu0 0.0
        %2434 = vmatpush1.xpose.msra.mxu0 0.0
        %2435 = vmatprep.subr.mxu0 0.0
        %2436 = vmatpush1.xpose.msra.mxu0 0.0
        %2437 = vmatprep.subr.mxu0 0.0
        %2438 = vmatpush1.xpose.msra.mxu0 0.0
        %2439 = vmatprep.subr.mxu0 0.0
        %2440 = vmatpush1.xpose.msra.mxu0 0.0
        %2441 = vmatprep.subr.mxu0 0.0
        %2442 = vmatpush1.xpose.msra.mxu0 0.0
        %2443 = vmatprep.subr.mxu0 0.0
        %2444 = vmatpush1.xpose.msra.mxu0 0.0
        %2445 = vmatprep.subr.mxu0 0.0
        %2446 = vmatpush1.xpose.msra.mxu0 0.0
        %2447 = vmatprep.subr.mxu0 0.0
        %2448 = vmatpush1.xpose.msra.mxu0 0.0
        %2449 = vmatprep.subr.mxu0 0.0
        %2450 = vmatpush1.xpose.msra.mxu0 0.0
        %2451 = vmatprep.subr.mxu0 0.0
        %2452 = vmatpush1.xpose.msra.mxu0 0.0
        %2453 = vmatprep.subr.mxu0 0.0
        %2454 = vmatpush1.xpose.msra.mxu0 0.0
        %2455 = vmatprep.subr.mxu0 0.0
        %2456 = vmatpush1.xpose.msra.mxu0 0.0
        %2457 = vmatprep.subr.mxu0 0.0
        %2458 = vmatpush1.xpose.msra.mxu0 0.0
        %2459 = vmatprep.subr.mxu0 0.0
        %2460 = vmatpush1.xpose.msra.mxu0 0.0
        %2461 = vmatprep.subr.mxu0 0.0
        %2462 = vmatpush1.xpose.msra.mxu0 0.0
        %2463 = vmatprep.subr.mxu0 0.0
        %2464 = vmatpush1.xpose.msra.mxu0 0.0
        %2465 = vmatprep.subr.mxu0 0.0
        %2466 = vmatpush1.xpose.msra.mxu0 0.0
        %2467 = vmatprep.subr.mxu0 0.0
        %2468 = vmatpush1.xpose.msra.mxu0 0.0
        %2469 = vmatprep.subr.mxu0 0.0
        %2470 = vmatpush1.xpose.msra.mxu0 0.0
        %2471 = vmatprep.subr.mxu0 0.0
        %2472 = vmatpush1.xpose.msra.mxu0 0.0
        %2473 = vmatprep.subr.mxu0 0.0
        %2474 = vmatpush1.xpose.msra.mxu0 0.0
        %2475 = vmatprep.subr.mxu0 0.0
        %2476 = vmatpush1.xpose.msra.mxu0 0.0
        %2477 = vmatprep.mubr.f32.mxu0 0.0
        %v2478 = vand.u32 %v2033, 4294901760
        %2479 = vmatmul.mubr.f32.gmra.mrb[0].mxu0 %v2478
        %v2480 = vpop.f32.mrb[0].mxu0
        %v2481 = vadd.f32 %v2409, %v2480
        %v2482 = vpop.f32.mrb[0].mxu0
        %2483 = vdwg.mxu0
        %v2485 = vsel %vm679, %v1129, 0
        %2487 = vmatprep.subr.mxu0 0.0
        %v2488 = vand.u32 %v1583, 4294901760
        %2489 = vmatpush1.xpose.msra.mxu0 %v2488
        %2490 = vmatprep.subr.mxu0 0.0
        %2491 = vmatpush1.xpose.msra.mxu0 0.0
        %2492 = vmatprep.subr.mxu0 0.0
        %2493 = vmatpush1.xpose.msra.mxu0 0.0
        %2494 = vmatprep.subr.mxu0 0.0
        %2495 = vmatpush1.xpose.msra.mxu0 0.0
        %2496 = vmatprep.subr.mxu0 0.0
        %2497 = vmatpush1.xpose.msra.mxu0 0.0
        %2498 = vmatprep.subr.mxu0 0.0
        %2499 = vmatpush1.xpose.msra.mxu0 0.0
        %2500 = vmatprep.subr.mxu0 0.0
        %2501 = vmatpush1.xpose.msra.mxu0 0.0
        %2502 = vmatprep.subr.mxu0 0.0
        %2503 = vmatpush1.xpose.msra.mxu0 0.0
        %2504 = vmatprep.subr.mxu0 0.0
        %2505 = vmatpush1.xpose.msra.mxu0 0.0
        %2506 = vmatprep.subr.mxu0 0.0
        %2507 = vmatpush1.xpose.msra.mxu0 0.0
        %2508 = vmatprep.subr.mxu0 0.0
        %2509 = vmatpush1.xpose.msra.mxu0 0.0
        %2510 = vmatprep.subr.mxu0 0.0
        %2511 = vmatpush1.xpose.msra.mxu0 0.0
        %2512 = vmatprep.subr.mxu0 0.0
        %2513 = vmatpush1.xpose.msra.mxu0 0.0
        %2514 = vmatprep.subr.mxu0 0.0
        %2515 = vmatpush1.xpose.msra.mxu0 0.0
        %2516 = vmatprep.subr.mxu0 0.0
        %2517 = vmatpush1.xpose.msra.mxu0 0.0
        %2518 = vmatprep.subr.mxu0 0.0
        %2519 = vmatpush1.xpose.msra.mxu0 0.0
        %2520 = vmatprep.subr.mxu0 0.0
        %2521 = vmatpush1.xpose.msra.mxu0 0.0
        %2522 = vmatprep.subr.mxu0 0.0
        %2523 = vmatpush1.xpose.msra.mxu0 0.0
        %2524 = vmatprep.subr.mxu0 0.0
        %2525 = vmatpush1.xpose.msra.mxu0 0.0
        %2526 = vmatprep.subr.mxu0 0.0
        %2527 = vmatpush1.xpose.msra.mxu0 0.0
        %2528 = vmatprep.subr.mxu0 0.0
        %2529 = vmatpush1.xpose.msra.mxu0 0.0
        %2530 = vmatprep.subr.mxu0 0.0
        %2531 = vmatpush1.xpose.msra.mxu0 0.0
        %2532 = vmatprep.subr.mxu0 0.0
        %2533 = vmatpush1.xpose.msra.mxu0 0.0
        %2534 = vmatprep.subr.mxu0 0.0
        %2535 = vmatpush1.xpose.msra.mxu0 0.0
        %2536 = vmatprep.subr.mxu0 0.0
        %2537 = vmatpush1.xpose.msra.mxu0 0.0
        %2538 = vmatprep.subr.mxu0 0.0
        %2539 = vmatpush1.xpose.msra.mxu0 0.0
        %2540 = vmatprep.subr.mxu0 0.0
        %2541 = vmatpush1.xpose.msra.mxu0 0.0
        %2542 = vmatprep.subr.mxu0 0.0
        %2543 = vmatpush1.xpose.msra.mxu0 0.0
        %2544 = vmatprep.subr.mxu0 0.0
        %2545 = vmatpush1.xpose.msra.mxu0 0.0
        %2546 = vmatprep.subr.mxu0 0.0
        %2547 = vmatpush1.xpose.msra.mxu0 0.0
        %2548 = vmatprep.subr.mxu0 0.0
        %2549 = vmatpush1.xpose.msra.mxu0 0.0
        %2550 = vmatprep.subr.mxu0 0.0
        %2551 = vmatpush1.xpose.msra.mxu0 0.0
        %2552 = vmatprep.mubr.f32.mxu0 0.0
        %v2553 = vand.u32 %v2485, 4294901760
        %v2554 = vsub.f32 %v2485, %v2553
        %v2555 = vand.u32 %v2554, 4294901760
        %v2556 = vsub.f32 %v2554, %v2555
        %v2557 = vand.u32 %v2556, 4294901760
        %2558 = vmatmul.mubr.f32.gmra.mrb[0].mxu0 %v2557
        %v2559 = vpop.f32.mrb[0].mxu0
        %v2560 = vadd.f32 %v2481, %v2559
        %v2561 = vpop.f32.mrb[0].mxu0
        %2562 = vdwg.mxu0
        %2563 = vmatprep.subr.mxu0 0.0
        %v2564 = vand.u32 %v1583, 4294901760
        %v2565 = vsub.f32 %v1583, %v2564
        %v2566 = vand.u32 %v2565, 4294901760
        %v2567 = vsub.f32 %v2565, %v2566
        %v2568 = vand.u32 %v2567, 4294901760
        %2569 = vmatpush1.xpose.msra.mxu0 %v2568
        %2570 = vmatprep.subr.mxu0 0.0
        %2571 = vmatpush1.xpose.msra.mxu0 0.0
        %2572 = vmatprep.subr.mxu0 0.0
        %2573 = vmatpush1.xpose.msra.mxu0 0.0
        %2574 = vmatprep.subr.mxu0 0.0
        %2575 = vmatpush1.xpose.msra.mxu0 0.0
        %2576 = vmatprep.subr.mxu0 0.0
        %2577 = vmatpush1.xpose.msra.mxu0 0.0
        %2578 = vmatprep.subr.mxu0 0.0
        %2579 = vmatpush1.xpose.msra.mxu0 0.0
        %2580 = vmatprep.subr.mxu0 0.0
        %2581 = vmatpush1.xpose.msra.mxu0 0.0
        %2582 = vmatprep.subr.mxu0 0.0
        %2583 = vmatpush1.xpose.msra.mxu0 0.0
        %2584 = vmatprep.subr.mxu0 0.0
        %2585 = vmatpush1.xpose.msra.mxu0 0.0
        %2586 = vmatprep.subr.mxu0 0.0
        %2587 = vmatpush1.xpose.msra.mxu0 0.0
        %2588 = vmatprep.subr.mxu0 0.0
        %2589 = vmatpush1.xpose.msra.mxu0 0.0
        %2590 = vmatprep.subr.mxu0 0.0
        %2591 = vmatpush1.xpose.msra.mxu0 0.0
        %2592 = vmatprep.subr.mxu0 0.0
        %2593 = vmatpush1.xpose.msra.mxu0 0.0
        %2594 = vmatprep.subr.mxu0 0.0
        %2595 = vmatpush1.xpose.msra.mxu0 0.0
        %2596 = vmatprep.subr.mxu0 0.0
        %2597 = vmatpush1.xpose.msra.mxu0 0.0
        %2598 = vmatprep.subr.mxu0 0.0
        %2599 = vmatpush1.xpose.msra.mxu0 0.0
        %2600 = vmatprep.subr.mxu0 0.0
        %2601 = vmatpush1.xpose.msra.mxu0 0.0
        %2602 = vmatprep.subr.mxu0 0.0
        %2603 = vmatpush1.xpose.msra.mxu0 0.0
        %2604 = vmatprep.subr.mxu0 0.0
        %2605 = vmatpush1.xpose.msra.mxu0 0.0
        %2606 = vmatprep.subr.mxu0 0.0
        %2607 = vmatpush1.xpose.msra.mxu0 0.0
        %2608 = vmatprep.subr.mxu0 0.0
        %2609 = vmatpush1.xpose.msra.mxu0 0.0
        %2610 = vmatprep.subr.mxu0 0.0
        %2611 = vmatpush1.xpose.msra.mxu0 0.0
        %2612 = vmatprep.subr.mxu0 0.0
        %2613 = vmatpush1.xpose.msra.mxu0 0.0
        %2614 = vmatprep.subr.mxu0 0.0
        %2615 = vmatpush1.xpose.msra.mxu0 0.0
        %2616 = vmatprep.subr.mxu0 0.0
        %2617 = vmatpush1.xpose.msra.mxu0 0.0
        %2618 = vmatprep.subr.mxu0 0.0
        %2619 = vmatpush1.xpose.msra.mxu0 0.0
        %2620 = vmatprep.subr.mxu0 0.0
        %2621 = vmatpush1.xpose.msra.mxu0 0.0
        %2622 = vmatprep.subr.mxu0 0.0
        %2623 = vmatpush1.xpose.msra.mxu0 0.0
        %2624 = vmatprep.subr.mxu0 0.0
        %2625 = vmatpush1.xpose.msra.mxu0 0.0
        %2626 = vmatprep.subr.mxu0 0.0
        %2627 = vmatpush1.xpose.msra.mxu0 0.0
        %2628 = vmatprep.subr.mxu0 0.0
        %2629 = vmatpush1.xpose.msra.mxu0 0.0
        %2630 = vmatprep.subr.mxu0 0.0
        %2631 = vmatpush1.xpose.msra.mxu0 0.0
        %2632 = vmatprep.mubr.f32.mxu0 0.0
        %v2633 = vand.u32 %v2485, 4294901760
        %2634 = vmatmul.mubr.f32.gmra.mrb[0].mxu0 %v2633
        %v2635 = vpop.f32.mrb[0].mxu0
        %v2636 = vadd.f32 %v2560, %v2635
        %v2637 = vpop.f32.mrb[0].mxu0
        %2638 = vdwg.mxu0
        %2639 = vmatprep.subr.mxu0 0.0
        %v2640 = vand.u32 %v1583, 4294901760
        %v2641 = vsub.f32 %v1583, %v2640
        %2642 = vmatpush1.xpose.msra.mxu0 %v2641
        %2643 = vmatprep.subr.mxu0 0.0
        %2644 = vmatpush1.xpose.msra.mxu0 0.0
        %2645 = vmatprep.subr.mxu0 0.0
        %2646 = vmatpush1.xpose.msra.mxu0 0.0
        %2647 = vmatprep.subr.mxu0 0.0
        %2648 = vmatpush1.xpose.msra.mxu0 0.0
        %2649 = vmatprep.subr.mxu0 0.0
        %2650 = vmatpush1.xpose.msra.mxu0 0.0
        %2651 = vmatprep.subr.mxu0 0.0
        %2652 = vmatpush1.xpose.msra.mxu0 0.0
        %2653 = vmatprep.subr.mxu0 0.0
        %2654 = vmatpush1.xpose.msra.mxu0 0.0
        %2655 = vmatprep.subr.mxu0 0.0
        %2656 = vmatpush1.xpose.msra.mxu0 0.0
        %2657 = vmatprep.subr.mxu0 0.0
        %2658 = vmatpush1.xpose.msra.mxu0 0.0
        %2659 = vmatprep.subr.mxu0 0.0
        %2660 = vmatpush1.xpose.msra.mxu0 0.0
        %2661 = vmatprep.subr.mxu0 0.0
        %2662 = vmatpush1.xpose.msra.mxu0 0.0
        %2663 = vmatprep.subr.mxu0 0.0
        %2664 = vmatpush1.xpose.msra.mxu0 0.0
        %2665 = vmatprep.subr.mxu0 0.0
        %2666 = vmatpush1.xpose.msra.mxu0 0.0
        %2667 = vmatprep.subr.mxu0 0.0
        %2668 = vmatpush1.xpose.msra.mxu0 0.0
        %2669 = vmatprep.subr.mxu0 0.0
        %2670 = vmatpush1.xpose.msra.mxu0 0.0
        %2671 = vmatprep.subr.mxu0 0.0
        %2672 = vmatpush1.xpose.msra.mxu0 0.0
        %2673 = vmatprep.subr.mxu0 0.0
        %2674 = vmatpush1.xpose.msra.mxu0 0.0
        %2675 = vmatprep.subr.mxu0 0.0
        %2676 = vmatpush1.xpose.msra.mxu0 0.0
        %2677 = vmatprep.subr.mxu0 0.0
        %2678 = vmatpush1.xpose.msra.mxu0 0.0
        %2679 = vmatprep.subr.mxu0 0.0
        %2680 = vmatpush1.xpose.msra.mxu0 0.0
        %2681 = vmatprep.subr.mxu0 0.0
        %2682 = vmatpush1.xpose.msra.mxu0 0.0
        %2683 = vmatprep.subr.mxu0 0.0
        %2684 = vmatpush1.xpose.msra.mxu0 0.0
        %2685 = vmatprep.subr.mxu0 0.0
        %2686 = vmatpush1.xpose.msra.mxu0 0.0
        %2687 = vmatprep.subr.mxu0 0.0
        %2688 = vmatpush1.xpose.msra.mxu0 0.0
        %2689 = vmatprep.subr.mxu0 0.0
        %2690 = vmatpush1.xpose.msra.mxu0 0.0
        %2691 = vmatprep.subr.mxu0 0.0
        %2692 = vmatpush1.xpose.msra.mxu0 0.0
        %2693 = vmatprep.subr.mxu0 0.0
        %2694 = vmatpush1.xpose.msra.mxu0 0.0
        %2695 = vmatprep.subr.mxu0 0.0
        %2696 = vmatpush1.xpose.msra.mxu0 0.0
        %2697 = vmatprep.subr.mxu0 0.0
        %2698 = vmatpush1.xpose.msra.mxu0 0.0
        %2699 = vmatprep.subr.mxu0 0.0
        %2700 = vmatpush1.xpose.msra.mxu0 0.0
        %2701 = vmatprep.subr.mxu0 0.0
        %2702 = vmatpush1.xpose.msra.mxu0 0.0
        %2703 = vmatprep.subr.mxu0 0.0
        %2704 = vmatpush1.xpose.msra.mxu0 0.0
        %2705 = vmatprep.mubr.f32.mxu0 0.0
        %v2706 = vand.u32 %v2485, 4294901760
        %v2707 = vsub.f32 %v2485, %v2706
        %2708 = vmatmul.mubr.f32.gmra.mrb[0].mxu0 %v2707
        %v2709 = vpop.f32.mrb[0].mxu0
        %v2710 = vadd.f32 %v2636, %v2709
        %v2711 = vpop.f32.mrb[0].mxu0
        %2712 = vdwg.mxu0
        %2713 = vmatprep.subr.mxu0 0.0
        %v2714 = vand.u32 %v1583, 4294901760
        %2715 = vmatpush1.xpose.msra.mxu0 %v2714
        %2716 = vmatprep.subr.mxu0 0.0
        %2717 = vmatpush1.xpose.msra.mxu0 0.0
        %2718 = vmatprep.subr.mxu0 0.0
        %2719 = vmatpush1.xpose.msra.mxu0 0.0
        %2720 = vmatprep.subr.mxu0 0.0
        %2721 = vmatpush1.xpose.msra.mxu0 0.0
        %2722 = vmatprep.subr.mxu0 0.0
        %2723 = vmatpush1.xpose.msra.mxu0 0.0
        %2724 = vmatprep.subr.mxu0 0.0
        %2725 = vmatpush1.xpose.msra.mxu0 0.0
        %2726 = vmatprep.subr.mxu0 0.0
        %2727 = vmatpush1.xpose.msra.mxu0 0.0
        %2728 = vmatprep.subr.mxu0 0.0
        %2729 = vmatpush1.xpose.msra.mxu0 0.0
        %2730 = vmatprep.subr.mxu0 0.0
        %2731 = vmatpush1.xpose.msra.mxu0 0.0
        %2732 = vmatprep.subr.mxu0 0.0
        %2733 = vmatpush1.xpose.msra.mxu0 0.0
        %2734 = vmatprep.subr.mxu0 0.0
        %2735 = vmatpush1.xpose.msra.mxu0 0.0
        %2736 = vmatprep.subr.mxu0 0.0
        %2737 = vmatpush1.xpose.msra.mxu0 0.0
        %2738 = vmatprep.subr.mxu0 0.0
        %2739 = vmatpush1.xpose.msra.mxu0 0.0
        %2740 = vmatprep.subr.mxu0 0.0
        %2741 = vmatpush1.xpose.msra.mxu0 0.0
        %2742 = vmatprep.subr.mxu0 0.0
        %2743 = vmatpush1.xpose.msra.mxu0 0.0
        %2744 = vmatprep.subr.mxu0 0.0
        %2745 = vmatpush1.xpose.msra.mxu0 0.0
        %2746 = vmatprep.subr.mxu0 0.0
        %2747 = vmatpush1.xpose.msra.mxu0 0.0
        %2748 = vmatprep.subr.mxu0 0.0
        %2749 = vmatpush1.xpose.msra.mxu0 0.0
        %2750 = vmatprep.subr.mxu0 0.0
        %2751 = vmatpush1.xpose.msra.mxu0 0.0
        %2752 = vmatprep.subr.mxu0 0.0
        %2753 = vmatpush1.xpose.msra.mxu0 0.0
        %2754 = vmatprep.subr.mxu0 0.0
        %2755 = vmatpush1.xpose.msra.mxu0 0.0
        %2756 = vmatprep.subr.mxu0 0.0
        %2757 = vmatpush1.xpose.msra.mxu0 0.0
        %2758 = vmatprep.subr.mxu0 0.0
        %2759 = vmatpush1.xpose.msra.mxu0 0.0
        %2760 = vmatprep.subr.mxu0 0.0
        %2761 = vmatpush1.xpose.msra.mxu0 0.0
        %2762 = vmatprep.subr.mxu0 0.0
        %2763 = vmatpush1.xpose.msra.mxu0 0.0
        %2764 = vmatprep.subr.mxu0 0.0
        %2765 = vmatpush1.xpose.msra.mxu0 0.0
        %2766 = vmatprep.subr.mxu0 0.0
        %2767 = vmatpush1.xpose.msra.mxu0 0.0
        %2768 = vmatprep.subr.mxu0 0.0
        %2769 = vmatpush1.xpose.msra.mxu0 0.0
        %2770 = vmatprep.subr.mxu0 0.0
        %2771 = vmatpush1.xpose.msra.mxu0 0.0
        %2772 = vmatprep.subr.mxu0 0.0
        %2773 = vmatpush1.xpose.msra.mxu0 0.0
        %2774 = vmatprep.subr.mxu0 0.0
        %2775 = vmatpush1.xpose.msra.mxu0 0.0
        %2776 = vmatprep.subr.mxu0 0.0
        %2777 = vmatpush1.xpose.msra.mxu0 0.0
        %2778 = vmatprep.mubr.f32.mxu0 0.0
        %v2779 = vand.u32 %v2485, 4294901760
        %v2780 = vsub.f32 %v2485, %v2779
        %v2781 = vand.u32 %v2780, 4294901760
        %2782 = vmatmul.mubr.f32.gmra.mrb[0].mxu0 %v2781
        %v2783 = vpop.f32.mrb[0].mxu0
        %v2784 = vadd.f32 %v2710, %v2783
        %v2785 = vpop.f32.mrb[0].mxu0
        %2786 = vdwg.mxu0
        %2787 = vmatprep.subr.mxu0 0.0
        %v2788 = vand.u32 %v1583, 4294901760
        %v2789 = vsub.f32 %v1583, %v2788
        %v2790 = vand.u32 %v2789, 4294901760
        %2791 = vmatpush1.xpose.msra.mxu0 %v2790
        %2792 = vmatprep.subr.mxu0 0.0
        %2793 = vmatpush1.xpose.msra.mxu0 0.0
        %2794 = vmatprep.subr.mxu0 0.0
        %2795 = vmatpush1.xpose.msra.mxu0 0.0
        %2796 = vmatprep.subr.mxu0 0.0
        %2797 = vmatpush1.xpose.msra.mxu0 0.0
        %2798 = vmatprep.subr.mxu0 0.0
        %2799 = vmatpush1.xpose.msra.mxu0 0.0
        %2800 = vmatprep.subr.mxu0 0.0
        %2801 = vmatpush1.xpose.msra.mxu0 0.0
        %2802 = vmatprep.subr.mxu0 0.0
        %2803 = vmatpush1.xpose.msra.mxu0 0.0
        %2804 = vmatprep.subr.mxu0 0.0
        %2805 = vmatpush1.xpose.msra.mxu0 0.0
        %2806 = vmatprep.subr.mxu0 0.0
        %2807 = vmatpush1.xpose.msra.mxu0 0.0
        %2808 = vmatprep.subr.mxu0 0.0
        %2809 = vmatpush1.xpose.msra.mxu0 0.0
        %2810 = vmatprep.subr.mxu0 0.0
        %2811 = vmatpush1.xpose.msra.mxu0 0.0
        %2812 = vmatprep.subr.mxu0 0.0
        %2813 = vmatpush1.xpose.msra.mxu0 0.0
        %2814 = vmatprep.subr.mxu0 0.0
        %2815 = vmatpush1.xpose.msra.mxu0 0.0
        %2816 = vmatprep.subr.mxu0 0.0
        %2817 = vmatpush1.xpose.msra.mxu0 0.0
        %2818 = vmatprep.subr.mxu0 0.0
        %2819 = vmatpush1.xpose.msra.mxu0 0.0
        %2820 = vmatprep.subr.mxu0 0.0
        %2821 = vmatpush1.xpose.msra.mxu0 0.0
        %2822 = vmatprep.subr.mxu0 0.0
        %2823 = vmatpush1.xpose.msra.mxu0 0.0
        %2824 = vmatprep.subr.mxu0 0.0
        %2825 = vmatpush1.xpose.msra.mxu0 0.0
        %2826 = vmatprep.subr.mxu0 0.0
        %2827 = vmatpush1.xpose.msra.mxu0 0.0
        %2828 = vmatprep.subr.mxu0 0.0
        %2829 = vmatpush1.xpose.msra.mxu0 0.0
        %2830 = vmatprep.subr.mxu0 0.0
        %2831 = vmatpush1.xpose.msra.mxu0 0.0
        %2832 = vmatprep.subr.mxu0 0.0
        %2833 = vmatpush1.xpose.msra.mxu0 0.0
        %2834 = vmatprep.subr.mxu0 0.0
        %2835 = vmatpush1.xpose.msra.mxu0 0.0
        %2836 = vmatprep.subr.mxu0 0.0
        %2837 = vmatpush1.xpose.msra.mxu0 0.0
        %2838 = vmatprep.subr.mxu0 0.0
        %2839 = vmatpush1.xpose.msra.mxu0 0.0
        %2840 = vmatprep.subr.mxu0 0.0
        %2841 = vmatpush1.xpose.msra.mxu0 0.0
        %2842 = vmatprep.subr.mxu0 0.0
        %2843 = vmatpush1.xpose.msra.mxu0 0.0
        %2844 = vmatprep.subr.mxu0 0.0
        %2845 = vmatpush1.xpose.msra.mxu0 0.0
        %2846 = vmatprep.subr.mxu0 0.0
        %2847 = vmatpush1.xpose.msra.mxu0 0.0
        %2848 = vmatprep.subr.mxu0 0.0
        %2849 = vmatpush1.xpose.msra.mxu0 0.0
        %2850 = vmatprep.subr.mxu0 0.0
        %2851 = vmatpush1.xpose.msra.mxu0 0.0
        %2852 = vmatprep.subr.mxu0 0.0
        %2853 = vmatpush1.xpose.msra.mxu0 0.0
        %2854 = vmatprep.mubr.f32.mxu0 0.0
        %v2855 = vand.u32 %v2485, 4294901760
        %2856 = vmatmul.mubr.f32.gmra.mrb[0].mxu0 %v2855
        %v2857 = vpop.f32.mrb[0].mxu0
        %v2858 = vadd.f32 %v2784, %v2857
        %v2859 = vpop.f32.mrb[0].mxu0
        %2860 = vdwg.mxu0
        %2861 = vmatprep.subr.mxu0 0.0
        %v2862 = vand.u32 %v1583, 4294901760
        %2863 = vmatpush1.xpose.msra.mxu0 %v2862
        %2864 = vmatprep.subr.mxu0 0.0
        %2865 = vmatpush1.xpose.msra.mxu0 0.0
        %2866 = vmatprep.subr.mxu0 0.0
        %2867 = vmatpush1.xpose.msra.mxu0 0.0
        %2868 = vmatprep.subr.mxu0 0.0
        %2869 = vmatpush1.xpose.msra.mxu0 0.0
        %2870 = vmatprep.subr.mxu0 0.0
        %2871 = vmatpush1.xpose.msra.mxu0 0.0
        %2872 = vmatprep.subr.mxu0 0.0
        %2873 = vmatpush1.xpose.msra.mxu0 0.0
        %2874 = vmatprep.subr.mxu0 0.0
        %2875 = vmatpush1.xpose.msra.mxu0 0.0
        %2876 = vmatprep.subr.mxu0 0.0
        %2877 = vmatpush1.xpose.msra.mxu0 0.0
        %2878 = vmatprep.subr.mxu0 0.0
        %2879 = vmatpush1.xpose.msra.mxu0 0.0
        %2880 = vmatprep.subr.mxu0 0.0
        %2881 = vmatpush1.xpose.msra.mxu0 0.0
        %2882 = vmatprep.subr.mxu0 0.0
        %2883 = vmatpush1.xpose.msra.mxu0 0.0
        %2884 = vmatprep.subr.mxu0 0.0
        %2885 = vmatpush1.xpose.msra.mxu0 0.0
        %2886 = vmatprep.subr.mxu0 0.0
        %2887 = vmatpush1.xpose.msra.mxu0 0.0
        %2888 = vmatprep.subr.mxu0 0.0
        %2889 = vmatpush1.xpose.msra.mxu0 0.0
        %2890 = vmatprep.subr.mxu0 0.0
        %2891 = vmatpush1.xpose.msra.mxu0 0.0
        %2892 = vmatprep.subr.mxu0 0.0
        %2893 = vmatpush1.xpose.msra.mxu0 0.0
        %2894 = vmatprep.subr.mxu0 0.0
        %2895 = vmatpush1.xpose.msra.mxu0 0.0
        %2896 = vmatprep.subr.mxu0 0.0
        %2897 = vmatpush1.xpose.msra.mxu0 0.0
        %2898 = vmatprep.subr.mxu0 0.0
        %2899 = vmatpush1.xpose.msra.mxu0 0.0
        %2900 = vmatprep.subr.mxu0 0.0
        %2901 = vmatpush1.xpose.msra.mxu0 0.0
        %2902 = vmatprep.subr.mxu0 0.0
        %2903 = vmatpush1.xpose.msra.mxu0 0.0
        %2904 = vmatprep.subr.mxu0 0.0
        %2905 = vmatpush1.xpose.msra.mxu0 0.0
        %2906 = vmatprep.subr.mxu0 0.0
        %2907 = vmatpush1.xpose.msra.mxu0 0.0
        %2908 = vmatprep.subr.mxu0 0.0
        %2909 = vmatpush1.xpose.msra.mxu0 0.0
        %2910 = vmatprep.subr.mxu0 0.0
        %2911 = vmatpush1.xpose.msra.mxu0 0.0
        %2912 = vmatprep.subr.mxu0 0.0
        %2913 = vmatpush1.xpose.msra.mxu0 0.0
        %2914 = vmatprep.subr.mxu0 0.0
        %2915 = vmatpush1.xpose.msra.mxu0 0.0
        %2916 = vmatprep.subr.mxu0 0.0
        %2917 = vmatpush1.xpose.msra.mxu0 0.0
        %2918 = vmatprep.subr.mxu0 0.0
        %2919 = vmatpush1.xpose.msra.mxu0 0.0
        %2920 = vmatprep.subr.mxu0 0.0
        %2921 = vmatpush1.xpose.msra.mxu0 0.0
        %2922 = vmatprep.subr.mxu0 0.0
        %2923 = vmatpush1.xpose.msra.mxu0 0.0
        %2924 = vmatprep.subr.mxu0 0.0
        %2925 = vmatpush1.xpose.msra.mxu0 0.0
        %2926 = vmatprep.mubr.f32.mxu0 0.0
        %v2927 = vand.u32 %v2485, 4294901760
        %2928 = vmatmul.mubr.f32.gmra.mrb[0].mxu0 %v2927
        %v2929 = vpop.f32.mrb[0].mxu0
        %v2930 = vadd.f32 %v2858, %v2929
        %v2931 = vpop.f32.mrb[0].mxu0
        %2932 = vdwg.mxu0
        %v2934 = vsel %vm2031, %v674, 0
        %v2937 = vsel %vm2031, %v2028, 0
        %2939 = vmatprep.subr.mxu0 0.0
        %v2940 = vand.u32 %v2937, 4294901760
        %2941 = vmatpush1.xpose.msra.mxu0 %v2940
        %2942 = vmatprep.subr.mxu0 0.0
        %2943 = vmatpush1.xpose.msra.mxu0 0.0
        %2944 = vmatprep.subr.mxu0 0.0
        %2945 = vmatpush1.xpose.msra.mxu0 0.0
        %2946 = vmatprep.subr.mxu0 0.0
        %2947 = vmatpush1.xpose.msra.mxu0 0.0
        %2948 = vmatprep.subr.mxu0 0.0
        %2949 = vmatpush1.xpose.msra.mxu0 0.0
        %2950 = vmatprep.subr.mxu0 0.0
        %2951 = vmatpush1.xpose.msra.mxu0 0.0
        %2952 = vmatprep.subr.mxu0 0.0
        %2953 = vmatpush1.xpose.msra.mxu0 0.0
        %2954 = vmatprep.subr.mxu0 0.0
        %2955 = vmatpush1.xpose.msra.mxu0 0.0
        %2956 = vmatprep.subr.mxu0 0.0
        %2957 = vmatpush1.xpose.msra.mxu0 0.0
        %2958 = vmatprep.subr.mxu0 0.0
        %2959 = vmatpush1.xpose.msra.mxu0 0.0
        %2960 = vmatprep.subr.mxu0 0.0
        %2961 = vmatpush1.xpose.msra.mxu0 0.0
        %2962 = vmatprep.subr.mxu0 0.0
        %2963 = vmatpush1.xpose.msra.mxu0 0.0
        %2964 = vmatprep.subr.mxu0 0.0
        %2965 = vmatpush1.xpose.msra.mxu0 0.0
        %2966 = vmatprep.subr.mxu0 0.0
        %2967 = vmatpush1.xpose.msra.mxu0 0.0
        %2968 = vmatprep.subr.mxu0 0.0
        %2969 = vmatpush1.xpose.msra.mxu0 0.0
        %2970 = vmatprep.subr.mxu0 0.0
        %2971 = vmatpush1.xpose.msra.mxu0 0.0
        %2972 = vmatprep.subr.mxu0 0.0
        %2973 = vmatpush1.xpose.msra.mxu0 0.0
        %2974 = vmatprep.subr.mxu0 0.0
        %2975 = vmatpush1.xpose.msra.mxu0 0.0
        %2976 = vmatprep.subr.mxu0 0.0
        %2977 = vmatpush1.xpose.msra.mxu0 0.0
        %2978 = vmatprep.subr.mxu0 0.0
        %2979 = vmatpush1.xpose.msra.mxu0 0.0
        %2980 = vmatprep.subr.mxu0 0.0
        %2981 = vmatpush1.xpose.msra.mxu0 0.0
        %2982 = vmatprep.subr.mxu0 0.0
        %2983 = vmatpush1.xpose.msra.mxu0 0.0
        %2984 = vmatprep.subr.mxu0 0.0
        %2985 = vmatpush1.xpose.msra.mxu0 0.0
        %2986 = vmatprep.subr.mxu0 0.0
        %2987 = vmatpush1.xpose.msra.mxu0 0.0
        %2988 = vmatprep.subr.mxu0 0.0
        %2989 = vmatpush1.xpose.msra.mxu0 0.0
        %2990 = vmatprep.subr.mxu0 0.0
        %2991 = vmatpush1.xpose.msra.mxu0 0.0
        %2992 = vmatprep.subr.mxu0 0.0
        %2993 = vmatpush1.xpose.msra.mxu0 0.0
        %2994 = vmatprep.subr.mxu0 0.0
        %2995 = vmatpush1.xpose.msra.mxu0 0.0
        %2996 = vmatprep.subr.mxu0 0.0
        %2997 = vmatpush1.xpose.msra.mxu0 0.0
        %2998 = vmatprep.subr.mxu0 0.0
        %2999 = vmatpush1.xpose.msra.mxu0 0.0
        %3000 = vmatprep.subr.mxu0 0.0
        %3001 = vmatpush1.xpose.msra.mxu0 0.0
        %3002 = vmatprep.subr.mxu0 0.0
        %3003 = vmatpush1.xpose.msra.mxu0 0.0
        %3004 = vmatprep.mubr.f32.mxu0 0.0
        %v3005 = vand.u32 %v2934, 4294901760
        %v3006 = vsub.f32 %v2934, %v3005
        %v3007 = vand.u32 %v3006, 4294901760
        %v3008 = vsub.f32 %v3006, %v3007
        %v3009 = vand.u32 %v3008, 4294901760
        %3010 = vmatmul.mubr.f32.gmra.mrb[0].mxu0 %v3009
        %v3011 = vpop.f32.mrb[0].mxu0
        %v3012 = vadd.f32 0.0, %v3011
        %v3013 = vpop.f32.mrb[0].mxu0
        %3014 = vdwg.mxu0
        %3015 = vmatprep.subr.mxu0 0.0
        %v3016 = vand.u32 %v2937, 4294901760
        %v3017 = vsub.f32 %v2937, %v3016
        %v3018 = vand.u32 %v3017, 4294901760
        %v3019 = vsub.f32 %v3017, %v3018
        %v3020 = vand.u32 %v3019, 4294901760
        %3021 = vmatpush1.xpose.msra.mxu0 %v3020
        %3022 = vmatprep.subr.mxu0 0.0
        %3023 = vmatpush1.xpose.msra.mxu0 0.0
        %3024 = vmatprep.subr.mxu0 0.0
        %3025 = vmatpush1.xpose.msra.mxu0 0.0
        %3026 = vmatprep.subr.mxu0 0.0
        %3027 = vmatpush1.xpose.msra.mxu0 0.0
        %3028 = vmatprep.subr.mxu0 0.0
        %3029 = vmatpush1.xpose.msra.mxu0 0.0
        %3030 = vmatprep.subr.mxu0 0.0
        %3031 = vmatpush1.xpose.msra.mxu0 0.0
        %3032 = vmatprep.subr.mxu0 0.0
        %3033 = vmatpush1.xpose.msra.mxu0 0.0
        %3034 = vmatprep.subr.mxu0 0.0
        %3035 = vmatpush1.xpose.msra.mxu0 0.0
        %3036 = vmatprep.subr.mxu0 0.0
        %3037 = vmatpush1.xpose.msra.mxu0 0.0
        %3038 = vmatprep.subr.mxu0 0.0
        %3039 = vmatpush1.xpose.msra.mxu0 0.0
        %3040 = vmatprep.subr.mxu0 0.0
        %3041 = vmatpush1.xpose.msra.mxu0 0.0
        %3042 = vmatprep.subr.mxu0 0.0
        %3043 = vmatpush1.xpose.msra.mxu0 0.0
        %3044 = vmatprep.subr.mxu0 0.0
        %3045 = vmatpush1.xpose.msra.mxu0 0.0
        %3046 = vmatprep.subr.mxu0 0.0
        %3047 = vmatpush1.xpose.msra.mxu0 0.0
        %3048 = vmatprep.subr.mxu0 0.0
        %3049 = vmatpush1.xpose.msra.mxu0 0.0
        %3050 = vmatprep.subr.mxu0 0.0
        %3051 = vmatpush1.xpose.msra.mxu0 0.0
        %3052 = vmatprep.subr.mxu0 0.0
        %3053 = vmatpush1.xpose.msra.mxu0 0.0
        %3054 = vmatprep.subr.mxu0 0.0
        %3055 = vmatpush1.xpose.msra.mxu0 0.0
        %3056 = vmatprep.subr.mxu0 0.0
        %3057 = vmatpush1.xpose.msra.mxu0 0.0
        %3058 = vmatprep.subr.mxu0 0.0
        %3059 = vmatpush1.xpose.msra.mxu0 0.0
        %3060 = vmatprep.subr.mxu0 0.0
        %3061 = vmatpush1.xpose.msra.mxu0 0.0
        %3062 = vmatprep.subr.mxu0 0.0
        %3063 = vmatpush1.xpose.msra.mxu0 0.0
        %3064 = vmatprep.subr.mxu0 0.0
        %3065 = vmatpush1.xpose.msra.mxu0 0.0
        %3066 = vmatprep.subr.mxu0 0.0
        %3067 = vmatpush1.xpose.msra.mxu0 0.0
        %3068 = vmatprep.subr.mxu0 0.0
        %3069 = vmatpush1.xpose.msra.mxu0 0.0
        %3070 = vmatprep.subr.mxu0 0.0
        %3071 = vmatpush1.xpose.msra.mxu0 0.0
        %3072 = vmatprep.subr.mxu0 0.0
        %3073 = vmatpush1.xpose.msra.mxu0 0.0
        %3074 = vmatprep.subr.mxu0 0.0
        %3075 = vmatpush1.xpose.msra.mxu0 0.0
        %3076 = vmatprep.subr.mxu0 0.0
        %3077 = vmatpush1.xpose.msra.mxu0 0.0
        %3078 = vmatprep.subr.mxu0 0.0
        %3079 = vmatpush1.xpose.msra.mxu0 0.0
        %3080 = vmatprep.subr.mxu0 0.0
        %3081 = vmatpush1.xpose.msra.mxu0 0.0
        %3082 = vmatprep.subr.mxu0 0.0
        %3083 = vmatpush1.xpose.msra.mxu0 0.0
        %3084 = vmatprep.mubr.f32.mxu0 0.0
        %v3085 = vand.u32 %v2934, 4294901760
        %3086 = vmatmul.mubr.f32.gmra.mrb[0].mxu0 %v3085
        %v3087 = vpop.f32.mrb[0].mxu0
        %v3088 = vadd.f32 %v3012, %v3087
        %v3089 = vpop.f32.mrb[0].mxu0
        %3090 = vdwg.mxu0
        %3091 = vmatprep.subr.mxu0 0.0
        %v3092 = vand.u32 %v2937, 4294901760
        %v3093 = vsub.f32 %v2937, %v3092
        %3094 = vmatpush1.xpose.msra.mxu0 %v3093
        %3095 = vmatprep.subr.mxu0 0.0
        %3096 = vmatpush1.xpose.msra.mxu0 0.0
        %3097 = vmatprep.subr.mxu0 0.0
        %3098 = vmatpush1.xpose.msra.mxu0 0.0
        %3099 = vmatprep.subr.mxu0 0.0
        %3100 = vmatpush1.xpose.msra.mxu0 0.0
        %3101 = vmatprep.subr.mxu0 0.0
        %3102 = vmatpush1.xpose.msra.mxu0 0.0
        %3103 = vmatprep.subr.mxu0 0.0
        %3104 = vmatpush1.xpose.msra.mxu0 0.0
        %3105 = vmatprep.subr.mxu0 0.0
        %3106 = vmatpush1.xpose.msra.mxu0 0.0
        %3107 = vmatprep.subr.mxu0 0.0
        %3108 = vmatpush1.xpose.msra.mxu0 0.0
        %3109 = vmatprep.subr.mxu0 0.0
        %3110 = vmatpush1.xpose.msra.mxu0 0.0
        %3111 = vmatprep.subr.mxu0 0.0
        %3112 = vmatpush1.xpose.msra.mxu0 0.0
        %3113 = vmatprep.subr.mxu0 0.0
        %3114 = vmatpush1.xpose.msra.mxu0 0.0
        %3115 = vmatprep.subr.mxu0 0.0
        %3116 = vmatpush1.xpose.msra.mxu0 0.0
        %3117 = vmatprep.subr.mxu0 0.0
        %3118 = vmatpush1.xpose.msra.mxu0 0.0
        %3119 = vmatprep.subr.mxu0 0.0
        %3120 = vmatpush1.xpose.msra.mxu0 0.0
        %3121 = vmatprep.subr.mxu0 0.0
        %3122 = vmatpush1.xpose.msra.mxu0 0.0
        %3123 = vmatprep.subr.mxu0 0.0
        %3124 = vmatpush1.xpose.msra.mxu0 0.0
        %3125 = vmatprep.subr.mxu0 0.0
        %3126 = vmatpush1.xpose.msra.mxu0 0.0
        %3127 = vmatprep.subr.mxu0 0.0
        %3128 = vmatpush1.xpose.msra.mxu0 0.0
        %3129 = vmatprep.subr.mxu0 0.0
        %3130 = vmatpush1.xpose.msra.mxu0 0.0
        %3131 = vmatprep.subr.mxu0 0.0
        %3132 = vmatpush1.xpose.msra.mxu0 0.0
        %3133 = vmatprep.subr.mxu0 0.0
        %3134 = vmatpush1.xpose.msra.mxu0 0.0
        %3135 = vmatprep.subr.mxu0 0.0
        %3136 = vmatpush1.xpose.msra.mxu0 0.0
        %3137 = vmatprep.subr.mxu0 0.0
        %3138 = vmatpush1.xpose.msra.mxu0 0.0
        %3139 = vmatprep.subr.mxu0 0.0
        %3140 = vmatpush1.xpose.msra.mxu0 0.0
        %3141 = vmatprep.subr.mxu0 0.0
        %3142 = vmatpush1.xpose.msra.mxu0 0.0
        %3143 = vmatprep.subr.mxu0 0.0
        %3144 = vmatpush1.xpose.msra.mxu0 0.0
        %3145 = vmatprep.subr.mxu0 0.0
        %3146 = vmatpush1.xpose.msra.mxu0 0.0
        %3147 = vmatprep.subr.mxu0 0.0
        %3148 = vmatpush1.xpose.msra.mxu0 0.0
        %3149 = vmatprep.subr.mxu0 0.0
        %3150 = vmatpush1.xpose.msra.mxu0 0.0
        %3151 = vmatprep.subr.mxu0 0.0
        %3152 = vmatpush1.xpose.msra.mxu0 0.0
        %3153 = vmatprep.subr.mxu0 0.0
        %3154 = vmatpush1.xpose.msra.mxu0 0.0
        %3155 = vmatprep.subr.mxu0 0.0
        %3156 = vmatpush1.xpose.msra.mxu0 0.0
        %3157 = vmatprep.mubr.f32.mxu0 0.0
        %v3158 = vand.u32 %v2934, 4294901760
        %v3159 = vsub.f32 %v2934, %v3158
        %3160 = vmatmul.mubr.f32.gmra.mrb[0].mxu0 %v3159
        %v3161 = vpop.f32.mrb[0].mxu0
        %v3162 = vadd.f32 %v3088, %v3161
        %v3163 = vpop.f32.mrb[0].mxu0
        %3164 = vdwg.mxu0
        %3165 = vmatprep.subr.mxu0 0.0
        %v3166 = vand.u32 %v2937, 4294901760
        %3167 = vmatpush1.xpose.msra.mxu0 %v3166
        %3168 = vmatprep.subr.mxu0 0.0
        %3169 = vmatpush1.xpose.msra.mxu0 0.0
        %3170 = vmatprep.subr.mxu0 0.0
        %3171 = vmatpush1.xpose.msra.mxu0 0.0
        %3172 = vmatprep.subr.mxu0 0.0
        %3173 = vmatpush1.xpose.msra.mxu0 0.0
        %3174 = vmatprep.subr.mxu0 0.0
        %3175 = vmatpush1.xpose.msra.mxu0 0.0
        %3176 = vmatprep.subr.mxu0 0.0
        %3177 = vmatpush1.xpose.msra.mxu0 0.0
        %3178 = vmatprep.subr.mxu0 0.0
        %3179 = vmatpush1.xpose.msra.mxu0 0.0
        %3180 = vmatprep.subr.mxu0 0.0
        %3181 = vmatpush1.xpose.msra.mxu0 0.0
        %3182 = vmatprep.subr.mxu0 0.0
        %3183 = vmatpush1.xpose.msra.mxu0 0.0
        %3184 = vmatprep.subr.mxu0 0.0
        %3185 = vmatpush1.xpose.msra.mxu0 0.0
        %3186 = vmatprep.subr.mxu0 0.0
        %3187 = vmatpush1.xpose.msra.mxu0 0.0
        %3188 = vmatprep.subr.mxu0 0.0
        %3189 = vmatpush1.xpose.msra.mxu0 0.0
        %3190 = vmatprep.subr.mxu0 0.0
        %3191 = vmatpush1.xpose.msra.mxu0 0.0
        %3192 = vmatprep.subr.mxu0 0.0
        %3193 = vmatpush1.xpose.msra.mxu0 0.0
        %3194 = vmatprep.subr.mxu0 0.0
        %3195 = vmatpush1.xpose.msra.mxu0 0.0
        %3196 = vmatprep.subr.mxu0 0.0
        %3197 = vmatpush1.xpose.msra.mxu0 0.0
        %3198 = vmatprep.subr.mxu0 0.0
        %3199 = vmatpush1.xpose.msra.mxu0 0.0
        %3200 = vmatprep.subr.mxu0 0.0
        %3201 = vmatpush1.xpose.msra.mxu0 0.0
        %3202 = vmatprep.subr.mxu0 0.0
        %3203 = vmatpush1.xpose.msra.mxu0 0.0
        %3204 = vmatprep.subr.mxu0 0.0
        %3205 = vmatpush1.xpose.msra.mxu0 0.0
        %3206 = vmatprep.subr.mxu0 0.0
        %3207 = vmatpush1.xpose.msra.mxu0 0.0
        %3208 = vmatprep.subr.mxu0 0.0
        %3209 = vmatpush1.xpose.msra.mxu0 0.0
        %3210 = vmatprep.subr.mxu0 0.0
        %3211 = vmatpush1.xpose.msra.mxu0 0.0
        %3212 = vmatprep.subr.mxu0 0.0
        %3213 = vmatpush1.xpose.msra.mxu0 0.0
        %3214 = vmatprep.subr.mxu0 0.0
        %3215 = vmatpush1.xpose.msra.mxu0 0.0
        %3216 = vmatprep.subr.mxu0 0.0
        %3217 = vmatpush1.xpose.msra.mxu0 0.0
        %3218 = vmatprep.subr.mxu0 0.0
        %3219 = vmatpush1.xpose.msra.mxu0 0.0
        %3220 = vmatprep.subr.mxu0 0.0
        %3221 = vmatpush1.xpose.msra.mxu0 0.0
        %3222 = vmatprep.subr.mxu0 0.0
        %3223 = vmatpush1.xpose.msra.mxu0 0.0
        %3224 = vmatprep.subr.mxu0 0.0
        %3225 = vmatpush1.xpose.msra.mxu0 0.0
        %3226 = vmatprep.subr.mxu0 0.0
        %3227 = vmatpush1.xpose.msra.mxu0 0.0
        %3228 = vmatprep.subr.mxu0 0.0
        %3229 = vmatpush1.xpose.msra.mxu0 0.0
        %3230 = vmatprep.mubr.f32.mxu0 0.0
        %v3231 = vand.u32 %v2934, 4294901760
        %v3232 = vsub.f32 %v2934, %v3231
        %v3233 = vand.u32 %v3232, 4294901760
        %3234 = vmatmul.mubr.f32.gmra.mrb[0].mxu0 %v3233
        %v3235 = vpop.f32.mrb[0].mxu0
        %v3236 = vadd.f32 %v3162, %v3235
        %v3237 = vpop.f32.mrb[0].mxu0
        %3238 = vdwg.mxu0
        %3239 = vmatprep.subr.mxu0 0.0
        %v3240 = vand.u32 %v2937, 4294901760
        %v3241 = vsub.f32 %v2937, %v3240
        %v3242 = vand.u32 %v3241, 4294901760
        %3243 = vmatpush1.xpose.msra.mxu0 %v3242
        %3244 = vmatprep.subr.mxu0 0.0
        %3245 = vmatpush1.xpose.msra.mxu0 0.0
        %3246 = vmatprep.subr.mxu0 0.0
        %3247 = vmatpush1.xpose.msra.mxu0 0.0
        %3248 = vmatprep.subr.mxu0 0.0
        %3249 = vmatpush1.xpose.msra.mxu0 0.0
        %3250 = vmatprep.subr.mxu0 0.0
        %3251 = vmatpush1.xpose.msra.mxu0 0.0
        %3252 = vmatprep.subr.mxu0 0.0
        %3253 = vmatpush1.xpose.msra.mxu0 0.0
        %3254 = vmatprep.subr.mxu0 0.0
        %3255 = vmatpush1.xpose.msra.mxu0 0.0
        %3256 = vmatprep.subr.mxu0 0.0
        %3257 = vmatpush1.xpose.msra.mxu0 0.0
        %3258 = vmatprep.subr.mxu0 0.0
        %3259 = vmatpush1.xpose.msra.mxu0 0.0
        %3260 = vmatprep.subr.mxu0 0.0
        %3261 = vmatpush1.xpose.msra.mxu0 0.0
        %3262 = vmatprep.subr.mxu0 0.0
        %3263 = vmatpush1.xpose.msra.mxu0 0.0
        %3264 = vmatprep.subr.mxu0 0.0
        %3265 = vmatpush1.xpose.msra.mxu0 0.0
        %3266 = vmatprep.subr.mxu0 0.0
        %3267 = vmatpush1.xpose.msra.mxu0 0.0
        %3268 = vmatprep.subr.mxu0 0.0
        %3269 = vmatpush1.xpose.msra.mxu0 0.0
        %3270 = vmatprep.subr.mxu0 0.0
        %3271 = vmatpush1.xpose.msra.mxu0 0.0
        %3272 = vmatprep.subr.mxu0 0.0
        %3273 = vmatpush1.xpose.msra.mxu0 0.0
        %3274 = vmatprep.subr.mxu0 0.0
        %3275 = vmatpush1.xpose.msra.mxu0 0.0
        %3276 = vmatprep.subr.mxu0 0.0
        %3277 = vmatpush1.xpose.msra.mxu0 0.0
        %3278 = vmatprep.subr.mxu0 0.0
        %3279 = vmatpush1.xpose.msra.mxu0 0.0
        %3280 = vmatprep.subr.mxu0 0.0
        %3281 = vmatpush1.xpose.msra.mxu0 0.0
        %3282 = vmatprep.subr.mxu0 0.0
        %3283 = vmatpush1.xpose.msra.mxu0 0.0
        %3284 = vmatprep.subr.mxu0 0.0
        %3285 = vmatpush1.xpose.msra.mxu0 0.0
        %3286 = vmatprep.subr.mxu0 0.0
        %3287 = vmatpush1.xpose.msra.mxu0 0.0
        %3288 = vmatprep.subr.mxu0 0.0
        %3289 = vmatpush1.xpose.msra.mxu0 0.0
        %3290 = vmatprep.subr.mxu0 0.0
        %3291 = vmatpush1.xpose.msra.mxu0 0.0
        %3292 = vmatprep.subr.mxu0 0.0
        %3293 = vmatpush1.xpose.msra.mxu0 0.0
        %3294 = vmatprep.subr.mxu0 0.0
        %3295 = vmatpush1.xpose.msra.mxu0 0.0
        %3296 = vmatprep.subr.mxu0 0.0
        %3297 = vmatpush1.xpose.msra.mxu0 0.0
        %3298 = vmatprep.subr.mxu0 0.0
        %3299 = vmatpush1.xpose.msra.mxu0 0.0
        %3300 = vmatprep.subr.mxu0 0.0
        %3301 = vmatpush1.xpose.msra.mxu0 0.0
        %3302 = vmatprep.subr.mxu0 0.0
        %3303 = vmatpush1.xpose.msra.mxu0 0.0
        %3304 = vmatprep.subr.mxu0 0.0
        %3305 = vmatpush1.xpose.msra.mxu0 0.0
        %3306 = vmatprep.mubr.f32.mxu0 0.0
        %v3307 = vand.u32 %v2934, 4294901760
        %3308 = vmatmul.mubr.f32.gmra.mrb[0].mxu0 %v3307
        %v3309 = vpop.f32.mrb[0].mxu0
        %v3310 = vadd.f32 %v3236, %v3309
        %v3311 = vpop.f32.mrb[0].mxu0
        %3312 = vdwg.mxu0
        %3313 = vmatprep.subr.mxu0 0.0
        %v3314 = vand.u32 %v2937, 4294901760
        %3315 = vmatpush1.xpose.msra.mxu0 %v3314
        %3316 = vmatprep.subr.mxu0 0.0
        %3317 = vmatpush1.xpose.msra.mxu0 0.0
        %3318 = vmatprep.subr.mxu0 0.0
        %3319 = vmatpush1.xpose.msra.mxu0 0.0
        %3320 = vmatprep.subr.mxu0 0.0
        %3321 = vmatpush1.xpose.msra.mxu0 0.0
        %3322 = vmatprep.subr.mxu0 0.0
        %3323 = vmatpush1.xpose.msra.mxu0 0.0
        %3324 = vmatprep.subr.mxu0 0.0
        %3325 = vmatpush1.xpose.msra.mxu0 0.0
        %3326 = vmatprep.subr.mxu0 0.0
        %3327 = vmatpush1.xpose.msra.mxu0 0.0
        %3328 = vmatprep.subr.mxu0 0.0
        %3329 = vmatpush1.xpose.msra.mxu0 0.0
        %3330 = vmatprep.subr.mxu0 0.0
        %3331 = vmatpush1.xpose.msra.mxu0 0.0
        %3332 = vmatprep.subr.mxu0 0.0
        %3333 = vmatpush1.xpose.msra.mxu0 0.0
        %3334 = vmatprep.subr.mxu0 0.0
        %3335 = vmatpush1.xpose.msra.mxu0 0.0
        %3336 = vmatprep.subr.mxu0 0.0
        %3337 = vmatpush1.xpose.msra.mxu0 0.0
        %3338 = vmatprep.subr.mxu0 0.0
        %3339 = vmatpush1.xpose.msra.mxu0 0.0
        %3340 = vmatprep.subr.mxu0 0.0
        %3341 = vmatpush1.xpose.msra.mxu0 0.0
        %3342 = vmatprep.subr.mxu0 0.0
        %3343 = vmatpush1.xpose.msra.mxu0 0.0
        %3344 = vmatprep.subr.mxu0 0.0
        %3345 = vmatpush1.xpose.msra.mxu0 0.0
        %3346 = vmatprep.subr.mxu0 0.0
        %3347 = vmatpush1.xpose.msra.mxu0 0.0
        %3348 = vmatprep.subr.mxu0 0.0
        %3349 = vmatpush1.xpose.msra.mxu0 0.0
        %3350 = vmatprep.subr.mxu0 0.0
        %3351 = vmatpush1.xpose.msra.mxu0 0.0
        %3352 = vmatprep.subr.mxu0 0.0
        %3353 = vmatpush1.xpose.msra.mxu0 0.0
        %3354 = vmatprep.subr.mxu0 0.0
        %3355 = vmatpush1.xpose.msra.mxu0 0.0
        %3356 = vmatprep.subr.mxu0 0.0
        %3357 = vmatpush1.xpose.msra.mxu0 0.0
        %3358 = vmatprep.subr.mxu0 0.0
        %3359 = vmatpush1.xpose.msra.mxu0 0.0
        %3360 = vmatprep.subr.mxu0 0.0
        %3361 = vmatpush1.xpose.msra.mxu0 0.0
        %3362 = vmatprep.subr.mxu0 0.0
        %3363 = vmatpush1.xpose.msra.mxu0 0.0
        %3364 = vmatprep.subr.mxu0 0.0
        %3365 = vmatpush1.xpose.msra.mxu0 0.0
        %3366 = vmatprep.subr.mxu0 0.0
        %3367 = vmatpush1.xpose.msra.mxu0 0.0
        %3368 = vmatprep.subr.mxu0 0.0
        %3369 = vmatpush1.xpose.msra.mxu0 0.0
        %3370 = vmatprep.subr.mxu0 0.0
        %3371 = vmatpush1.xpose.msra.mxu0 0.0
        %3372 = vmatprep.subr.mxu0 0.0
        %3373 = vmatpush1.xpose.msra.mxu0 0.0
        %3374 = vmatprep.subr.mxu0 0.0
        %3375 = vmatpush1.xpose.msra.mxu0 0.0
        %3376 = vmatprep.subr.mxu0 0.0
        %3377 = vmatpush1.xpose.msra.mxu0 0.0
        %3378 = vmatprep.mubr.f32.mxu0 0.0
        %v3379 = vand.u32 %v2934, 4294901760
        %3380 = vmatmul.mubr.f32.gmra.mrb[0].mxu0 %v3379
        %v3381 = vpop.f32.mrb[0].mxu0
        %v3382 = vadd.f32 %v3310, %v3381
        %v3383 = vpop.f32.mrb[0].mxu0
        %3384 = vdwg.mxu0
        %v3385 = vadd.f32 %v2930, %v3382
        %v3386 = vmul.f32 %v3385, 0.5
        %vm3387 = vcmask 27648
        %v3388 = vsel %vm3387, %v3386, -inf
        %3389 = vmax.xlane.f32.xlu0 %v3388
        %v3390 = vpop.xlane.xlu0 %3389
        %v3391 = vsub.f32 %v3386, %v3390
        %v3392 = vmul.f32 %v3391, 1.442695
        %v3393 = vpow.pop %v3392
        %v3394 = vsel %vm3387, %v3393, 0.0
        %3395 = vadd.xlane.f32.xlu0 %v3394
        %v3396 = vpop.xlane.xlu0 %3395
        %v3397 = vrcp.pop %v3396
        %v3398 = vmul.f32 %v3393, %v3397
        %v3400 = vsel %vm679, %v3398, 0
        %v3403 = vsel %vm663, %v673, 0
        %3405 = vmatprep.subr.mxu0 0.0
        %v3406 = vand.u32 %v3403, 4294901760
        %3407 = vmatpush1.msra.mxu0 %v3406
        %3408 = vmatprep.subr.mxu0 0.0
        %3409 = vmatpush1.msra.mxu0 0.0
        %3410 = vmatprep.subr.mxu0 0.0
        %3411 = vmatpush1.msra.mxu0 0.0
        %3412 = vmatprep.subr.mxu0 0.0
        %3413 = vmatpush1.msra.mxu0 0.0
        %3414 = vmatprep.subr.mxu0 0.0
        %3415 = vmatpush1.msra.mxu0 0.0
        %3416 = vmatprep.subr.mxu0 0.0
        %3417 = vmatpush1.msra.mxu0 0.0
        %3418 = vmatprep.subr.mxu0 0.0
        %3419 = vmatpush1.msra.mxu0 0.0
        %3420 = vmatprep.subr.mxu0 0.0
        %3421 = vmatpush1.msra.mxu0 0.0
        %3422 = vmatprep.subr.mxu0 0.0
        %3423 = vmatpush1.msra.mxu0 0.0
        %3424 = vmatprep.subr.mxu0 0.0
        %3425 = vmatpush1.msra.mxu0 0.0
        %3426 = vmatprep.subr.mxu0 0.0
        %3427 = vmatpush1.msra.mxu0 0.0
        %3428 = vmatprep.subr.mxu0 0.0
        %3429 = vmatpush1.msra.mxu0 0.0
        %3430 = vmatprep.subr.mxu0 0.0
        %3431 = vmatpush1.msra.mxu0 0.0
        %3432 = vmatprep.subr.mxu0 0.0
        %3433 = vmatpush1.msra.mxu0 0.0
        %3434 = vmatprep.subr.mxu0 0.0
        %3435 = vmatpush1.msra.mxu0 0.0
        %3436 = vmatprep.subr.mxu0 0.0
        %3437 = vmatpush1.msra.mxu0 0.0
        %3438 = vmatprep.subr.mxu0 0.0
        %3439 = vmatpush1.msra.mxu0 0.0
        %3440 = vmatprep.subr.mxu0 0.0
        %3441 = vmatpush1.msra.mxu0 0.0
        %3442 = vmatprep.subr.mxu0 0.0
        %3443 = vmatpush1.msra.mxu0 0.0
        %3444 = vmatprep.subr.mxu0 0.0
        %3445 = vmatpush1.msra.mxu0 0.0
        %3446 = vmatprep.subr.mxu0 0.0
        %3447 = vmatpush1.msra.mxu0 0.0
        %3448 = vmatprep.subr.mxu0 0.0
        %3449 = vmatpush1.msra.mxu0 0.0
        %3450 = vmatprep.subr.mxu0 0.0
        %3451 = vmatpush1.msra.mxu0 0.0
        %3452 = vmatprep.subr.mxu0 0.0
        %3453 = vmatpush1.msra.mxu0 0.0
        %3454 = vmatprep.subr.mxu0 0.0
        %3455 = vmatpush1.msra.mxu0 0.0
        %3456 = vmatprep.subr.mxu0 0.0
        %3457 = vmatpush1.msra.mxu0 0.0
        %3458 = vmatprep.subr.mxu0 0.0
        %3459 = vmatpush1.msra.mxu0 0.0
        %3460 = vmatprep.subr.mxu0 0.0
        %3461 = vmatpush1.msra.mxu0 0.0
        %3462 = vmatprep.subr.mxu0 0.0
        %3463 = vmatpush1.msra.mxu0 0.0
        %3464 = vmatprep.subr.mxu0 0.0
        %3465 = vmatpush1.msra.mxu0 0.0
        %3466 = vmatprep.subr.mxu0 0.0
        %3467 = vmatpush1.msra.mxu0 0.0
        %3468 = vmatprep.subr.mxu0 0.0
        %3469 = vmatpush1.msra.mxu0 0.0
        %3470 = vmatprep.mubr.f32.mxu0 0.0
        %v3471 = vand.u32 %v3400, 4294901760
        %v3472 = vsub.f32 %v3400, %v3471
        %v3473 = vand.u32 %v3472, 4294901760
        %v3474 = vsub.f32 %v3472, %v3473
        %v3475 = vand.u32 %v3474, 4294901760
        %3476 = vmatmul.mubr.f32.gmra.mrb[0].mxu0 %v3475
        %v3477 = vpop.f32.mrb[0].mxu0
        %v3478 = vadd.f32 0.0, %v3477
        %v3479 = vpop.f32.mrb[0].mxu0
        %3480 = vdwg.mxu0
        %3481 = vmatprep.subr.mxu0 0.0
        %v3482 = vand.u32 %v3403, 4294901760
        %v3483 = vsub.f32 %v3403, %v3482
        %v3484 = vand.u32 %v3483, 4294901760
        %v3485 = vsub.f32 %v3483, %v3484
        %v3486 = vand.u32 %v3485, 4294901760
        %3487 = vmatpush1.msra.mxu0 %v3486
        %3488 = vmatprep.subr.mxu0 0.0
        %3489 = vmatpush1.msra.mxu0 0.0
        %3490 = vmatprep.subr.mxu0 0.0
        %3491 = vmatpush1.msra.mxu0 0.0
        %3492 = vmatprep.subr.mxu0 0.0
        %3493 = vmatpush1.msra.mxu0 0.0
        %3494 = vmatprep.subr.mxu0 0.0
        %3495 = vmatpush1.msra.mxu0 0.0
        %3496 = vmatprep.subr.mxu0 0.0
        %3497 = vmatpush1.msra.mxu0 0.0
        %3498 = vmatprep.subr.mxu0 0.0
        %3499 = vmatpush1.msra.mxu0 0.0
        %3500 = vmatprep.subr.mxu0 0.0
        %3501 = vmatpush1.msra.mxu0 0.0
        %3502 = vmatprep.subr.mxu0 0.0
        %3503 = vmatpush1.msra.mxu0 0.0
        %3504 = vmatprep.subr.mxu0 0.0
        %3505 = vmatpush1.msra.mxu0 0.0
        %3506 = vmatprep.subr.mxu0 0.0
        %3507 = vmatpush1.msra.mxu0 0.0
        %3508 = vmatprep.subr.mxu0 0.0
        %3509 = vmatpush1.msra.mxu0 0.0
        %3510 = vmatprep.subr.mxu0 0.0
        %3511 = vmatpush1.msra.mxu0 0.0
        %3512 = vmatprep.subr.mxu0 0.0
        %3513 = vmatpush1.msra.mxu0 0.0
        %3514 = vmatprep.subr.mxu0 0.0
        %3515 = vmatpush1.msra.mxu0 0.0
        %3516 = vmatprep.subr.mxu0 0.0
        %3517 = vmatpush1.msra.mxu0 0.0
        %3518 = vmatprep.subr.mxu0 0.0
        %3519 = vmatpush1.msra.mxu0 0.0
        %3520 = vmatprep.subr.mxu0 0.0
        %3521 = vmatpush1.msra.mxu0 0.0
        %3522 = vmatprep.subr.mxu0 0.0
        %3523 = vmatpush1.msra.mxu0 0.0
        %3524 = vmatprep.subr.mxu0 0.0
        %3525 = vmatpush1.msra.mxu0 0.0
        %3526 = vmatprep.subr.mxu0 0.0
        %3527 = vmatpush1.msra.mxu0 0.0
        %3528 = vmatprep.subr.mxu0 0.0
        %3529 = vmatpush1.msra.mxu0 0.0
        %3530 = vmatprep.subr.mxu0 0.0
        %3531 = vmatpush1.msra.mxu0 0.0
        %3532 = vmatprep.subr.mxu0 0.0
        %3533 = vmatpush1.msra.mxu0 0.0
        %3534 = vmatprep.subr.mxu0 0.0
        %3535 = vmatpush1.msra.mxu0 0.0
        %3536 = vmatprep.subr.mxu0 0.0
        %3537 = vmatpush1.msra.mxu0 0.0
        %3538 = vmatprep.subr.mxu0 0.0
        %3539 = vmatpush1.msra.mxu0 0.0
        %3540 = vmatprep.subr.mxu0 0.0
        %3541 = vmatpush1.msra.mxu0 0.0
        %3542 = vmatprep.subr.mxu0 0.0
        %3543 = vmatpush1.msra.mxu0 0.0
        %3544 = vmatprep.subr.mxu0 0.0
        %3545 = vmatpush1.msra.mxu0 0.0
        %3546 = vmatprep.subr.mxu0 0.0
        %3547 = vmatpush1.msra.mxu0 0.0
        %3548 = vmatprep.subr.mxu0 0.0
        %3549 = vmatpush1.msra.mxu0 0.0
        %3550 = vmatprep.mubr.f32.mxu0 0.0
        %v3551 = vand.u32 %v3400, 4294901760
        %3552 = vmatmul.mubr.f32.gmra.mrb[0].mxu0 %v3551
        %v3553 = vpop.f32.mrb[0].mxu0
        %v3554 = vadd.f32 %v3478, %v3553
        %v3555 = vpop.f32.mrb[0].mxu0
        %3556 = vdwg.mxu0
        %3557 = vmatprep.subr.mxu0 0.0
        %v3558 = vand.u32 %v3403, 4294901760
        %v3559 = vsub.f32 %v3403, %v3558
        %3560 = vmatpush1.msra.mxu0 %v3559
        %3561 = vmatprep.subr.mxu0 0.0
        %3562 = vmatpush1.msra.mxu0 0.0
        %3563 = vmatprep.subr.mxu0 0.0
        %3564 = vmatpush1.msra.mxu0 0.0
        %3565 = vmatprep.subr.mxu0 0.0
        %3566 = vmatpush1.msra.mxu0 0.0
        %3567 = vmatprep.subr.mxu0 0.0
        %3568 = vmatpush1.msra.mxu0 0.0
        %3569 = vmatprep.subr.mxu0 0.0
        %3570 = vmatpush1.msra.mxu0 0.0
        %3571 = vmatprep.subr.mxu0 0.0
        %3572 = vmatpush1.msra.mxu0 0.0
        %3573 = vmatprep.subr.mxu0 0.0
        %3574 = vmatpush1.msra.mxu0 0.0
        %3575 = vmatprep.subr.mxu0 0.0
        %3576 = vmatpush1.msra.mxu0 0.0
        %3577 = vmatprep.subr.mxu0 0.0
        %3578 = vmatpush1.msra.mxu0 0.0
        %3579 = vmatprep.subr.mxu0 0.0
        %3580 = vmatpush1.msra.mxu0 0.0
        %3581 = vmatprep.subr.mxu0 0.0
        %3582 = vmatpush1.msra.mxu0 0.0
        %3583 = vmatprep.subr.mxu0 0.0
        %3584 = vmatpush1.msra.mxu0 0.0
        %3585 = vmatprep.subr.mxu0 0.0
        %3586 = vmatpush1.msra.mxu0 0.0
        %3587 = vmatprep.subr.mxu0 0.0
        %3588 = vmatpush1.msra.mxu0 0.0
        %3589 = vmatprep.subr.mxu0 0.0
        %3590 = vmatpush1.msra.mxu0 0.0
        %3591 = vmatprep.subr.mxu0 0.0
        %3592 = vmatpush1.msra.mxu0 0.0
        %3593 = vmatprep.subr.mxu0 0.0
        %3594 = vmatpush1.msra.mxu0 0.0
        %3595 = vmatprep.subr.mxu0 0.0
        %3596 = vmatpush1.msra.mxu0 0.0
        %3597 = vmatprep.subr.mxu0 0.0
        %3598 = vmatpush1.msra.mxu0 0.0
        %3599 = vmatprep.subr.mxu0 0.0
        %3600 = vmatpush1.msra.mxu0 0.0
        %3601 = vmatprep.subr.mxu0 0.0
        %3602 = vmatpush1.msra.mxu0 0.0
        %3603 = vmatprep.subr.mxu0 0.0
        %3604 = vmatpush1.msra.mxu0 0.0
        %3605 = vmatprep.subr.mxu0 0.0
        %3606 = vmatpush1.msra.mxu0 0.0
        %3607 = vmatprep.subr.mxu0 0.0
        %3608 = vmatpush1.msra.mxu0 0.0
        %3609 = vmatprep.subr.mxu0 0.0
        %3610 = vmatpush1.msra.mxu0 0.0
        %3611 = vmatprep.subr.mxu0 0.0
        %3612 = vmatpush1.msra.mxu0 0.0
        %3613 = vmatprep.subr.mxu0 0.0
        %3614 = vmatpush1.msra.mxu0 0.0
        %3615 = vmatprep.subr.mxu0 0.0
        %3616 = vmatpush1.msra.mxu0 0.0
        %3617 = vmatprep.subr.mxu0 0.0
        %3618 = vmatpush1.msra.mxu0 0.0
        %3619 = vmatprep.subr.mxu0 0.0
        %3620 = vmatpush1.msra.mxu0 0.0
        %3621 = vmatprep.subr.mxu0 0.0
        %3622 = vmatpush1.msra.mxu0 0.0
        %3623 = vmatprep.mubr.f32.mxu0 0.0
        %v3624 = vand.u32 %v3400, 4294901760
        %v3625 = vsub.f32 %v3400, %v3624
        %3626 = vmatmul.mubr.f32.gmra.mrb[0].mxu0 %v3625
        %v3627 = vpop.f32.mrb[0].mxu0
        %v3628 = vadd.f32 %v3554, %v3627
        %v3629 = vpop.f32.mrb[0].mxu0
        %3630 = vdwg.mxu0
        %3631 = vmatprep.subr.mxu0 0.0
        %v3632 = vand.u32 %v3403, 4294901760
        %3633 = vmatpush1.msra.mxu0 %v3632
        %3634 = vmatprep.subr.mxu0 0.0
        %3635 = vmatpush1.msra.mxu0 0.0
        %3636 = vmatprep.subr.mxu0 0.0
        %3637 = vmatpush1.msra.mxu0 0.0
        %3638 = vmatprep.subr.mxu0 0.0
        %3639 = vmatpush1.msra.mxu0 0.0
        %3640 = vmatprep.subr.mxu0 0.0
        %3641 = vmatpush1.msra.mxu0 0.0
        %3642 = vmatprep.subr.mxu0 0.0
        %3643 = vmatpush1.msra.mxu0 0.0
        %3644 = vmatprep.subr.mxu0 0.0
        %3645 = vmatpush1.msra.mxu0 0.0
        %3646 = vmatprep.subr.mxu0 0.0
        %3647 = vmatpush1.msra.mxu0 0.0
        %3648 = vmatprep.subr.mxu0 0.0
        %3649 = vmatpush1.msra.mxu0 0.0
        %3650 = vmatprep.subr.mxu0 0.0
        %3651 = vmatpush1.msra.mxu0 0.0
        %3652 = vmatprep.subr.mxu0 0.0
        %3653 = vmatpush1.msra.mxu0 0.0
        %3654 = vmatprep.subr.mxu0 0.0
        %3655 = vmatpush1.msra.mxu0 0.0
        %3656 = vmatprep.subr.mxu0 0.0
        %3657 = vmatpush1.msra.mxu0 0.0
        %3658 = vmatprep.subr.mxu0 0.0
        %3659 = vmatpush1.msra.mxu0 0.0
        %3660 = vmatprep.subr.mxu0 0.0
        %3661 = vmatpush1.msra.mxu0 0.0
        %3662 = vmatprep.subr.mxu0 0.0
        %3663 = vmatpush1.msra.mxu0 0.0
        %3664 = vmatprep.subr.mxu0 0.0
        %3665 = vmatpush1.msra.mxu0 0.0
        %3666 = vmatprep.subr.mxu0 0.0
        %3667 = vmatpush1.msra.mxu0 0.0
        %3668 = vmatprep.subr.mxu0 0.0
        %3669 = vmatpush1.msra.mxu0 0.0
        %3670 = vmatprep.subr.mxu0 0.0
        %3671 = vmatpush1.msra.mxu0 0.0
        %3672 = vmatprep.subr.mxu0 0.0
        %3673 = vmatpush1.msra.mxu0 0.0
        %3674 = vmatprep.subr.mxu0 0.0
        %3675 = vmatpush1.msra.mxu0 0.0
        %3676 = vmatprep.subr.mxu0 0.0
        %3677 = vmatpush1.msra.mxu0 0.0
        %3678 = vmatprep.subr.mxu0 0.0
        %3679 = vmatpush1.msra.mxu0 0.0
        %3680 = vmatprep.subr.mxu0 0.0
        %3681 = vmatpush1.msra.mxu0 0.0
        %3682 = vmatprep.subr.mxu0 0.0
        %3683 = vmatpush1.msra.mxu0 0.0
        %3684 = vmatprep.subr.mxu0 0.0
        %3685 = vmatpush1.msra.mxu0 0.0
        %3686 = vmatprep.subr.mxu0 0.0
        %3687 = vmatpush1.msra.mxu0 0.0
        %3688 = vmatprep.subr.mxu0 0.0
        %3689 = vmatpush1.msra.mxu0 0.0
        %3690 = vmatprep.subr.mxu0 0.0
        %3691 = vmatpush1.msra.mxu0 0.0
        %3692 = vmatprep.subr.mxu0 0.0
        %3693 = vmatpush1.msra.mxu0 0.0
        %3694 = vmatprep.subr.mxu0 0.0
        %3695 = vmatpush1.msra.mxu0 0.0
        %3696 = vmatprep.mubr.f32.mxu0 0.0
        %v3697 = vand.u32 %v3400, 4294901760
        %v3698 = vsub.f32 %v3400, %v3697
        %v3699 = vand.u32 %v3698, 4294901760
        %3700 = vmatmul.mubr.f32.gmra.mrb[0].mxu0 %v3699
        %v3701 = vpop.f32.mrb[0].mxu0
        %v3702 = vadd.f32 %v3628, %v3701
        %v3703 = vpop.f32.mrb[0].mxu0
        %3704 = vdwg.mxu0
        %3705 = vmatprep.subr.mxu0 0.0
        %v3706 = vand.u32 %v3403, 4294901760
        %v3707 = vsub.f32 %v3403, %v3706
        %v3708 = vand.u32 %v3707, 4294901760
        %3709 = vmatpush1.msra.mxu0 %v3708
        %3710 = vmatprep.subr.mxu0 0.0
        %3711 = vmatpush1.msra.mxu0 0.0
        %3712 = vmatprep.subr.mxu0 0.0
        %3713 = vmatpush1.msra.mxu0 0.0
        %3714 = vmatprep.subr.mxu0 0.0
        %3715 = vmatpush1.msra.mxu0 0.0
        %3716 = vmatprep.subr.mxu0 0.0
        %3717 = vmatpush1.msra.mxu0 0.0
        %3718 = vmatprep.subr.mxu0 0.0
        %3719 = vmatpush1.msra.mxu0 0.0
        %3720 = vmatprep.subr.mxu0 0.0
        %3721 = vmatpush1.msra.mxu0 0.0
        %3722 = vmatprep.subr.mxu0 0.0
        %3723 = vmatpush1.msra.mxu0 0.0
        %3724 = vmatprep.subr.mxu0 0.0
        %3725 = vmatpush1.msra.mxu0 0.0
        %3726 = vmatprep.subr.mxu0 0.0
        %3727 = vmatpush1.msra.mxu0 0.0
        %3728 = vmatprep.subr.mxu0 0.0
        %3729 = vmatpush1.msra.mxu0 0.0
        %3730 = vmatprep.subr.mxu0 0.0
        %3731 = vmatpush1.msra.mxu0 0.0
        %3732 = vmatprep.subr.mxu0 0.0
        %3733 = vmatpush1.msra.mxu0 0.0
        %3734 = vmatprep.subr.mxu0 0.0
        %3735 = vmatpush1.msra.mxu0 0.0
        %3736 = vmatprep.subr.mxu0 0.0
        %3737 = vmatpush1.msra.mxu0 0.0
        %3738 = vmatprep.subr.mxu0 0.0
        %3739 = vmatpush1.msra.mxu0 0.0
        %3740 = vmatprep.subr.mxu0 0.0
        %3741 = vmatpush1.msra.mxu0 0.0
        %3742 = vmatprep.subr.mxu0 0.0
        %3743 = vmatpush1.msra.mxu0 0.0
        %3744 = vmatprep.subr.mxu0 0.0
        %3745 = vmatpush1.msra.mxu0 0.0
        %3746 = vmatprep.subr.mxu0 0.0
        %3747 = vmatpush1.msra.mxu0 0.0
        %3748 = vmatprep.subr.mxu0 0.0
        %3749 = vmatpush1.msra.mxu0 0.0
        %3750 = vmatprep.subr.mxu0 0.0
        %3751 = vmatpush1.msra.mxu0 0.0
        %3752 = vmatprep.subr.mxu0 0.0
        %3753 = vmatpush1.msra.mxu0 0.0
        %3754 = vmatprep.subr.mxu0 0.0
        %3755 = vmatpush1.msra.mxu0 0.0
        %3756 = vmatprep.subr.mxu0 0.0
        %3757 = vmatpush1.msra.mxu0 0.0
        %3758 = vmatprep.subr.mxu0 0.0
        %3759 = vmatpush1.msra.mxu0 0.0
        %3760 = vmatprep.subr.mxu0 0.0
        %3761 = vmatpush1.msra.mxu0 0.0
        %3762 = vmatprep.subr.mxu0 0.0
        %3763 = vmatpush1.msra.mxu0 0.0
        %3764 = vmatprep.subr.mxu0 0.0
        %3765 = vmatpush1.msra.mxu0 0.0
        %3766 = vmatprep.subr.mxu0 0.0
        %3767 = vmatpush1.msra.mxu0 0.0
        %3768 = vmatprep.subr.mxu0 0.0
        %3769 = vmatpush1.msra.mxu0 0.0
        %3770 = vmatprep.subr.mxu0 0.0
        %3771 = vmatpush1.msra.mxu0 0.0
        %3772 = vmatprep.mubr.f32.mxu0 0.0
        %v3773 = vand.u32 %v3400, 4294901760
        %3774 = vmatmul.mubr.f32.gmra.mrb[0].mxu0 %v3773
        %v3775 = vpop.f32.mrb[0].mxu0
        %v3776 = vadd.f32 %v3702, %v3775
        %v3777 = vpop.f32.mrb[0].mxu0
        %3778 = vdwg.mxu0
        %3779 = vmatprep.subr.mxu0 0.0
        %v3780 = vand.u32 %v3403, 4294901760
        %3781 = vmatpush1.msra.mxu0 %v3780
        %3782 = vmatprep.subr.mxu0 0.0
        %3783 = vmatpush1.msra.mxu0 0.0
        %3784 = vmatprep.subr.mxu0 0.0
        %3785 = vmatpush1.msra.mxu0 0.0
        %3786 = vmatprep.subr.mxu0 0.0
        %3787 = vmatpush1.msra.mxu0 0.0
        %3788 = vmatprep.subr.mxu0 0.0
        %3789 = vmatpush1.msra.mxu0 0.0
        %3790 = vmatprep.subr.mxu0 0.0
        %3791 = vmatpush1.msra.mxu0 0.0
        %3792 = vmatprep.subr.mxu0 0.0
        %3793 = vmatpush1.msra.mxu0 0.0
        %3794 = vmatprep.subr.mxu0 0.0
        %3795 = vmatpush1.msra.mxu0 0.0
        %3796 = vmatprep.subr.mxu0 0.0
        %3797 = vmatpush1.msra.mxu0 0.0
        %3798 = vmatprep.subr.mxu0 0.0
        %3799 = vmatpush1.msra.mxu0 0.0
        %3800 = vmatprep.subr.mxu0 0.0
        %3801 = vmatpush1.msra.mxu0 0.0
        %3802 = vmatprep.subr.mxu0 0.0
        %3803 = vmatpush1.msra.mxu0 0.0
        %3804 = vmatprep.subr.mxu0 0.0
        %3805 = vmatpush1.msra.mxu0 0.0
        %3806 = vmatprep.subr.mxu0 0.0
        %3807 = vmatpush1.msra.mxu0 0.0
        %3808 = vmatprep.subr.mxu0 0.0
        %3809 = vmatpush1.msra.mxu0 0.0
        %3810 = vmatprep.subr.mxu0 0.0
        %3811 = vmatpush1.msra.mxu0 0.0
        %3812 = vmatprep.subr.mxu0 0.0
        %3813 = vmatpush1.msra.mxu0 0.0
        %3814 = vmatprep.subr.mxu0 0.0
        %3815 = vmatpush1.msra.mxu0 0.0
        %3816 = vmatprep.subr.mxu0 0.0
        %3817 = vmatpush1.msra.mxu0 0.0
        %3818 = vmatprep.subr.mxu0 0.0
        %3819 = vmatpush1.msra.mxu0 0.0
        %3820 = vmatprep.subr.mxu0 0.0
        %3821 = vmatpush1.msra.mxu0 0.0
        %3822 = vmatprep.subr.mxu0 0.0
        %3823 = vmatpush1.msra.mxu0 0.0
        %3824 = vmatprep.subr.mxu0 0.0
        %3825 = vmatpush1.msra.mxu0 0.0
        %3826 = vmatprep.subr.mxu0 0.0
        %3827 = vmatpush1.msra.mxu0 0.0
        %3828 = vmatprep.subr.mxu0 0.0
        %3829 = vmatpush1.msra.mxu0 0.0
        %3830 = vmatprep.subr.mxu0 0.0
        %3831 = vmatpush1.msra.mxu0 0.0
        %3832 = vmatprep.subr.mxu0 0.0
        %3833 = vmatpush1.msra.mxu0 0.0
        %3834 = vmatprep.subr.mxu0 0.0
        %3835 = vmatpush1.msra.mxu0 0.0
        %3836 = vmatprep.subr.mxu0 0.0
        %3837 = vmatpush1.msra.mxu0 0.0
        %3838 = vmatprep.subr.mxu0 0.0
        %3839 = vmatpush1.msra.mxu0 0.0
        %3840 = vmatprep.subr.mxu0 0.0
        %3841 = vmatpush1.msra.mxu0 0.0
        %3842 = vmatprep.subr.mxu0 0.0
        %3843 = vmatpush1.msra.mxu0 0.0
        %3844 = vmatprep.mubr.f32.mxu0 0.0
        %v3845 = vand.u32 %v3400, 4294901760
        %3846 = vmatmul.mubr.f32.gmra.mrb[0].mxu0 %v3845
        %v3847 = vpop.f32.mrb[0].mxu0
        %v3848 = vadd.f32 %v3776, %v3847
        %v3849 = vpop.f32.mrb[0].mxu0
        %3850 = vdwg.mxu0
        %v3852 = vsel %vm663, %v678, 0
        %3854 = vmatprep.subr.mxu0 0.0
        %v3855 = vand.u32 %v3852, 4294901760
        %3856 = vmatpush1.msra.mxu0 %v3855
        %3857 = vmatprep.subr.mxu0 0.0
        %3858 = vmatpush1.msra.mxu0 0.0
        %3859 = vmatprep.subr.mxu0 0.0
        %3860 = vmatpush1.msra.mxu0 0.0
        %3861 = vmatprep.subr.mxu0 0.0
        %3862 = vmatpush1.msra.mxu0 0.0
        %3863 = vmatprep.subr.mxu0 0.0
        %3864 = vmatpush1.msra.mxu0 0.0
        %3865 = vmatprep.subr.mxu0 0.0
        %3866 = vmatpush1.msra.mxu0 0.0
        %3867 = vmatprep.subr.mxu0 0.0
        %3868 = vmatpush1.msra.mxu0 0.0
        %3869 = vmatprep.subr.mxu0 0.0
        %3870 = vmatpush1.msra.mxu0 0.0
        %3871 = vmatprep.subr.mxu0 0.0
        %3872 = vmatpush1.msra.mxu0 0.0
        %3873 = vmatprep.subr.mxu0 0.0
        %3874 = vmatpush1.msra.mxu0 0.0
        %3875 = vmatprep.subr.mxu0 0.0
        %3876 = vmatpush1.msra.mxu0 0.0
        %3877 = vmatprep.subr.mxu0 0.0
        %3878 = vmatpush1.msra.mxu0 0.0
        %3879 = vmatprep.subr.mxu0 0.0
        %3880 = vmatpush1.msra.mxu0 0.0
        %3881 = vmatprep.subr.mxu0 0.0
        %3882 = vmatpush1.msra.mxu0 0.0
        %3883 = vmatprep.subr.mxu0 0.0
        %3884 = vmatpush1.msra.mxu0 0.0
        %3885 = vmatprep.subr.mxu0 0.0
        %3886 = vmatpush1.msra.mxu0 0.0
        %3887 = vmatprep.subr.mxu0 0.0
        %3888 = vmatpush1.msra.mxu0 0.0
        %3889 = vmatprep.subr.mxu0 0.0
        %3890 = vmatpush1.msra.mxu0 0.0
        %3891 = vmatprep.subr.mxu0 0.0
        %3892 = vmatpush1.msra.mxu0 0.0
        %3893 = vmatprep.subr.mxu0 0.0
        %3894 = vmatpush1.msra.mxu0 0.0
        %3895 = vmatprep.subr.mxu0 0.0
        %3896 = vmatpush1.msra.mxu0 0.0
        %3897 = vmatprep.subr.mxu0 0.0
        %3898 = vmatpush1.msra.mxu0 0.0
        %3899 = vmatprep.subr.mxu0 0.0
        %3900 = vmatpush1.msra.mxu0 0.0
        %3901 = vmatprep.subr.mxu0 0.0
        %3902 = vmatpush1.msra.mxu0 0.0
        %3903 = vmatprep.subr.mxu0 0.0
        %3904 = vmatpush1.msra.mxu0 0.0
        %3905 = vmatprep.subr.mxu0 0.0
        %3906 = vmatpush1.msra.mxu0 0.0
        %3907 = vmatprep.subr.mxu0 0.0
        %3908 = vmatpush1.msra.mxu0 0.0
        %3909 = vmatprep.subr.mxu0 0.0
        %3910 = vmatpush1.msra.mxu0 0.0
        %3911 = vmatprep.subr.mxu0 0.0
        %3912 = vmatpush1.msra.mxu0 0.0
        %3913 = vmatprep.subr.mxu0 0.0
        %3914 = vmatpush1.msra.mxu0 0.0
        %3915 = vmatprep.subr.mxu0 0.0
        %3916 = vmatpush1.msra.mxu0 0.0
        %3917 = vmatprep.subr.mxu0 0.0
        %3918 = vmatpush1.msra.mxu0 0.0
        %3919 = vmatprep.mubr.f32.mxu0 0.0
        %v3920 = vand.u32 %v3400, 4294901760
        %v3921 = vsub.f32 %v3400, %v3920
        %v3922 = vand.u32 %v3921, 4294901760
        %v3923 = vsub.f32 %v3921, %v3922
        %v3924 = vand.u32 %v3923, 4294901760
        %3925 = vmatmul.mubr.f32.gmra.mrb[0].mxu0 %v3924
        %v3926 = vpop.f32.mrb[0].mxu0
        %v3927 = vadd.f32 0.0, %v3926
        %v3928 = vpop.f32.mrb[0].mxu0
        %3929 = vdwg.mxu0
        %3930 = vmatprep.subr.mxu0 0.0
        %v3931 = vand.u32 %v3852, 4294901760
        %v3932 = vsub.f32 %v3852, %v3931
        %v3933 = vand.u32 %v3932, 4294901760
        %v3934 = vsub.f32 %v3932, %v3933
        %v3935 = vand.u32 %v3934, 4294901760
        %3936 = vmatpush1.msra.mxu0 %v3935
        %3937 = vmatprep.subr.mxu0 0.0
        %3938 = vmatpush1.msra.mxu0 0.0
        %3939 = vmatprep.subr.mxu0 0.0
        %3940 = vmatpush1.msra.mxu0 0.0
        %3941 = vmatprep.subr.mxu0 0.0
        %3942 = vmatpush1.msra.mxu0 0.0
        %3943 = vmatprep.subr.mxu0 0.0
        %3944 = vmatpush1.msra.mxu0 0.0
        %3945 = vmatprep.subr.mxu0 0.0
        %3946 = vmatpush1.msra.mxu0 0.0
        %3947 = vmatprep.subr.mxu0 0.0
        %3948 = vmatpush1.msra.mxu0 0.0
        %3949 = vmatprep.subr.mxu0 0.0
        %3950 = vmatpush1.msra.mxu0 0.0
        %3951 = vmatprep.subr.mxu0 0.0
        %3952 = vmatpush1.msra.mxu0 0.0
        %3953 = vmatprep.subr.mxu0 0.0
        %3954 = vmatpush1.msra.mxu0 0.0
        %3955 = vmatprep.subr.mxu0 0.0
        %3956 = vmatpush1.msra.mxu0 0.0
        %3957 = vmatprep.subr.mxu0 0.0
        %3958 = vmatpush1.msra.mxu0 0.0
        %3959 = vmatprep.subr.mxu0 0.0
        %3960 = vmatpush1.msra.mxu0 0.0
        %3961 = vmatprep.subr.mxu0 0.0
        %3962 = vmatpush1.msra.mxu0 0.0
        %3963 = vmatprep.subr.mxu0 0.0
        %3964 = vmatpush1.msra.mxu0 0.0
        %3965 = vmatprep.subr.mxu0 0.0
        %3966 = vmatpush1.msra.mxu0 0.0
        %3967 = vmatprep.subr.mxu0 0.0
        %3968 = vmatpush1.msra.mxu0 0.0
        %3969 = vmatprep.subr.mxu0 0.0
        %3970 = vmatpush1.msra.mxu0 0.0
        %3971 = vmatprep.subr.mxu0 0.0
        %3972 = vmatpush1.msra.mxu0 0.0
        %3973 = vmatprep.subr.mxu0 0.0
        %3974 = vmatpush1.msra.mxu0 0.0
        %3975 = vmatprep.subr.mxu0 0.0
        %3976 = vmatpush1.msra.mxu0 0.0
        %3977 = vmatprep.subr.mxu0 0.0
        %3978 = vmatpush1.msra.mxu0 0.0
        %3979 = vmatprep.subr.mxu0 0.0
        %3980 = vmatpush1.msra.mxu0 0.0
        %3981 = vmatprep.subr.mxu0 0.0
        %3982 = vmatpush1.msra.mxu0 0.0
        %3983 = vmatprep.subr.mxu0 0.0
        %3984 = vmatpush1.msra.mxu0 0.0
        %3985 = vmatprep.subr.mxu0 0.0
        %3986 = vmatpush1.msra.mxu0 0.0
        %3987 = vmatprep.subr.mxu0 0.0
        %3988 = vmatpush1.msra.mxu0 0.0
        %3989 = vmatprep.subr.mxu0 0.0
        %3990 = vmatpush1.msra.mxu0 0.0
        %3991 = vmatprep.subr.mxu0 0.0
        %3992 = vmatpush1.msra.mxu0 0.0
        %3993 = vmatprep.subr.mxu0 0.0
        %3994 = vmatpush1.msra.mxu0 0.0
        %3995 = vmatprep.subr.mxu0 0.0
        %3996 = vmatpush1.msra.mxu0 0.0
        %3997 = vmatprep.subr.mxu0 0.0
        %3998 = vmatpush1.msra.mxu0 0.0
        %3999 = vmatprep.mubr.f32.mxu0 0.0
        %v4000 = vand.u32 %v3400, 4294901760
        %4001 = vmatmul.mubr.f32.gmra.mrb[0].mxu0 %v4000
        %v4002 = vpop.f32.mrb[0].mxu0
        %v4003 = vadd.f32 %v3927, %v4002
        %v4004 = vpop.f32.mrb[0].mxu0
        %4005 = vdwg.mxu0
        %4006 = vmatprep.subr.mxu0 0.0
        %v4007 = vand.u32 %v3852, 4294901760
        %v4008 = vsub.f32 %v3852, %v4007
        %4009 = vmatpush1.msra.mxu0 %v4008
        %4010 = vmatprep.subr.mxu0 0.0
        %4011 = vmatpush1.msra.mxu0 0.0
        %4012 = vmatprep.subr.mxu0 0.0
        %4013 = vmatpush1.msra.mxu0 0.0
        %4014 = vmatprep.subr.mxu0 0.0
        %4015 = vmatpush1.msra.mxu0 0.0
        %4016 = vmatprep.subr.mxu0 0.0
        %4017 = vmatpush1.msra.mxu0 0.0
        %4018 = vmatprep.subr.mxu0 0.0
        %4019 = vmatpush1.msra.mxu0 0.0
        %4020 = vmatprep.subr.mxu0 0.0
        %4021 = vmatpush1.msra.mxu0 0.0
        %4022 = vmatprep.subr.mxu0 0.0
        %4023 = vmatpush1.msra.mxu0 0.0
        %4024 = vmatprep.subr.mxu0 0.0
        %4025 = vmatpush1.msra.mxu0 0.0
        %4026 = vmatprep.subr.mxu0 0.0
        %4027 = vmatpush1.msra.mxu0 0.0
        %4028 = vmatprep.subr.mxu0 0.0
        %4029 = vmatpush1.msra.mxu0 0.0
        %4030 = vmatprep.subr.mxu0 0.0
        %4031 = vmatpush1.msra.mxu0 0.0
        %4032 = vmatprep.subr.mxu0 0.0
        %4033 = vmatpush1.msra.mxu0 0.0
        %4034 = vmatprep.subr.mxu0 0.0
        %4035 = vmatpush1.msra.mxu0 0.0
        %4036 = vmatprep.subr.mxu0 0.0
        %4037 = vmatpush1.msra.mxu0 0.0
        %4038 = vmatprep.subr.mxu0 0.0
        %4039 = vmatpush1.msra.mxu0 0.0
        %4040 = vmatprep.subr.mxu0 0.0
        %4041 = vmatpush1.msra.mxu0 0.0
        %4042 = vmatprep.subr.mxu0 0.0
        %4043 = vmatpush1.msra.mxu0 0.0
        %4044 = vmatprep.subr.mxu0 0.0
        %4045 = vmatpush1.msra.mxu0 0.0
        %4046 = vmatprep.subr.mxu0 0.0
        %4047 = vmatpush1.msra.mxu0 0.0
        %4048 = vmatprep.subr.mxu0 0.0
        %4049 = vmatpush1.msra.mxu0 0.0
        %4050 = vmatprep.subr.mxu0 0.0
        %4051 = vmatpush1.msra.mxu0 0.0
        %4052 = vmatprep.subr.mxu0 0.0
        %4053 = vmatpush1.msra.mxu0 0.0
        %4054 = vmatprep.subr.mxu0 0.0
        %4055 = vmatpush1.msra.mxu0 0.0
        %4056 = vmatprep.subr.mxu0 0.0
        %4057 = vmatpush1.msra.mxu0 0.0
        %4058 = vmatprep.subr.mxu0 0.0
        %4059 = vmatpush1.msra.mxu0 0.0
        %4060 = vmatprep.subr.mxu0 0.0
        %4061 = vmatpush1.msra.mxu0 0.0
        %4062 = vmatprep.subr.mxu0 0.0
        %4063 = vmatpush1.msra.mxu0 0.0
        %4064 = vmatprep.subr.mxu0 0.0
        %4065 = vmatpush1.msra.mxu0 0.0
        %4066 = vmatprep.subr.mxu0 0.0
        %4067 = vmatpush1.msra.mxu0 0.0
        %4068 = vmatprep.subr.mxu0 0.0
        %4069 = vmatpush1.msra.mxu0 0.0
        %4070 = vmatprep.subr.mxu0 0.0
        %4071 = vmatpush1.msra.mxu0 0.0
        %4072 = vmatprep.mubr.f32.mxu0 0.0
        %v4073 = vand.u32 %v3400, 4294901760
        %v4074 = vsub.f32 %v3400, %v4073
        %4075 = vmatmul.mubr.f32.gmra.mrb[0].mxu0 %v4074
        %v4076 = vpop.f32.mrb[0].mxu0
        %v4077 = vadd.f32 %v4003, %v4076
        %v4078 = vpop.f32.mrb[0].mxu0
        %4079 = vdwg.mxu0
        %4080 = vmatprep.subr.mxu0 0.0
        %v4081 = vand.u32 %v3852, 4294901760
        %4082 = vmatpush1.msra.mxu0 %v4081
        %4083 = vmatprep.subr.mxu0 0.0
        %4084 = vmatpush1.msra.mxu0 0.0
        %4085 = vmatprep.subr.mxu0 0.0
        %4086 = vmatpush1.msra.mxu0 0.0
        %4087 = vmatprep.subr.mxu0 0.0
        %4088 = vmatpush1.msra.mxu0 0.0
        %4089 = vmatprep.subr.mxu0 0.0
        %4090 = vmatpush1.msra.mxu0 0.0
        %4091 = vmatprep.subr.mxu0 0.0
        %4092 = vmatpush1.msra.mxu0 0.0
        %4093 = vmatprep.subr.mxu0 0.0
        %4094 = vmatpush1.msra.mxu0 0.0
        %4095 = vmatprep.subr.mxu0 0.0
        %4096 = vmatpush1.msra.mxu0 0.0
        %4097 = vmatprep.subr.mxu0 0.0
        %4098 = vmatpush1.msra.mxu0 0.0
        %4099 = vmatprep.subr.mxu0 0.0
        %4100 = vmatpush1.msra.mxu0 0.0
        %4101 = vmatprep.subr.mxu0 0.0
        %4102 = vmatpush1.msra.mxu0 0.0
        %4103 = vmatprep.subr.mxu0 0.0
        %4104 = vmatpush1.msra.mxu0 0.0
        %4105 = vmatprep.subr.mxu0 0.0
        %4106 = vmatpush1.msra.mxu0 0.0
        %4107 = vmatprep.subr.mxu0 0.0
        %4108 = vmatpush1.msra.mxu0 0.0
        %4109 = vmatprep.subr.mxu0 0.0
        %4110 = vmatpush1.msra.mxu0 0.0
        %4111 = vmatprep.subr.mxu0 0.0
        %4112 = vmatpush1.msra.mxu0 0.0
        %4113 = vmatprep.subr.mxu0 0.0
        %4114 = vmatpush1.msra.mxu0 0.0
        %4115 = vmatprep.subr.mxu0 0.0
        %4116 = vmatpush1.msra.mxu0 0.0
        %4117 = vmatprep.subr.mxu0 0.0
        %4118 = vmatpush1.msra.mxu0 0.0
        %4119 = vmatprep.subr.mxu0 0.0
        %4120 = vmatpush1.msra.mxu0 0.0
        %4121 = vmatprep.subr.mxu0 0.0
        %4122 = vmatpush1.msra.mxu0 0.0
        %4123 = vmatprep.subr.mxu0 0.0
        %4124 = vmatpush1.msra.mxu0 0.0
        %4125 = vmatprep.subr.mxu0 0.0
        %4126 = vmatpush1.msra.mxu0 0.0
        %4127 = vmatprep.subr.mxu0 0.0
        %4128 = vmatpush1.msra.mxu0 0.0
        %4129 = vmatprep.subr.mxu0 0.0
        %4130 = vmatpush1.msra.mxu0 0.0
        %4131 = vmatprep.subr.mxu0 0.0
        %4132 = vmatpush1.msra.mxu0 0.0
        %4133 = vmatprep.subr.mxu0 0.0
        %4134 = vmatpush1.msra.mxu0 0.0
        %4135 = vmatprep.subr.mxu0 0.0
        %4136 = vmatpush1.msra.mxu0 0.0
        %4137 = vmatprep.subr.mxu0 0.0
        %4138 = vmatpush1.msra.mxu0 0.0
        %4139 = vmatprep.subr.mxu0 0.0
        %4140 = vmatpush1.msra.mxu0 0.0
        %4141 = vmatprep.subr.mxu0 0.0
        %4142 = vmatpush1.msra.mxu0 0.0
        %4143 = vmatprep.subr.mxu0 0.0
        %4144 = vmatpush1.msra.mxu0 0.0
        %4145 = vmatprep.mubr.f32.mxu0 0.0
        %v4146 = vand.u32 %v3400, 4294901760
        %v4147 = vsub.f32 %v3400, %v4146
        %v4148 = vand.u32 %v4147, 4294901760
        %4149 = vmatmul.mubr.f32.gmra.mrb[0].mxu0 %v4148
        %v4150 = vpop.f32.mrb[0].mxu0
        %v4151 = vadd.f32 %v4077, %v4150
        %v4152 = vpop.f32.mrb[0].mxu0
        %4153 = vdwg.mxu0
        %4154 = vmatprep.subr.mxu0 0.0
        %v4155 = vand.u32 %v3852, 4294901760
        %v4156 = vsub.f32 %v3852, %v4155
        %v4157 = vand.u32 %v4156, 4294901760
        %4158 = vmatpush1.msra.mxu0 %v4157
        %4159 = vmatprep.subr.mxu0 0.0
        %4160 = vmatpush1.msra.mxu0 0.0
        %4161 = vmatprep.subr.mxu0 0.0
        %4162 = vmatpush1.msra.mxu0 0.0
        %4163 = vmatprep.subr.mxu0 0.0
        %4164 = vmatpush1.msra.mxu0 0.0
        %4165 = vmatprep.subr.mxu0 0.0
        %4166 = vmatpush1.msra.mxu0 0.0
        %4167 = vmatprep.subr.mxu0 0.0
        %4168 = vmatpush1.msra.mxu0 0.0
        %4169 = vmatprep.subr.mxu0 0.0
        %4170 = vmatpush1.msra.mxu0 0.0
        %4171 = vmatprep.subr.mxu0 0.0
        %4172 = vmatpush1.msra.mxu0 0.0
        %4173 = vmatprep.subr.mxu0 0.0
        %4174 = vmatpush1.msra.mxu0 0.0
        %4175 = vmatprep.subr.mxu0 0.0
        %4176 = vmatpush1.msra.mxu0 0.0
        %4177 = vmatprep.subr.mxu0 0.0
        %4178 = vmatpush1.msra.mxu0 0.0
        %4179 = vmatprep.subr.mxu0 0.0
        %4180 = vmatpush1.msra.mxu0 0.0
        %4181 = vmatprep.subr.mxu0 0.0
        %4182 = vmatpush1.msra.mxu0 0.0
        %4183 = vmatprep.subr.mxu0 0.0
        %4184 = vmatpush1.msra.mxu0 0.0
        %4185 = vmatprep.subr.mxu0 0.0
        %4186 = vmatpush1.msra.mxu0 0.0
        %4187 = vmatprep.subr.mxu0 0.0
        %4188 = vmatpush1.msra.mxu0 0.0
        %4189 = vmatprep.subr.mxu0 0.0
        %4190 = vmatpush1.msra.mxu0 0.0
        %4191 = vmatprep.subr.mxu0 0.0
        %4192 = vmatpush1.msra.mxu0 0.0
        %4193 = vmatprep.subr.mxu0 0.0
        %4194 = vmatpush1.msra.mxu0 0.0
        %4195 = vmatprep.subr.mxu0 0.0
        %4196 = vmatpush1.msra.mxu0 0.0
        %4197 = vmatprep.subr.mxu0 0.0
        %4198 = vmatpush1.msra.mxu0 0.0
        %4199 = vmatprep.subr.mxu0 0.0
        %4200 = vmatpush1.msra.mxu0 0.0
        %4201 = vmatprep.subr.mxu0 0.0
        %4202 = vmatpush1.msra.mxu0 0.0
        %4203 = vmatprep.subr.mxu0 0.0
        %4204 = vmatpush1.msra.mxu0 0.0
        %4205 = vmatprep.subr.mxu0 0.0
        %4206 = vmatpush1.msra.mxu0 0.0
        %4207 = vmatprep.subr.mxu0 0.0
        %4208 = vmatpush1.msra.mxu0 0.0
        %4209 = vmatprep.subr.mxu0 0.0
        %4210 = vmatpush1.msra.mxu0 0.0
        %4211 = vmatprep.subr.mxu0 0.0
        %4212 = vmatpush1.msra.mxu0 0.0
        %4213 = vmatprep.subr.mxu0 0.0
        %4214 = vmatpush1.msra.mxu0 0.0
        %4215 = vmatprep.subr.mxu0 0.0
        %4216 = vmatpush1.msra.mxu0 0.0
        %4217 = vmatprep.subr.mxu0 0.0
        %4218 = vmatpush1.msra.mxu0 0.0
        %4219 = vmatprep.subr.mxu0 0.0
        %4220 = vmatpush1.msra.mxu0 0.0
        %4221 = vmatprep.mubr.f32.mxu0 0.0
        %v4222 = vand.u32 %v3400, 4294901760
        %4223 = vmatmul.mubr.f32.gmra.mrb[0].mxu0 %v4222
        %v4224 = vpop.f32.mrb[0].mxu0
        %v4225 = vadd.f32 %v4151, %v4224
        %v4226 = vpop.f32.mrb[0].mxu0
        %4227 = vdwg.mxu0
        %4228 = vmatprep.subr.mxu0 0.0
        %v4229 = vand.u32 %v3852, 4294901760
        %4230 = vmatpush1.msra.mxu0 %v4229
        %4231 = vmatprep.subr.mxu0 0.0
        %4232 = vmatpush1.msra.mxu0 0.0
        %4233 = vmatprep.subr.mxu0 0.0
        %4234 = vmatpush1.msra.mxu0 0.0
        %4235 = vmatprep.subr.mxu0 0.0
        %4236 = vmatpush1.msra.mxu0 0.0
        %4237 = vmatprep.subr.mxu0 0.0
        %4238 = vmatpush1.msra.mxu0 0.0
        %4239 = vmatprep.subr.mxu0 0.0
        %4240 = vmatpush1.msra.mxu0 0.0
        %4241 = vmatprep.subr.mxu0 0.0
        %4242 = vmatpush1.msra.mxu0 0.0
        %4243 = vmatprep.subr.mxu0 0.0
        %4244 = vmatpush1.msra.mxu0 0.0
        %4245 = vmatprep.subr.mxu0 0.0
        %4246 = vmatpush1.msra.mxu0 0.0
        %4247 = vmatprep.subr.mxu0 0.0
        %4248 = vmatpush1.msra.mxu0 0.0
        %4249 = vmatprep.subr.mxu0 0.0
        %4250 = vmatpush1.msra.mxu0 0.0
        %4251 = vmatprep.subr.mxu0 0.0
        %4252 = vmatpush1.msra.mxu0 0.0
        %4253 = vmatprep.subr.mxu0 0.0
        %4254 = vmatpush1.msra.mxu0 0.0
        %4255 = vmatprep.subr.mxu0 0.0
        %4256 = vmatpush1.msra.mxu0 0.0
        %4257 = vmatprep.subr.mxu0 0.0
        %4258 = vmatpush1.msra.mxu0 0.0
        %4259 = vmatprep.subr.mxu0 0.0
        %4260 = vmatpush1.msra.mxu0 0.0
        %4261 = vmatprep.subr.mxu0 0.0
        %4262 = vmatpush1.msra.mxu0 0.0
        %4263 = vmatprep.subr.mxu0 0.0
        %4264 = vmatpush1.msra.mxu0 0.0
        %4265 = vmatprep.subr.mxu0 0.0
        %4266 = vmatpush1.msra.mxu0 0.0
        %4267 = vmatprep.subr.mxu0 0.0
        %4268 = vmatpush1.msra.mxu0 0.0
        %4269 = vmatprep.subr.mxu0 0.0
        %4270 = vmatpush1.msra.mxu0 0.0
        %4271 = vmatprep.subr.mxu0 0.0
        %4272 = vmatpush1.msra.mxu0 0.0
        %4273 = vmatprep.subr.mxu0 0.0
        %4274 = vmatpush1.msra.mxu0 0.0
        %4275 = vmatprep.subr.mxu0 0.0
        %4276 = vmatpush1.msra.mxu0 0.0
        %4277 = vmatprep.subr.mxu0 0.0
        %4278 = vmatpush1.msra.mxu0 0.0
        %4279 = vmatprep.subr.mxu0 0.0
        %4280 = vmatpush1.msra.mxu0 0.0
        %4281 = vmatprep.subr.mxu0 0.0
        %4282 = vmatpush1.msra.mxu0 0.0
        %4283 = vmatprep.subr.mxu0 0.0
        %4284 = vmatpush1.msra.mxu0 0.0
        %4285 = vmatprep.subr.mxu0 0.0
        %4286 = vmatpush1.msra.mxu0 0.0
        %4287 = vmatprep.subr.mxu0 0.0
        %4288 = vmatpush1.msra.mxu0 0.0
        %4289 = vmatprep.subr.mxu0 0.0
        %4290 = vmatpush1.msra.mxu0 0.0
        %4291 = vmatprep.subr.mxu0 0.0
        %4292 = vmatpush1.msra.mxu0 0.0
        %4293 = vmatprep.mubr.f32.mxu0 0.0
        %v4294 = vand.u32 %v3400, 4294901760
        %4295 = vmatmul.mubr.f32.gmra.mrb[0].mxu0 %v4294
        %v4296 = vpop.f32.mrb[0].mxu0
        %v4297 = vadd.f32 %v4225, %v4296
        %v4298 = vpop.f32.mrb[0].mxu0
        %4299 = vdwg.mxu0
        %4301 = vset.pattern.permute.xlu0 0
        %4302 = vperm.xlu0 %4301, %v4297
        %v4303 = vpop.permute.xlu0 %4302
        %v4306 = vsel %vm679, %v3848, 0
        %v4308 = vsel %vm663, %v187, 0
        %v4310 = vsel %vm663, %v189, 0
        %v4312 = vand.u32 %v4310, 4294901760
        %4313 = vmatprep.subr.mxu0 %v4312
        %v4314 = vand.u32 %v4308, 4294901760
        %4315 = vmatpush1.msra.mxu0 %v4314
        %4316 = vmatprep.subr.mxu0 0.0
        %4317 = vmatpush1.msra.mxu0 0.0
        %4318 = vmatprep.subr.mxu0 0.0
        %4319 = vmatpush1.msra.mxu0 0.0
        %4320 = vmatprep.subr.mxu0 0.0
        %4321 = vmatpush1.msra.mxu0 0.0
        %4322 = vmatprep.subr.mxu0 0.0
        %4323 = vmatpush1.msra.mxu0 0.0
        %4324 = vmatprep.subr.mxu0 0.0
        %4325 = vmatpush1.msra.mxu0 0.0
        %4326 = vmatprep.subr.mxu0 0.0
        %4327 = vmatpush1.msra.mxu0 0.0
        %4328 = vmatprep.subr.mxu0 0.0
        %4329 = vmatpush1.msra.mxu0 0.0
        %4330 = vmatprep.subr.mxu0 0.0
        %4331 = vmatpush1.msra.mxu0 0.0
        %4332 = vmatprep.subr.mxu0 0.0
        %4333 = vmatpush1.msra.mxu0 0.0
        %4334 = vmatprep.subr.mxu0 0.0
        %4335 = vmatpush1.msra.mxu0 0.0
        %4336 = vmatprep.subr.mxu0 0.0
        %4337 = vmatpush1.msra.mxu0 0.0
        %4338 = vmatprep.subr.mxu0 0.0
        %4339 = vmatpush1.msra.mxu0 0.0
        %4340 = vmatprep.subr.mxu0 0.0
        %4341 = vmatpush1.msra.mxu0 0.0
        %4342 = vmatprep.subr.mxu0 0.0
        %4343 = vmatpush1.msra.mxu0 0.0
        %4344 = vmatprep.subr.mxu0 0.0
        %4345 = vmatpush1.msra.mxu0 0.0
        %4346 = vmatprep.subr.mxu0 0.0
        %4347 = vmatpush1.msra.mxu0 0.0
        %4348 = vmatprep.subr.mxu0 0.0
        %4349 = vmatpush1.msra.mxu0 0.0
        %4350 = vmatprep.subr.mxu0 0.0
        %4351 = vmatpush1.msra.mxu0 0.0
        %4352 = vmatprep.subr.mxu0 0.0
        %4353 = vmatpush1.msra.mxu0 0.0
        %4354 = vmatprep.subr.mxu0 0.0
        %4355 = vmatpush1.msra.mxu0 0.0
        %4356 = vmatprep.subr.mxu0 0.0
        %4357 = vmatpush1.msra.mxu0 0.0
        %4358 = vmatprep.subr.mxu0 0.0
        %4359 = vmatpush1.msra.mxu0 0.0
        %4360 = vmatprep.subr.mxu0 0.0
        %4361 = vmatpush1.msra.mxu0 0.0
        %4362 = vmatprep.subr.mxu0 0.0
        %4363 = vmatpush1.msra.mxu0 0.0
        %4364 = vmatprep.subr.mxu0 0.0
        %4365 = vmatpush1.msra.mxu0 0.0
        %4366 = vmatprep.subr.mxu0 0.0
        %4367 = vmatpush1.msra.mxu0 0.0
        %4368 = vmatprep.subr.mxu0 0.0
        %4369 = vmatpush1.msra.mxu0 0.0
        %4370 = vmatprep.subr.mxu0 0.0
        %4371 = vmatpush1.msra.mxu0 0.0
        %4372 = vmatprep.subr.mxu0 0.0
        %4373 = vmatpush1.msra.mxu0 0.0
        %4374 = vmatprep.subr.mxu0 0.0
        %4375 = vmatpush1.msra.mxu0 0.0
        %4376 = vmatprep.subr.mxu0 0.0
        %4377 = vmatpush1.msra.mxu0 0.0
        %4378 = vmatprep.mubr.f32.mxu0 0.0
        %v4379 = vand.u32 %v4306, 4294901760
        %v4380 = vsub.f32 %v4306, %v4379
        %v4381 = vand.u32 %v4380, 4294901760
        %v4382 = vsub.f32 %v4380, %v4381
        %v4383 = vand.u32 %v4382, 4294901760
        %4384 = vmatmul.mubr.f32.gmra.mrb[0].mxu0 %v4383
        %v4385 = vpop.f32.mrb[0].mxu0
        %v4386 = vadd.f32 %v4303, %v4385
        %v4387 = vpop.f32.mrb[0].mxu0
        %v4388 = vadd.f32 %v4303, %v4387
        %4389 = vdwg.mxu0
        %v4390 = vand.u32 %v4310, 4294901760
        %v4391 = vsub.f32 %v4310, %v4390
        %v4392 = vand.u32 %v4391, 4294901760
        %v4393 = vsub.f32 %v4391, %v4392
        %v4394 = vand.u32 %v4393, 4294901760
        %4395 = vmatprep.subr.mxu0 %v4394
        %v4396 = vand.u32 %v4308, 4294901760
        %v4397 = vsub.f32 %v4308, %v4396
        %v4398 = vand.u32 %v4397, 4294901760
        %v4399 = vsub.f32 %v4397, %v4398
        %v4400 = vand.u32 %v4399, 4294901760
        %4401 = vmatpush1.msra.mxu0 %v4400
        %4402 = vmatprep.subr.mxu0 0.0
        %4403 = vmatpush1.msra.mxu0 0.0
        %4404 = vmatprep.subr.mxu0 0.0
        %4405 = vmatpush1.msra.mxu0 0.0
        %4406 = vmatprep.subr.mxu0 0.0
        %4407 = vmatpush1.msra.mxu0 0.0
        %4408 = vmatprep.subr.mxu0 0.0
        %4409 = vmatpush1.msra.mxu0 0.0
        %4410 = vmatprep.subr.mxu0 0.0
        %4411 = vmatpush1.msra.mxu0 0.0
        %4412 = vmatprep.subr.mxu0 0.0
        %4413 = vmatpush1.msra.mxu0 0.0
        %4414 = vmatprep.subr.mxu0 0.0
        %4415 = vmatpush1.msra.mxu0 0.0
        %4416 = vmatprep.subr.mxu0 0.0
        %4417 = vmatpush1.msra.mxu0 0.0
        %4418 = vmatprep.subr.mxu0 0.0
        %4419 = vmatpush1.msra.mxu0 0.0
        %4420 = vmatprep.subr.mxu0 0.0
        %4421 = vmatpush1.msra.mxu0 0.0
        %4422 = vmatprep.subr.mxu0 0.0
        %4423 = vmatpush1.msra.mxu0 0.0
        %4424 = vmatprep.subr.mxu0 0.0
        %4425 = vmatpush1.msra.mxu0 0.0
        %4426 = vmatprep.subr.mxu0 0.0
        %4427 = vmatpush1.msra.mxu0 0.0
        %4428 = vmatprep.subr.mxu0 0.0
        %4429 = vmatpush1.msra.mxu0 0.0
        %4430 = vmatprep.subr.mxu0 0.0
        %4431 = vmatpush1.msra.mxu0 0.0
        %4432 = vmatprep.subr.mxu0 0.0
        %4433 = vmatpush1.msra.mxu0 0.0
        %4434 = vmatprep.subr.mxu0 0.0
        %4435 = vmatpush1.msra.mxu0 0.0
        %4436 = vmatprep.subr.mxu0 0.0
        %4437 = vmatpush1.msra.mxu0 0.0
        %4438 = vmatprep.subr.mxu0 0.0
        %4439 = vmatpush1.msra.mxu0 0.0
        %4440 = vmatprep.subr.mxu0 0.0
        %4441 = vmatpush1.msra.mxu0 0.0
        %4442 = vmatprep.subr.mxu0 0.0
        %4443 = vmatpush1.msra.mxu0 0.0
        %4444 = vmatprep.subr.mxu0 0.0
        %4445 = vmatpush1.msra.mxu0 0.0
        %4446 = vmatprep.subr.mxu0 0.0
        %4447 = vmatpush1.msra.mxu0 0.0
        %4448 = vmatprep.subr.mxu0 0.0
        %4449 = vmatpush1.msra.mxu0 0.0
        %4450 = vmatprep.subr.mxu0 0.0
        %4451 = vmatpush1.msra.mxu0 0.0
        %4452 = vmatprep.subr.mxu0 0.0
        %4453 = vmatpush1.msra.mxu0 0.0
        %4454 = vmatprep.subr.mxu0 0.0
        %4455 = vmatpush1.msra.mxu0 0.0
        %4456 = vmatprep.subr.mxu0 0.0
        %4457 = vmatpush1.msra.mxu0 0.0
        %4458 = vmatprep.subr.mxu0 0.0
        %4459 = vmatpush1.msra.mxu0 0.0
        %4460 = vmatprep.subr.mxu0 0.0
        %4461 = vmatpush1.msra.mxu0 0.0
        %4462 = vmatprep.subr.mxu0 0.0
        %4463 = vmatpush1.msra.mxu0 0.0
        %4464 = vmatprep.mubr.f32.mxu0 0.0
        %v4465 = vand.u32 %v4306, 4294901760
        %4466 = vmatmul.mubr.f32.gmra.mrb[0].mxu0 %v4465
        %v4467 = vpop.f32.mrb[0].mxu0
        %v4468 = vadd.f32 %v4386, %v4467
        %v4469 = vpop.f32.mrb[0].mxu0
        %v4470 = vadd.f32 %v4388, %v4469
        %4471 = vdwg.mxu0
        %v4472 = vand.u32 %v4310, 4294901760
        %v4473 = vsub.f32 %v4310, %v4472
        %4474 = vmatprep.subr.mxu0 %v4473
        %v4475 = vand.u32 %v4308, 4294901760
        %v4476 = vsub.f32 %v4308, %v4475
        %4477 = vmatpush1.msra.mxu0 %v4476
        %4478 = vmatprep.subr.mxu0 0.0
        %4479 = vmatpush1.msra.mxu0 0.0
        %4480 = vmatprep.subr.mxu0 0.0
        %4481 = vmatpush1.msra.mxu0 0.0
        %4482 = vmatprep.subr.mxu0 0.0
        %4483 = vmatpush1.msra.mxu0 0.0
        %4484 = vmatprep.subr.mxu0 0.0
        %4485 = vmatpush1.msra.mxu0 0.0
        %4486 = vmatprep.subr.mxu0 0.0
        %4487 = vmatpush1.msra.mxu0 0.0
        %4488 = vmatprep.subr.mxu0 0.0
        %4489 = vmatpush1.msra.mxu0 0.0
        %4490 = vmatprep.subr.mxu0 0.0
        %4491 = vmatpush1.msra.mxu0 0.0
        %4492 = vmatprep.subr.mxu0 0.0
        %4493 = vmatpush1.msra.mxu0 0.0
        %4494 = vmatprep.subr.mxu0 0.0
        %4495 = vmatpush1.msra.mxu0 0.0
        %4496 = vmatprep.subr.mxu0 0.0
        %4497 = vmatpush1.msra.mxu0 0.0
        %4498 = vmatprep.subr.mxu0 0.0
        %4499 = vmatpush1.msra.mxu0 0.0
        %4500 = vmatprep.subr.mxu0 0.0
        %4501 = vmatpush1.msra.mxu0 0.0
        %4502 = vmatprep.subr.mxu0 0.0
        %4503 = vmatpush1.msra.mxu0 0.0
        %4504 = vmatprep.subr.mxu0 0.0
        %4505 = vmatpush1.msra.mxu0 0.0
        %4506 = vmatprep.subr.mxu0 0.0
        %4507 = vmatpush1.msra.mxu0 0.0
        %4508 = vmatprep.subr.mxu0 0.0
        %4509 = vmatpush1.msra.mxu0 0.0
        %4510 = vmatprep.subr.mxu0 0.0
        %4511 = vmatpush1.msra.mxu0 0.0
        %4512 = vmatprep.subr.mxu0 0.0
        %4513 = vmatpush1.msra.mxu0 0.0
        %4514 = vmatprep.subr.mxu0 0.0
        %4515 = vmatpush1.msra.mxu0 0.0
        %4516 = vmatprep.subr.mxu0 0.0
        %4517 = vmatpush1.msra.mxu0 0.0
        %4518 = vmatprep.subr.mxu0 0.0
        %4519 = vmatpush1.msra.mxu0 0.0
        %4520 = vmatprep.subr.mxu0 0.0
        %4521 = vmatpush1.msra.mxu0 0.0
        %4522 = vmatprep.subr.mxu0 0.0
        %4523 = vmatpush1.msra.mxu0 0.0
        %4524 = vmatprep.subr.mxu0 0.0
        %4525 = vmatpush1.msra.mxu0 0.0
        %4526 = vmatprep.subr.mxu0 0.0
        %4527 = vmatpush1.msra.mxu0 0.0
        %4528 = vmatprep.subr.mxu0 0.0
        %4529 = vmatpush1.msra.mxu0 0.0
        %4530 = vmatprep.subr.mxu0 0.0
        %4531 = vmatpush1.msra.mxu0 0.0
        %4532 = vmatprep.subr.mxu0 0.0
        %4533 = vmatpush1.msra.mxu0 0.0
        %4534 = vmatprep.subr.mxu0 0.0
        %4535 = vmatpush1.msra.mxu0 0.0
        %4536 = vmatprep.subr.mxu0 0.0
        %4537 = vmatpush1.msra.mxu0 0.0
        %4538 = vmatprep.subr.mxu0 0.0
        %4539 = vmatpush1.msra.mxu0 0.0
        %4540 = vmatprep.mubr.f32.mxu0 0.0
        %v4541 = vand.u32 %v4306, 4294901760
        %v4542 = vsub.f32 %v4306, %v4541
        %4543 = vmatmul.mubr.f32.gmra.mrb[0].mxu0 %v4542
        %v4544 = vpop.f32.mrb[0].mxu0
        %v4545 = vadd.f32 %v4468, %v4544
        %v4546 = vpop.f32.mrb[0].mxu0
        %v4547 = vadd.f32 %v4470, %v4546
        %4548 = vdwg.mxu0
        %v4549 = vand.u32 %v4310, 4294901760
        %4550 = vmatprep.subr.mxu0 %v4549
        %v4551 = vand.u32 %v4308, 4294901760
        %4552 = vmatpush1.msra.mxu0 %v4551
        %4553 = vmatprep.subr.mxu0 0.0
        %4554 = vmatpush1.msra.mxu0 0.0
        %4555 = vmatprep.subr.mxu0 0.0
        %4556 = vmatpush1.msra.mxu0 0.0
        %4557 = vmatprep.subr.mxu0 0.0
        %4558 = vmatpush1.msra.mxu0 0.0
        %4559 = vmatprep.subr.mxu0 0.0
        %4560 = vmatpush1.msra.mxu0 0.0
        %4561 = vmatprep.subr.mxu0 0.0
        %4562 = vmatpush1.msra.mxu0 0.0
        %4563 = vmatprep.subr.mxu0 0.0
        %4564 = vmatpush1.msra.mxu0 0.0
        %4565 = vmatprep.subr.mxu0 0.0
        %4566 = vmatpush1.msra.mxu0 0.0
        %4567 = vmatprep.subr.mxu0 0.0
        %4568 = vmatpush1.msra.mxu0 0.0
        %4569 = vmatprep.subr.mxu0 0.0
        %4570 = vmatpush1.msra.mxu0 0.0
        %4571 = vmatprep.subr.mxu0 0.0
        %4572 = vmatpush1.msra.mxu0 0.0
        %4573 = vmatprep.subr.mxu0 0.0
        %4574 = vmatpush1.msra.mxu0 0.0
        %4575 = vmatprep.subr.mxu0 0.0
        %4576 = vmatpush1.msra.mxu0 0.0
        %4577 = vmatprep.subr.mxu0 0.0
        %4578 = vmatpush1.msra.mxu0 0.0
        %4579 = vmatprep.subr.mxu0 0.0
        %4580 = vmatpush1.msra.mxu0 0.0
        %4581 = vmatprep.subr.mxu0 0.0
        %4582 = vmatpush1.msra.mxu0 0.0
        %4583 = vmatprep.subr.mxu0 0.0
        %4584 = vmatpush1.msra.mxu0 0.0
        %4585 = vmatprep.subr.mxu0 0.0
        %4586 = vmatpush1.msra.mxu0 0.0
        %4587 = vmatprep.subr.mxu0 0.0
        %4588 = vmatpush1.msra.mxu0 0.0
        %4589 = vmatprep.subr.mxu0 0.0
        %4590 = vmatpush1.msra.mxu0 0.0
        %4591 = vmatprep.subr.mxu0 0.0
        %4592 = vmatpush1.msra.mxu0 0.0
        %4593 = vmatprep.subr.mxu0 0.0
        %4594 = vmatpush1.msra.mxu0 0.0
        %4595 = vmatprep.subr.mxu0 0.0
        %4596 = vmatpush1.msra.mxu0 0.0
        %4597 = vmatprep.subr.mxu0 0.0
        %4598 = vmatpush1.msra.mxu0 0.0
        %4599 = vmatprep.subr.mxu0 0.0
        %4600 = vmatpush1.msra.mxu0 0.0
        %4601 = vmatprep.subr.mxu0 0.0
        %4602 = vmatpush1.msra.mxu0 0.0
        %4603 = vmatprep.subr.mxu0 0.0
        %4604 = vmatpush1.msra.mxu0 0.0
        %4605 = vmatprep.subr.mxu0 0.0
        %4606 = vmatpush1.msra.mxu0 0.0
        %4607 = vmatprep.subr.mxu0 0.0
        %4608 = vmatpush1.msra.mxu0 0.0
        %4609 = vmatprep.subr.mxu0 0.0
        %4610 = vmatpush1.msra.mxu0 0.0
        %4611 = vmatprep.subr.mxu0 0.0
        %4612 = vmatpush1.msra.mxu0 0.0
        %4613 = vmatprep.subr.mxu0 0.0
        %4614 = vmatpush1.msra.mxu0 0.0
        %4615 = vmatprep.mubr.f32.mxu0 0.0
        %v4616 = vand.u32 %v4306, 4294901760
        %v4617 = vsub.f32 %v4306, %v4616
        %v4618 = vand.u32 %v4617, 4294901760
        %4619 = vmatmul.mubr.f32.gmra.mrb[0].mxu0 %v4618
        %v4620 = vpop.f32.mrb[0].mxu0
        %v4621 = vadd.f32 %v4545, %v4620
        %v4622 = vpop.f32.mrb[0].mxu0
        %v4623 = vadd.f32 %v4547, %v4622
        %4624 = vdwg.mxu0
        %v4625 = vand.u32 %v4310, 4294901760
        %v4626 = vsub.f32 %v4310, %v4625
        %v4627 = vand.u32 %v4626, 4294901760
        %4628 = vmatprep.subr.mxu0 %v4627
        %v4629 = vand.u32 %v4308, 4294901760
        %v4630 = vsub.f32 %v4308, %v4629
        %v4631 = vand.u32 %v4630, 4294901760
        %4632 = vmatpush1.msra.mxu0 %v4631
        %4633 = vmatprep.subr.mxu0 0.0
        %4634 = vmatpush1.msra.mxu0 0.0
        %4635 = vmatprep.subr.mxu0 0.0
        %4636 = vmatpush1.msra.mxu0 0.0
        %4637 = vmatprep.subr.mxu0 0.0
        %4638 = vmatpush1.msra.mxu0 0.0
        %4639 = vmatprep.subr.mxu0 0.0
        %4640 = vmatpush1.msra.mxu0 0.0
        %4641 = vmatprep.subr.mxu0 0.0
        %4642 = vmatpush1.msra.mxu0 0.0
        %4643 = vmatprep.subr.mxu0 0.0
        %4644 = vmatpush1.msra.mxu0 0.0
        %4645 = vmatprep.subr.mxu0 0.0
        %4646 = vmatpush1.msra.mxu0 0.0
        %4647 = vmatprep.subr.mxu0 0.0
        %4648 = vmatpush1.msra.mxu0 0.0
        %4649 = vmatprep.subr.mxu0 0.0
        %4650 = vmatpush1.msra.mxu0 0.0
        %4651 = vmatprep.subr.mxu0 0.0
        %4652 = vmatpush1.msra.mxu0 0.0
        %4653 = vmatprep.subr.mxu0 0.0
        %4654 = vmatpush1.msra.mxu0 0.0
        %4655 = vmatprep.subr.mxu0 0.0
        %4656 = vmatpush1.msra.mxu0 0.0
        %4657 = vmatprep.subr.mxu0 0.0
        %4658 = vmatpush1.msra.mxu0 0.0
        %4659 = vmatprep.subr.mxu0 0.0
        %4660 = vmatpush1.msra.mxu0 0.0
        %4661 = vmatprep.subr.mxu0 0.0
        %4662 = vmatpush1.msra.mxu0 0.0
        %4663 = vmatprep.subr.mxu0 0.0
        %4664 = vmatpush1.msra.mxu0 0.0
        %4665 = vmatprep.subr.mxu0 0.0
        %4666 = vmatpush1.msra.mxu0 0.0
        %4667 = vmatprep.subr.mxu0 0.0
        %4668 = vmatpush1.msra.mxu0 0.0
        %4669 = vmatprep.subr.mxu0 0.0
        %4670 = vmatpush1.msra.mxu0 0.0
        %4671 = vmatprep.subr.mxu0 0.0
        %4672 = vmatpush1.msra.mxu0 0.0
        %4673 = vmatprep.subr.mxu0 0.0
        %4674 = vmatpush1.msra.mxu0 0.0
        %4675 = vmatprep.subr.mxu0 0.0
        %4676 = vmatpush1.msra.mxu0 0.0
        %4677 = vmatprep.subr.mxu0 0.0
        %4678 = vmatpush1.msra.mxu0 0.0
        %4679 = vmatprep.subr.mxu0 0.0
        %4680 = vmatpush1.msra.mxu0 0.0
        %4681 = vmatprep.subr.mxu0 0.0
        %4682 = vmatpush1.msra.mxu0 0.0
        %4683 = vmatprep.subr.mxu0 0.0
        %4684 = vmatpush1.msra.mxu0 0.0
        %4685 = vmatprep.subr.mxu0 0.0
        %4686 = vmatpush1.msra.mxu0 0.0
        %4687 = vmatprep.subr.mxu0 0.0
        %4688 = vmatpush1.msra.mxu0 0.0
        %4689 = vmatprep.subr.mxu0 0.0
        %4690 = vmatpush1.msra.mxu0 0.0
        %4691 = vmatprep.subr.mxu0 0.0
        %4692 = vmatpush1.msra.mxu0 0.0
        %4693 = vmatprep.subr.mxu0 0.0
        %4694 = vmatpush1.msra.mxu0 0.0
        %4695 = vmatprep.mubr.f32.mxu0 0.0
        %v4696 = vand.u32 %v4306, 4294901760
        %4697 = vmatmul.mubr.f32.gmra.mrb[0].mxu0 %v4696
        %v4698 = vpop.f32.mrb[0].mxu0
        %v4699 = vadd.f32 %v4621, %v4698
        %v4700 = vpop.f32.mrb[0].mxu0
        %v4701 = vadd.f32 %v4623, %v4700
        %4702 = vdwg.mxu0
        %v4703 = vand.u32 %v4310, 4294901760
        %4704 = vmatprep.subr.mxu0 %v4703
        %v4705 = vand.u32 %v4308, 4294901760
        %4706 = vmatpush1.msra.mxu0 %v4705
        %4707 = vmatprep.subr.mxu0 0.0
        %4708 = vmatpush1.msra.mxu0 0.0
        %4709 = vmatprep.subr.mxu0 0.0
        %4710 = vmatpush1.msra.mxu0 0.0
        %4711 = vmatprep.subr.mxu0 0.0
        %4712 = vmatpush1.msra.mxu0 0.0
        %4713 = vmatprep.subr.mxu0 0.0
        %4714 = vmatpush1.msra.mxu0 0.0
        %4715 = vmatprep.subr.mxu0 0.0
        %4716 = vmatpush1.msra.mxu0 0.0
        %4717 = vmatprep.subr.mxu0 0.0
        %4718 = vmatpush1.msra.mxu0 0.0
        %4719 = vmatprep.subr.mxu0 0.0
        %4720 = vmatpush1.msra.mxu0 0.0
        %4721 = vmatprep.subr.mxu0 0.0
        %4722 = vmatpush1.msra.mxu0 0.0
        %4723 = vmatprep.subr.mxu0 0.0
        %4724 = vmatpush1.msra.mxu0 0.0
        %4725 = vmatprep.subr.mxu0 0.0
        %4726 = vmatpush1.msra.mxu0 0.0
        %4727 = vmatprep.subr.mxu0 0.0
        %4728 = vmatpush1.msra.mxu0 0.0
        %4729 = vmatprep.subr.mxu0 0.0
        %4730 = vmatpush1.msra.mxu0 0.0
        %4731 = vmatprep.subr.mxu0 0.0
        %4732 = vmatpush1.msra.mxu0 0.0
        %4733 = vmatprep.subr.mxu0 0.0
        %4734 = vmatpush1.msra.mxu0 0.0
        %4735 = vmatprep.subr.mxu0 0.0
        %4736 = vmatpush1.msra.mxu0 0.0
        %4737 = vmatprep.subr.mxu0 0.0
        %4738 = vmatpush1.msra.mxu0 0.0
        %4739 = vmatprep.subr.mxu0 0.0
        %4740 = vmatpush1.msra.mxu0 0.0
        %4741 = vmatprep.subr.mxu0 0.0
        %4742 = vmatpush1.msra.mxu0 0.0
        %4743 = vmatprep.subr.mxu0 0.0
        %4744 = vmatpush1.msra.mxu0 0.0
        %4745 = vmatprep.subr.mxu0 0.0
        %4746 = vmatpush1.msra.mxu0 0.0
        %4747 = vmatprep.subr.mxu0 0.0
        %4748 = vmatpush1.msra.mxu0 0.0
        %4749 = vmatprep.subr.mxu0 0.0
        %4750 = vmatpush1.msra.mxu0 0.0
        %4751 = vmatprep.subr.mxu0 0.0
        %4752 = vmatpush1.msra.mxu0 0.0
        %4753 = vmatprep.subr.mxu0 0.0
        %4754 = vmatpush1.msra.mxu0 0.0
        %4755 = vmatprep.subr.mxu0 0.0
        %4756 = vmatpush1.msra.mxu0 0.0
        %4757 = vmatprep.subr.mxu0 0.0
        %4758 = vmatpush1.msra.mxu0 0.0
        %4759 = vmatprep.subr.mxu0 0.0
        %4760 = vmatpush1.msra.mxu0 0.0
        %4761 = vmatprep.subr.mxu0 0.0
        %4762 = vmatpush1.msra.mxu0 0.0
        %4763 = vmatprep.subr.mxu0 0.0
        %4764 = vmatpush1.msra.mxu0 0.0
        %4765 = vmatprep.subr.mxu0 0.0
        %4766 = vmatpush1.msra.mxu0 0.0
        %4767 = vmatprep.subr.mxu0 0.0
        %4768 = vmatpush1.msra.mxu0 0.0
        %4769 = vmatprep.mubr.f32.mxu0 0.0
        %v4770 = vand.u32 %v4306, 4294901760
        %4771 = vmatmul.mubr.f32.gmra.mrb[0].mxu0 %v4770
        %v4772 = vpop.f32.mrb[0].mxu0
        %v4773 = vadd.f32 %v4699, %v4772
        %v4774 = vpop.f32.mrb[0].mxu0
        %v4775 = vadd.f32 %v4701, %v4774
        %4776 = vdwg.mxu0
        %v4777 = vadd.f32 %v4773, %v187
        %v4778 = vadd.f32 %v4775, %v189
        %v4781 = vcombine.low %v4777, %v4778
        %4783 = vst [vmem:[%s186] sm:$0xff] %v4781
        %s4784 = sand.u32 %s96, 1
        %s4785 = scalar_lea.sflag [#allocation4], %s4784
        %s4786 = sand.u32 %s96, 1
        %s4787 = smul.addr %s4786, 8
        %s4788 = scalar_lea.vmem [#allocation5], %s4787
        // Predicated region
        $region37: #{tpu_custom_call.1} parent=31 // pred_check
          %p4789 = pneg %p106
        $region38: #{tpu_custom_call.1} parent=31 // pred_check_branch
          %4791 = sbr.rel (%p4789) target = $region40
        $region39: #{tpu_custom_call.1} parent=31 // pred_region
          %s4793 = ssub.s32 128, 128
          %4794 = vsyncadd %s4785, %s4793
          %s4795 = smul.addr %s20, 2
          %s4796 = smul.addr %s4795, 64
          %s4797 = scalar_lea.hbm %s3, %s4796
          %s4799 = sshll.u32 %s4788, 4
          %s4800 = int_to_ptr.vmem [resolvable:$true] %s4799
          %4802 = dma.vmem_to_hbm [thread:$0]  %s4800, 128, %s4797, %s4785
        $region40: #{tpu_custom_call.1} parent=31 // pred_fallthru
          _
      $region32: #{tpu_custom_call.1} parent=5 // pred_fallthru
        _
      %p4803 = scmp.le.s32.totalorder 2, %s15
      // Predicated region
      $region41: #{tpu_custom_call.1} parent=5 // pred_check
        %p4804 = pneg %p4803
      $region42: #{tpu_custom_call.1} parent=5 // pred_check_branch
        %4806 = sbr.rel (%p4804) target = $region44
      $region43: #{tpu_custom_call.1} parent=5 // pred_region
        %s4807 = ssub.s32 %s15, 2
        // Predicated region
        $region45: #{tpu_custom_call.1} parent=43 // pred_check
          %p4808 = pneg %p112
        $region46: #{tpu_custom_call.1} parent=43 // pred_check_branch
          %4810 = sbr.rel (%p4808) target = $region48
        $region47: #{tpu_custom_call.1} parent=43 // pred_region
          %s4811 = sand.u32 %s97, 1
          %s4812 = scalar_lea.sflag [#allocation4], %s4811
          %s4813 = sand.u32 %s97, 1
          %s4814 = smul.addr %s4813, 8
          %s4815 = scalar_lea.vmem [#allocation5], %s4814
          %4816 = dma.done %s4812, 128
        $region48: #{tpu_custom_call.1} parent=43 // pred_fallthru
          _
      $region44: #{tpu_custom_call.1} parent=5 // pred_fallthru
        _
    $region6: #{tpu_custom_call.1} parent=1 // loop_footer
      %s19 = sadd.s32 1, %s15
    $region7: #{tpu_custom_call.1} parent=1 // loop_footer_branch
      %14 = sbr.rel target = $region3
    $region8: #{tpu_custom_call.1} parent=1 // loop_exit
      _
    %4817 = vsyncpa [#allocation3], 1
    %s4818 = scalar_lea.sflag [#allocation3], 1
    %4819 = vsyncpa %s4818, 1
    %4820 = vsyncpa [#allocation4], 1
    %s4821 = scalar_lea.sflag [#allocation4], 1
    %4822 = vsyncpa %s4821, 1

</llo_original>
